<compile_context>
chip_gen: v7x
topology: tpu7x:2x2x1
jax: 0.10.0
libtpu: 0.0.40
codegen_flags: <defaults>
</compile_context>

<pallas_src>
import math

import jax
import jax.numpy as jnp
from jax.experimental import pallas as pl
from jax.experimental.pallas import tpu as pltpu

# ----------------------------- problem sizes (small, deterministic) --------------
BATCH = 2
SEQ_LEN = 8
OBS_SIZE = 6
STATIC_SIZE = 5
MODEL_DIM = 32
ACTION_SIZE = 4
N_LAYERS = 2
N_HEADS = 4
FF_DIM = 64
DH = MODEL_DIM // N_HEADS          # head dim = 8

# ----------------------------- kernel tiling --------------------------------------
B_TILE = 8                         # batch rows per grid step (fills the 8 sublanes)
BS_T = B_TILE * SEQ_LEN            # 64 flattened (batch, seq) rows per tile
PAD_IN = 8                         # obs / static feature dims zero-padded to 8
ACT_COLS = 2 * PAD_IN              # merged block-diagonal activation width = 16
ACT_ROWS = BS_T + B_TILE           # 72 activation rows per tile (64 obs + 8 static)
OUT_LANES = 128                    # lane-dense output slab; wrapper slices [:, :ACTION]

# ------------------- packed parameter blob layouts (row offsets) ------------------
# narrow blob `pn` (N_ROWS, 32) -- everything that is 32 lanes wide
N_EMBW = 0                                     # (16, 32) block-diag [W_obs ; W_st]
N_BIAS = N_EMBW + 2 * PAD_IN                   # (72, 32) [tile(pe+b_obs, 8) ; b_st x 8]
N_QTOK = N_BIAS + ACT_ROWS                     # 88  learned query token
N_ADV1B = N_QTOK + 1                           # 89  advantage-1 bias
N_LAYER0 = N_QTOK + 8                          # 96  per-layer blocks start (8-aligned)
L_SA, L_Q, L_OUT, L_FF2, L_VEC = 0, 32, 64, 96, 160
N_LSTRIDE = 3 * MODEL_DIM + FF_DIM + 16        # 176
# per-layer vec rows (at L_VEC): 0 sa_b | 1 q_b | 2 out_b | 3 ff2_b
#                                4 ln1_g | 5 ln1_b | 6 ln2_g | 7 ln2_b | 8 ln3_g | 9 ln3_b
N_ADV1 = N_LAYER0 + N_LAYERS * N_LSTRIDE       # 448  (64, 32) adv1 weight
N_ROWS = N_ADV1 + 2 * MODEL_DIM                # 512

# wide blob `pw` (W_ROWS, 128) -- everything 128 lanes wide
W_KV = 0                                       # (32, 128) [Wk|Wv] layer0 | [Wk|Wv] layer1
W_FF1 = W_KV + MODEL_DIM                       # 32  (32, 128) ff1, layer l in cols l*64:(l+1)*64
W_ADV2 = W_FF1 + MODEL_DIM                     # 64  (32, 128) adv2 weight, cols >= 4 zero
W_KVB = W_ADV2 + MODEL_DIM                     # 96  kv bias (1, 128)
W_FF1B = W_KVB + 1                             # 97  ff1 bias (1, 128)
W_ADV2B = W_KVB + 2                            # 98  adv2 bias (1, 128), cols >= 4 zero
W_ROWS = W_KVB + 8                             # 104
W_LANES = 128


def _layer_norm_fast(x, g, b, eps=1e-5):
    """LayerNorm with var = E[x^2] - mu^2: the two cross-lane reductions are independent."""
    mu = jnp.mean(x, axis=-1, keepdims=True)
    ms = jnp.mean(x * x, axis=-1, keepdims=True)
    var = ms - mu * mu
    return (x - mu) * jax.lax.rsqrt(var + eps) * g + b


def _layer_norm_ref(x, g, b, eps=1e-5):
    """PyTorch-style LayerNorm (centered form) for the reference."""
    mu = jnp.mean(x, axis=-1, keepdims=True)
    xc = x - mu
    var = jnp.mean(xc * xc, axis=-1, keepdims=True)
    return xc * jax.lax.rsqrt(var + eps) * g + b


# ---------------------------------- Pallas kernel ---------------------------------
def daqn_kernel(act_ref, pn_ref, pw_ref, out_ref):
    f32 = jnp.float32
    D, H, S, B, F = MODEL_DIM, N_HEADS, SEQ_LEN, B_TILE, FF_DIM

    # head indicator matrices (tiny VPU iota compares; flattens the head loop onto lanes)
    lane = jax.lax.broadcasted_iota(jnp.int32, (D, H), 0)
    head = jax.lax.broadcasted_iota(jnp.int32, (D, H), 1)
    hmask = ((lane >= head * DH) & (lane < (head + 1) * DH)).astype(f32)           # (D, H)
    lane_t = jax.lax.broadcasted_iota(jnp.int32, (H, D), 1)
    head_t = jax.lax.broadcasted_iota(jnp.int32, (H, D), 0)
    hmask_t = ((lane_t >= head_t * DH) & (lane_t < (head_t + 1) * DH)).astype(f32)  # (H, D)

    # --- fused obs/static embedding: one block-diagonal matmul --------------------
    emb = (jnp.dot(act_ref[...], pn_ref[N_EMBW:N_EMBW + ACT_COLS, :],
                   preferred_element_type=f32)
           + pn_ref[N_BIAS:N_BIAS + ACT_ROWS, :])                                   # (72, 32)
    mem = emb[:BS_T]                                                                # (64, 32)
    static_emb = emb[BS_T:]                                                         # (8, 32)

    # learned query token broadcast over the batch tile
    tgt = jnp.broadcast_to(pn_ref[N_QTOK:N_QTOK + 1, :], (B, D))                    # (8, 32)

    # --- loop-invariant K/V projection for BOTH layers: one 128-lane-dense matmul --
    kv_all = (jnp.dot(mem, pw_ref[W_KV:W_KV + D, :], preferred_element_type=f32)
              + pw_ref[W_KVB:W_KVB + 1, :])                                         # (64, 128)
    wff1_all = pw_ref[W_FF1:W_FF1 + D, :]                                           # (32, 128)
    bff1_all = pw_ref[W_FF1B:W_FF1B + 1, :]                                         # (1, 128)

    for l in range(N_LAYERS):
        nb = N_LAYER0 + l * N_LSTRIDE
        vb = nb + L_VEC

        # ---- self-attention over the length-1 target ------------------------------
        # softmax over one key == 1, so it is exactly tgt @ (Wv Wo) + (bv Wo + bo);
        # that fusion is done offline in pack_params.
        sa = (jnp.dot(tgt, pn_ref[nb + L_SA:nb + L_SA + D, :], preferred_element_type=f32)
              + pn_ref[vb + 0:vb + 1, :])
        tgt = _layer_norm_fast(tgt + sa, pn_ref[vb + 4:vb + 5, :], pn_ref[vb + 5:vb + 6, :])

        # ---- multi-head cross-attention (no indicator-matrix matmuls) -------------
        # 1/sqrt(head_dim) is folded into the q weights/bias offline.
        q = (jnp.dot(tgt, pn_ref[nb + L_Q:nb + L_Q + D, :], preferred_element_type=f32)
             + pn_ref[vb + 1:vb + 2, :])                                            # (8, 32)
        # sublane-broadcast each batch's q row over its S memory rows
        q_full = jax.lax.broadcast_in_dim(q, (B, S, D), (0, 2)).reshape(BS_T, D)    # (64, 32)
        k = kv_all[:, 2 * D * l:2 * D * l + D]                                      # (64, 32)
        v = kv_all[:, 2 * D * l + D:2 * D * (l + 1)]                                # (64, 32)
        scores = jnp.dot(k * q_full, hmask, preferred_element_type=f32)             # (64, H)
        # per-head max over the whole tile: shared constant inside every softmax
        # group, so the softmax value is unchanged (single XLU reduce).
        scores = scores - jnp.max(scores, axis=0, keepdims=True)
        p = jnp.exp(scores)                                                         # EUP
        p_full = jnp.dot(p, hmask_t, preferred_element_type=f32)                    # (64, 32)
        # un-normalised weighted sum and denominator: two independent sublane reductions
        num = jnp.sum((p_full * v).reshape(B, S, D), axis=1)                        # (8, 32)
        den = jnp.sum(p_full.reshape(B, S, D), axis=1)                              # (8, 32)
        ctx = num * pl.reciprocal(den, approx=True)                                 # deferred norm
        ca = (jnp.dot(ctx, pn_ref[nb + L_OUT:nb + L_OUT + D, :], preferred_element_type=f32)
              + pn_ref[vb + 2:vb + 3, :])
        tgt = _layer_norm_fast(tgt + ca, pn_ref[vb + 6:vb + 7, :], pn_ref[vb + 7:vb + 8, :])

        # ---- position-wise feed-forward --------------------------------------------
        hid = jnp.maximum(
            jnp.dot(tgt, wff1_all[:, l * F:(l + 1) * F], preferred_element_type=f32)
            + bff1_all[:, l * F:(l + 1) * F], 0.0)                                  # (8, 64)
        ff = (jnp.dot(hid, pn_ref[nb + L_FF2:nb + L_FF2 + F, :], preferred_element_type=f32)
              + pn_ref[vb + 3:vb + 4, :])
        tgt = _layer_norm_fast(tgt + ff, pn_ref[vb + 8:vb + 9, :], pn_ref[vb + 9:vb + 10, :])

    # --- advantage head: single fused matmul on concat([dec_out, static_emb]) -------
    joint = jnp.concatenate([tgt, static_emb], axis=-1)                             # (8, 64)
    h1 = jnp.maximum(
        jnp.dot(joint, pn_ref[N_ADV1:N_ADV1 + 2 * D, :], preferred_element_type=f32)
        + pn_ref[N_ADV1B:N_ADV1B + 1, :], 0.0)                                      # (8, 32)
    q_out = (jnp.dot(h1, pw_ref[W_ADV2:W_ADV2 + D, :], preferred_element_type=f32)
             + pw_ref[W_ADV2B:W_ADV2B + 1, :])                                      # (8, 128)
    out_ref[...] = q_out                                                            # lane-dense store


def daqn_forward(obs, static, pn, pw):
    batch = obs.shape[0]
    nt = pl.cdiv(batch, B_TILE)                   # number of batch tiles (grid size)
    bpad = nt * B_TILE
    obs_p = jnp.pad(obs, ((0, bpad - batch), (0, 0), (0, 0)))
    st_p = jnp.pad(static, ((0, bpad - batch), (0, 0)))
    # merged block-diagonal activation: obs features in cols 0..5, static in cols 8..12
    obs_rows = jnp.pad(obs_p.reshape(bpad * SEQ_LEN, OBS_SIZE),
                       ((0, 0), (0, ACT_COLS - OBS_SIZE)))
    st_rows = jnp.pad(st_p, ((0, 0), (PAD_IN, ACT_COLS - PAD_IN - STATIC_SIZE)))
    act = jnp.concatenate(
        [obs_rows.reshape(nt, BS_T, ACT_COLS), st_rows.reshape(nt, B_TILE, ACT_COLS)],
        axis=1).reshape(nt * ACT_ROWS, ACT_COLS)

    out = pl.pallas_call(
        daqn_kernel,
        out_shape=jax.ShapeDtypeStruct((nt * B_TILE, OUT_LANES), jnp.float32),
        grid=(nt,),
        in_specs=[pl.BlockSpec((ACT_ROWS, ACT_COLS), lambda i: (i, 0)),
                  pl.BlockSpec((N_ROWS, MODEL_DIM), lambda i: (0, 0)),
                  pl.BlockSpec((W_ROWS, W_LANES), lambda i: (0, 0))],
        out_specs=pl.BlockSpec((B_TILE, OUT_LANES), lambda i: (i, 0)),
        compiler_params=pltpu.CompilerParams(dimension_semantics=("parallel",)),
    )(act, pn, pw)
    return out[:batch, :ACTION_SIZE]


daqn_forward_jit = jax.jit(daqn_forward)


# ------------------------------- parameters & PE -----------------------------------
def make_pos_encoding(seq_len, d_model):
    pos = jnp.arange(seq_len, dtype=jnp.float32)[:, None]
    div = jnp.exp(jnp.arange(0, d_model, 2, dtype=jnp.float32)
                  * (-math.log(10000.0) / d_model))
    ang = pos * div                                              # (S, D/2)
    pe = jnp.stack([jnp.sin(ang), jnp.cos(ang)], axis=-1).reshape(seq_len, d_model)
    return pe.astype(jnp.float32)


def init_params(key):
    """Unfused, PyTorch-layout parameters (weights stored (in, out))."""
    keys = iter(jax.random.split(key, 64))
    D, F, L = MODEL_DIM, FF_DIM, N_LAYERS

    def w(shape, scale=0.2):
        return (scale * jax.random.normal(next(keys), shape)).astype(jnp.float32)

    ones = lambda s: jnp.ones(s, jnp.float32)
    zeros = lambda s: jnp.zeros(s, jnp.float32)
    return {
        "pe": make_pos_encoding(SEQ_LEN, D),
        "w_obs": w((OBS_SIZE, D)), "b_obs": w((1, D)),
        "q_tok": w((1, D), 1.0),                                 # ~ torch.randn(1, D)
        "w_st": w((STATIC_SIZE, D)), "b_st": w((1, D)),
        "sa_v_w": w((L, D, D)), "sa_v_b": w((L, 1, D)),
        "sa_out_w": w((L, D, D)), "sa_out_b": w((L, 1, D)),
        "ca_q_w": w((L, D, D)), "ca_q_b": w((L, 1, D)),
        "ca_k_w": w((L, D, D)), "ca_k_b": w((L, 1, D)),
        "ca_v_w": w((L, D, D)), "ca_v_b": w((L, 1, D)),
        "ca_out_w": w((L, D, D)), "ca_out_b": w((L, 1, D)),
        "ln1_g": ones((L, 1, D)), "ln1_b": zeros((L, 1, D)),
        "ln2_g": ones((L, 1, D)), "ln2_b": zeros((L, 1, D)),
        "ln3_g": ones((L, 1, D)), "ln3_b": zeros((L, 1, D)),
        "ff1_w": w((L, D, F)), "ff1_b": w((L, 1, F)),
        "ff2_w": w((L, F, D)), "ff2_b": w((L, 1, D)),
        "adv1_w": w((2 * D, D)), "adv1_b": w((1, D)),
        "adv2_w": w((D, ACTION_SIZE)), "adv2_b": w((1, ACTION_SIZE)),
    }


def pack_params(p):
    """Offline packing / exact algebraic fusions -> 2 VMEM blobs for the kernel."""
    D, F, L = MODEL_DIM, FF_DIM, N_LAYERS
    scale = 1.0 / math.sqrt(DH)

    def zrow(n):
        return jnp.zeros((n, D), jnp.float32)

    def pad_rows(x, rows):
        return jnp.pad(x, ((0, rows - x.shape[0]), (0, 0)))

    # ---- narrow blob (N_ROWS, 32) ---------------------------------------------------
    parts = [pad_rows(p["w_obs"], PAD_IN), pad_rows(p["w_st"], PAD_IN)]       # embed (16)
    parts += [jnp.tile(p["pe"] + p["b_obs"], (B_TILE, 1)),                    # bias slab (64)
              jnp.tile(p["b_st"], (B_TILE, 1))]                               # bias slab (8)
    parts += [p["q_tok"], p["adv1_b"], zrow(6)]                               # misc (8)
    for l in range(L):
        sa_w = p["sa_v_w"][l] @ p["sa_out_w"][l]          # length-1 self-attn fusion
        sa_b = p["sa_v_b"][l] @ p["sa_out_w"][l] + p["sa_out_b"][l]
        parts += [sa_w, p["ca_q_w"][l] * scale, p["ca_out_w"][l], p["ff2_w"][l]]
        parts += [sa_b, p["ca_q_b"][l] * scale, p["ca_out_b"][l], p["ff2_b"][l],
                  p["ln1_g"][l], p["ln1_b"][l], p["ln2_g"][l], p["ln2_b"][l],
                  p["ln3_g"][l], p["ln3_b"][l], zrow(6)]
    parts += [p["adv1_w"]]
    pn = jnp.concatenate(parts, axis=0)
    assert pn.shape == (N_ROWS, D), pn.shape

    # ---- wide blob (W_ROWS, 128) ------------------------------------------------------
    kv_w = jnp.concatenate(
        [jnp.concatenate([p["ca_k_w"][l], p["ca_v_w"][l]], axis=1) for l in range(L)],
        axis=1)                                                               # (32, 128)
    ff1_w = jnp.concatenate([p["ff1_w"][l] for l in range(L)], axis=1)        # (32, 128)
    adv2_w = jnp.pad(p["adv2_w"], ((0, 0), (0, W_LANES - ACTION_SIZE)))       # (32, 128)
    kv_b = jnp.concatenate(
        [jnp.concatenate([p["ca_k_b"][l], p["ca_v_b"][l]], axis=1) for l in range(L)],
        axis=1)                                                               # (1, 128)
    ff1_b = jnp.concatenate([p["ff1_b"][l] for l in range(L)], axis=1)        # (1, 128)
    adv2_b = jnp.pad(p["adv2_b"], ((0, 0), (0, W_LANES - ACTION_SIZE)))       # (1, 128)
    pw = jnp.concatenate(
        [kv_w, ff1_w, adv2_w, kv_b, ff1_b, adv2_b,
         jnp.zeros((W_ROWS - (W_ADV2B + 1), W_LANES), jnp.float32)], axis=0)
    assert pw.shape == (W_ROWS, W_LANES), pw.shape

    return {"pn": pn, "pw": pw}


# --------------------------- plain-JAX reference (for validation) -------------------
def daqn_reference(params, obs, static):
    p = params
    B, S, D, H, Dh = obs.shape[0], SEQ_LEN, MODEL_DIM, N_HEADS, DH
    mem = jnp.einsum('bso,od->bsd', obs, p['w_obs']) + p['b_obs'][None] + p['pe'][None]
    tgt = jnp.broadcast_to(p['q_tok'], (B, D))
    for l in range(N_LAYERS):
        v = tgt @ p['sa_v_w'][l] + p['sa_v_b'][l]
        sa = v @ p['sa_out_w'][l] + p['sa_out_b'][l]
        tgt = _layer_norm_ref(tgt + sa, p['ln1_g'][l], p['ln1_b'][l])

        q = tgt @ p['ca_q_w'][l] + p['ca_q_b'][l]
        k = jnp.einsum('bsd,de->bse', mem, p['ca_k_w'][l]) + p['ca_k_b'][l][None]
        vv = jnp.einsum('bsd,de->bse', mem, p['ca_v_w'][l]) + p['ca_v_b'][l][None]
        qh = q.reshape(B, H, Dh)
        kh = k.reshape(B, S, H, Dh)
        vh = vv.reshape(B, S, H, Dh)
        scores = jnp.einsum('bhd,bshd->bhs', qh, kh) / math.sqrt(Dh)
        attn = jax.nn.softmax(scores, axis=-1)
        ctx = jnp.einsum('bhs,bshd->bhd', attn, vh).reshape(B, D)
        ca = ctx @ p['ca_out_w'][l] + p['ca_out_b'][l]
        tgt = _layer_norm_ref(tgt + ca, p['ln2_g'][l], p['ln2_b'][l])

        hid = jax.nn.relu(tgt @ p['ff1_w'][l] + p['ff1_b'][l])
        ff = hid @ p['ff2_w'][l] + p['ff2_b'][l]
        tgt = _layer_norm_ref(tgt + ff, p['ln3_g'][l], p['ln3_b'][l])

    st = static @ p['w_st'] + p['b_st']
    joint = jnp.concatenate([tgt, st], axis=1)
    h1 = jax.nn.relu(joint @ p['adv1_w'] + p['adv1_b'])
    return h1 @ p['adv2_w'] + p['adv2_b']


# --------------------------------------- main ----------------------------------------
if __name__ == "__main__":
    root = jax.random.PRNGKey(0)
    k_param, k_obs, k_static, k_obs2, k_static2 = jax.random.split(root, 5)

    params = init_params(k_param)
    packed = pack_params(params)

    # primary small test (batch=2, as in the module example)
    obs = jax.random.normal(k_obs, (BATCH, SEQ_LEN, OBS_SIZE), dtype=jnp.float32)
    static = jax.random.normal(k_static, (BATCH, STATIC_SIZE), dtype=jnp.float32)

    q_vals = daqn_forward_jit(obs, static, packed["pn"], packed["pw"])
    q_vals = jax.block_until_ready(q_vals)
    assert q_vals.shape == (BATCH, ACTION_SIZE), q_vals.shape
    q_ref = daqn_reference(params, obs, static)
    assert jnp.allclose(q_vals, q_ref, rtol=3e-3, atol=3e-3), (q_vals, q_ref)

    # secondary check: a larger batch exercises padding + the multi-tile parallel grid
    obs2 = jax.random.normal(k_obs2, (11, SEQ_LEN, OBS_SIZE), dtype=jnp.float32)
    static2 = jax.random.normal(k_static2, (11, STATIC_SIZE), dtype=jnp.float32)
    q2 = jax.block_until_ready(daqn_forward_jit(obs2, static2, packed["pn"], packed["pw"]))
    assert q2.shape == (11, ACTION_SIZE), q2.shape
    q2_ref = daqn_reference(params, obs2, static2)
    assert jnp.allclose(q2, q2_ref, rtol=3e-3, atol=3e-3), (q2, q2_ref)

    print("KERNEL_OK")
</pallas_src>

<mosaic_0001>
module attributes {stable_mosaic.version = 11 : i64} {
  func.func @daqn_kernel(%arg0: i32, %arg1: memref<72x16xf32, #tpu.memory_space<vmem>>, %arg2: memref<512x32xf32, #tpu.memory_space<vmem>>, %arg3: memref<104x128xf32, #tpu.memory_space<vmem>>, %arg4: memref<8x128xf32, #tpu.memory_space<vmem>>) attributes {dimension_semantics = [#tpu.dimension_semantics<parallel>], iteration_bounds = array<i64: 1>, scalar_prefetch = 0 : i64, scratch_operands = 0 : i64, tpu.core_type = #tpu.core_type<tc>, window_params = [{transform_indices = @transform_0, window_bounds = array<i64: 72, 16>}, {pipeline_mode = #tpu.pipeline_mode<synchronous>, transform_indices = @transform_1, window_bounds = array<i64: 512, 32>}, {pipeline_mode = #tpu.pipeline_mode<synchronous>, transform_indices = @transform_2, window_bounds = array<i64: 104, 128>}, {transform_indices = @transform_3, window_bounds = array<i64: 8, 128>}]} {
    %0 = tpu.iota {dimensions = array<i32: 0>} : vector<32x4xi32>
    %1 = tpu.iota {dimensions = array<i32: 1>} : vector<32x4xi32>
    %c8_i32 = arith.constant 8 : i32
    %2 = vector.broadcast %c8_i32 : i32 to vector<32x4xi32>
    %3 = arith.muli %1, %2 : vector<32x4xi32>
    %4 = arith.cmpi sge, %0, %3 : vector<32x4xi32>
    %c1_i32 = arith.constant 1 : i32
    %5 = vector.broadcast %c1_i32 : i32 to vector<32x4xi32>
    %6 = arith.addi %1, %5 : vector<32x4xi32>
    %c8_i32_0 = arith.constant 8 : i32
    %7 = vector.broadcast %c8_i32_0 : i32 to vector<32x4xi32>
    %8 = arith.muli %6, %7 : vector<32x4xi32>
    %9 = arith.cmpi slt, %0, %8 : vector<32x4xi32>
    %10 = arith.andi %4, %9 : vector<32x4xi1>
    %11 = arith.extui %10 : vector<32x4xi1> to vector<32x4xi32>
    %12 = arith.sitofp %11 : vector<32x4xi32> to vector<32x4xf32>
    %13 = tpu.iota {dimensions = array<i32: 1>} : vector<4x32xi32>
    %14 = tpu.iota {dimensions = array<i32: 0>} : vector<4x32xi32>
    %c8_i32_1 = arith.constant 8 : i32
    %15 = vector.broadcast %c8_i32_1 : i32 to vector<4x32xi32>
    %16 = arith.muli %14, %15 : vector<4x32xi32>
    %17 = arith.cmpi sge, %13, %16 : vector<4x32xi32>
    %c1_i32_2 = arith.constant 1 : i32
    %18 = vector.broadcast %c1_i32_2 : i32 to vector<4x32xi32>
    %19 = arith.addi %14, %18 : vector<4x32xi32>
    %c8_i32_3 = arith.constant 8 : i32
    %20 = vector.broadcast %c8_i32_3 : i32 to vector<4x32xi32>
    %21 = arith.muli %19, %20 : vector<4x32xi32>
    %22 = arith.cmpi slt, %13, %21 : vector<4x32xi32>
    %23 = arith.andi %17, %22 : vector<4x32xi1>
    %24 = arith.extui %23 : vector<4x32xi1> to vector<4x32xi32>
    %25 = arith.sitofp %24 : vector<4x32xi32> to vector<4x32xf32>
    %c0 = arith.constant 0 : index
    %c0_4 = arith.constant 0 : index
    %26 = vector.load %arg1[%c0, %c0_4] : memref<72x16xf32, #tpu.memory_space<vmem>>, vector<72x16xf32>
    %c0_5 = arith.constant 0 : index
    %c0_6 = arith.constant 0 : index
    %27 = vector.load %arg2[%c0_5, %c0_6] : memref<512x32xf32, #tpu.memory_space<vmem>>, vector<16x32xf32>
    %cst = arith.constant dense<0.000000e+00> : vector<72x32xf32>
    %28 = tpu.matmul %26, %27, %cst {dimension_numbers = #tpu.dot_dimension_numbers<[1], [0], [0], [1], [0, 0, 1, 1], [], []>} : vector<72x16xf32>, vector<16x32xf32>, vector<72x32xf32> -> vector<72x32xf32>
    %c16 = arith.constant 16 : index
    %c0_7 = arith.constant 0 : index
    %29 = vector.load %arg2[%c16, %c0_7] : memref<512x32xf32, #tpu.memory_space<vmem>>, vector<72x32xf32>
    %30 = arith.addf %28, %29 : vector<72x32xf32>
    %31 = vector.extract_strided_slice %30 {offsets = [0, 0], sizes = [64, 32], strides = [1, 1]} : vector<72x32xf32> to vector<64x32xf32>
    %32 = vector.extract_strided_slice %30 {offsets = [64, 0], sizes = [8, 32], strides = [1, 1]} : vector<72x32xf32> to vector<8x32xf32>
    %c88 = arith.constant 88 : index
    %c0_8 = arith.constant 0 : index
    %33 = vector.load %arg2[%c88, %c0_8] : memref<512x32xf32, #tpu.memory_space<vmem>>, vector<1x32xf32>
    %34 = vector.shape_cast %33 : vector<1x32xf32> to vector<1x32xf32>
    %35 = vector.broadcast %34 : vector<1x32xf32> to vector<8x32xf32>
    %c0_9 = arith.constant 0 : index
    %c0_10 = arith.constant 0 : index
    %36 = vector.load %arg3[%c0_9, %c0_10] : memref<104x128xf32, #tpu.memory_space<vmem>>, vector<32x128xf32>
    %cst_11 = arith.constant dense<0.000000e+00> : vector<64x128xf32>
    %37 = tpu.matmul %31, %36, %cst_11 {dimension_numbers = #tpu.dot_dimension_numbers<[1], [0], [0], [1], [0, 0, 1, 1], [], []>} : vector<64x32xf32>, vector<32x128xf32>, vector<64x128xf32> -> vector<64x128xf32>
    %c96 = arith.constant 96 : index
    %c0_12 = arith.constant 0 : index
    %38 = vector.load %arg3[%c96, %c0_12] : memref<104x128xf32, #tpu.memory_space<vmem>>, vector<1x128xf32>
    %39 = vector.broadcast %38 : vector<1x128xf32> to vector<64x128xf32>
    %40 = arith.addf %37, %39 : vector<64x128xf32>
    %c32 = arith.constant 32 : index
    %c0_13 = arith.constant 0 : index
    %41 = vector.load %arg3[%c32, %c0_13] : memref<104x128xf32, #tpu.memory_space<vmem>>, vector<32x128xf32>
    %c97 = arith.constant 97 : index
    %c0_14 = arith.constant 0 : index
    %42 = vector.load %arg3[%c97, %c0_14] : memref<104x128xf32, #tpu.memory_space<vmem>>, vector<1x128xf32>
    %c96_15 = arith.constant 96 : index
    %c0_16 = arith.constant 0 : index
    %43 = vector.load %arg2[%c96_15, %c0_16] : memref<512x32xf32, #tpu.memory_space<vmem>>, vector<32x32xf32>
    %cst_17 = arith.constant dense<0.000000e+00> : vector<8x32xf32>
    %44 = tpu.matmul %35, %43, %cst_17 {dimension_numbers = #tpu.dot_dimension_numbers<[1], [0], [0], [1], [0, 0, 1, 1], [], []>} : vector<8x32xf32>, vector<32x32xf32>, vector<8x32xf32> -> vector<8x32xf32>
    %c256 = arith.constant 256 : index
    %c0_18 = arith.constant 0 : index
    %45 = vector.load %arg2[%c256, %c0_18] : memref<512x32xf32, #tpu.memory_space<vmem>>, vector<1x32xf32>
    %46 = vector.broadcast %45 : vector<1x32xf32> to vector<8x32xf32>
    %47 = arith.addf %44, %46 : vector<8x32xf32>
    %48 = arith.addf %35, %47 : vector<8x32xf32>
    %c260 = arith.constant 260 : index
    %c0_19 = arith.constant 0 : index
    %49 = vector.load %arg2[%c260, %c0_19] : memref<512x32xf32, #tpu.memory_space<vmem>>, vector<1x32xf32>
    %c261 = arith.constant 261 : index
    %c0_20 = arith.constant 0 : index
    %50 = vector.load %arg2[%c261, %c0_20] : memref<512x32xf32, #tpu.memory_space<vmem>>, vector<1x32xf32>
    %cst_21 = arith.constant dense<0.000000e+00> : vector<8xf32>
    %51 = vector.multi_reduction <add>, %48, %cst_21 [1] : vector<8x32xf32> to vector<8xf32>
    %52 = vector.shape_cast %51 : vector<8xf32> to vector<8x1xf32>
    %cst_22 = arith.constant 3.200000e+01 : f32
    %53 = vector.broadcast %cst_22 : f32 to vector<8x1xf32>
    %54 = arith.divf %52, %53 : vector<8x1xf32>
    %55 = arith.mulf %48, %48 : vector<8x32xf32>
    %cst_23 = arith.constant dense<0.000000e+00> : vector<8xf32>
    %56 = vector.multi_reduction <add>, %55, %cst_23 [1] : vector<8x32xf32> to vector<8xf32>
    %57 = vector.shape_cast %56 : vector<8xf32> to vector<8x1xf32>
    %cst_24 = arith.constant 3.200000e+01 : f32
    %58 = vector.broadcast %cst_24 : f32 to vector<8x1xf32>
    %59 = arith.divf %57, %58 : vector<8x1xf32>
    %60 = arith.mulf %54, %54 : vector<8x1xf32>
    %61 = arith.subf %59, %60 : vector<8x1xf32>
    %62 = vector.broadcast %54 : vector<8x1xf32> to vector<8x32xf32>
    %63 = arith.subf %48, %62 : vector<8x32xf32>
    %cst_25 = arith.constant 9.99999974E-6 : f32
    %64 = vector.broadcast %cst_25 : f32 to vector<8x1xf32>
    %65 = arith.addf %61, %64 : vector<8x1xf32>
    %66 = math.rsqrt %65 : vector<8x1xf32>
    %67 = vector.broadcast %66 : vector<8x1xf32> to vector<8x32xf32>
    %68 = arith.mulf %63, %67 : vector<8x32xf32>
    %69 = vector.broadcast %49 : vector<1x32xf32> to vector<8x32xf32>
    %70 = arith.mulf %68, %69 : vector<8x32xf32>
    %71 = vector.broadcast %50 : vector<1x32xf32> to vector<8x32xf32>
    %72 = arith.addf %70, %71 : vector<8x32xf32>
    %c128 = arith.constant 128 : index
    %c0_26 = arith.constant 0 : index
    %73 = vector.load %arg2[%c128, %c0_26] : memref<512x32xf32, #tpu.memory_space<vmem>>, vector<32x32xf32>
    %cst_27 = arith.constant dense<0.000000e+00> : vector<8x32xf32>
    %74 = tpu.matmul %72, %73, %cst_27 {dimension_numbers = #tpu.dot_dimension_numbers<[1], [0], [0], [1], [0, 0, 1, 1], [], []>} : vector<8x32xf32>, vector<32x32xf32>, vector<8x32xf32> -> vector<8x32xf32>
    %c257 = arith.constant 257 : index
    %c0_28 = arith.constant 0 : index
    %75 = vector.load %arg2[%c257, %c0_28] : memref<512x32xf32, #tpu.memory_space<vmem>>, vector<1x32xf32>
    %76 = vector.broadcast %75 : vector<1x32xf32> to vector<8x32xf32>
    %77 = arith.addf %74, %76 : vector<8x32xf32>
    %78 = vector.shape_cast %77 : vector<8x32xf32> to vector<8x1x32xf32>
    %79 = vector.broadcast %78 : vector<8x1x32xf32> to vector<8x8x32xf32>
    %80 = vector.shape_cast %79 : vector<8x8x32xf32> to vector<64x32xf32>
    %81 = vector.extract_strided_slice %40 {offsets = [0, 0], sizes = [64, 32], strides = [1, 1]} : vector<64x128xf32> to vector<64x32xf32>
    %82 = vector.extract_strided_slice %40 {offsets = [0, 32], sizes = [64, 32], strides = [1, 1]} : vector<64x128xf32> to vector<64x32xf32>
    %83 = arith.mulf %81, %80 : vector<64x32xf32>
    %cst_29 = arith.constant dense<0.000000e+00> : vector<64x4xf32>
    %84 = tpu.matmul %83, %12, %cst_29 {dimension_numbers = #tpu.dot_dimension_numbers<[1], [0], [0], [1], [0, 0, 1, 1], [], []>} : vector<64x32xf32>, vector<32x4xf32>, vector<64x4xf32> -> vector<64x4xf32>
    %cst_30 = arith.constant dense<0xFF800000> : vector<4xf32>
    %85 = vector.multi_reduction <maximumf>, %84, %cst_30 [0] : vector<64x4xf32> to vector<4xf32>
    %86 = vector.shape_cast %85 : vector<4xf32> to vector<1x4xf32>
    %87 = vector.broadcast %86 : vector<1x4xf32> to vector<64x4xf32>
    %88 = arith.subf %84, %87 : vector<64x4xf32>
    %89 = math.exp %88 : vector<64x4xf32>
    %cst_31 = arith.constant dense<0.000000e+00> : vector<64x32xf32>
    %90 = tpu.matmul %89, %25, %cst_31 {dimension_numbers = #tpu.dot_dimension_numbers<[1], [0], [0], [1], [0, 0, 1, 1], [], []>} : vector<64x4xf32>, vector<4x32xf32>, vector<64x32xf32> -> vector<64x32xf32>
    %91 = arith.mulf %90, %82 : vector<64x32xf32>
    %92 = vector.shape_cast %91 : vector<64x32xf32> to vector<8x8x32xf32>
    %cst_32 = arith.constant dense<0.000000e+00> : vector<8x32xf32>
    %93 = vector.multi_reduction <add>, %92, %cst_32 [1] : vector<8x8x32xf32> to vector<8x32xf32>
    %94 = vector.shape_cast %90 : vector<64x32xf32> to vector<8x8x32xf32>
    %cst_33 = arith.constant dense<0.000000e+00> : vector<8x32xf32>
    %95 = vector.multi_reduction <add>, %94, %cst_33 [1] : vector<8x8x32xf32> to vector<8x32xf32>
    %96 = tpu.reciprocal %95 {approx = true} : vector<8x32xf32> -> vector<8x32xf32>
    %97 = arith.mulf %93, %96 : vector<8x32xf32>
    %c160 = arith.constant 160 : index
    %c0_34 = arith.constant 0 : index
    %98 = vector.load %arg2[%c160, %c0_34] : memref<512x32xf32, #tpu.memory_space<vmem>>, vector<32x32xf32>
    %cst_35 = arith.constant dense<0.000000e+00> : vector<8x32xf32>
    %99 = tpu.matmul %97, %98, %cst_35 {dimension_numbers = #tpu.dot_dimension_numbers<[1], [0], [0], [1], [0, 0, 1, 1], [], []>} : vector<8x32xf32>, vector<32x32xf32>, vector<8x32xf32> -> vector<8x32xf32>
    %c258 = arith.constant 258 : index
    %c0_36 = arith.constant 0 : index
    %100 = vector.load %arg2[%c258, %c0_36] : memref<512x32xf32, #tpu.memory_space<vmem>>, vector<1x32xf32>
    %101 = vector.broadcast %100 : vector<1x32xf32> to vector<8x32xf32>
    %102 = arith.addf %99, %101 : vector<8x32xf32>
    %103 = arith.addf %72, %102 : vector<8x32xf32>
    %c262 = arith.constant 262 : index
    %c0_37 = arith.constant 0 : index
    %104 = vector.load %arg2[%c262, %c0_37] : memref<512x32xf32, #tpu.memory_space<vmem>>, vector<1x32xf32>
    %c263 = arith.constant 263 : index
    %c0_38 = arith.constant 0 : index
    %105 = vector.load %arg2[%c263, %c0_38] : memref<512x32xf32, #tpu.memory_space<vmem>>, vector<1x32xf32>
    %cst_39 = arith.constant dense<0.000000e+00> : vector<8xf32>
    %106 = vector.multi_reduction <add>, %103, %cst_39 [1] : vector<8x32xf32> to vector<8xf32>
    %107 = vector.shape_cast %106 : vector<8xf32> to vector<8x1xf32>
    %cst_40 = arith.constant 3.200000e+01 : f32
    %108 = vector.broadcast %cst_40 : f32 to vector<8x1xf32>
    %109 = arith.divf %107, %108 : vector<8x1xf32>
    %110 = arith.mulf %103, %103 : vector<8x32xf32>
    %cst_41 = arith.constant dense<0.000000e+00> : vector<8xf32>
    %111 = vector.multi_reduction <add>, %110, %cst_41 [1] : vector<8x32xf32> to vector<8xf32>
    %112 = vector.shape_cast %111 : vector<8xf32> to vector<8x1xf32>
    %cst_42 = arith.constant 3.200000e+01 : f32
    %113 = vector.broadcast %cst_42 : f32 to vector<8x1xf32>
    %114 = arith.divf %112, %113 : vector<8x1xf32>
    %115 = arith.mulf %109, %109 : vector<8x1xf32>
    %116 = arith.subf %114, %115 : vector<8x1xf32>
    %117 = vector.broadcast %109 : vector<8x1xf32> to vector<8x32xf32>
    %118 = arith.subf %103, %117 : vector<8x32xf32>
    %cst_43 = arith.constant 9.99999974E-6 : f32
    %119 = vector.broadcast %cst_43 : f32 to vector<8x1xf32>
    %120 = arith.addf %116, %119 : vector<8x1xf32>
    %121 = math.rsqrt %120 : vector<8x1xf32>
    %122 = vector.broadcast %121 : vector<8x1xf32> to vector<8x32xf32>
    %123 = arith.mulf %118, %122 : vector<8x32xf32>
    %124 = vector.broadcast %104 : vector<1x32xf32> to vector<8x32xf32>
    %125 = arith.mulf %123, %124 : vector<8x32xf32>
    %126 = vector.broadcast %105 : vector<1x32xf32> to vector<8x32xf32>
    %127 = arith.addf %125, %126 : vector<8x32xf32>
    %128 = vector.extract_strided_slice %41 {offsets = [0, 0], sizes = [32, 64], strides = [1, 1]} : vector<32x128xf32> to vector<32x64xf32>
    %cst_44 = arith.constant dense<0.000000e+00> : vector<8x64xf32>
    %129 = tpu.matmul %127, %128, %cst_44 {dimension_numbers = #tpu.dot_dimension_numbers<[1], [0], [0], [1], [0, 0, 1, 1], [], []>} : vector<8x32xf32>, vector<32x64xf32>, vector<8x64xf32> -> vector<8x64xf32>
    %130 = vector.extract_strided_slice %42 {offsets = [0, 0], sizes = [1, 64], strides = [1, 1]} : vector<1x128xf32> to vector<1x64xf32>
    %131 = vector.broadcast %130 : vector<1x64xf32> to vector<8x64xf32>
    %132 = arith.addf %129, %131 : vector<8x64xf32>
    %cst_45 = arith.constant 0.000000e+00 : f32
    %133 = vector.broadcast %cst_45 : f32 to vector<8x64xf32>
    %134 = arith.maximumf %132, %133 : vector<8x64xf32>
    %c192 = arith.constant 192 : index
    %c0_46 = arith.constant 0 : index
    %135 = vector.load %arg2[%c192, %c0_46] : memref<512x32xf32, #tpu.memory_space<vmem>>, vector<64x32xf32>
    %cst_47 = arith.constant dense<0.000000e+00> : vector<8x32xf32>
    %136 = tpu.matmul %134, %135, %cst_47 {dimension_numbers = #tpu.dot_dimension_numbers<[1], [0], [0], [1], [0, 0, 1, 1], [], []>} : vector<8x64xf32>, vector<64x32xf32>, vector<8x32xf32> -> vector<8x32xf32>
    %c259 = arith.constant 259 : index
    %c0_48 = arith.constant 0 : index
    %137 = vector.load %arg2[%c259, %c0_48] : memref<512x32xf32, #tpu.memory_space<vmem>>, vector<1x32xf32>
    %138 = vector.broadcast %137 : vector<1x32xf32> to vector<8x32xf32>
    %139 = arith.addf %136, %138 : vector<8x32xf32>
    %140 = arith.addf %127, %139 : vector<8x32xf32>
    %c264 = arith.constant 264 : index
    %c0_49 = arith.constant 0 : index
    %141 = vector.load %arg2[%c264, %c0_49] : memref<512x32xf32, #tpu.memory_space<vmem>>, vector<1x32xf32>
    %c265 = arith.constant 265 : index
    %c0_50 = arith.constant 0 : index
    %142 = vector.load %arg2[%c265, %c0_50] : memref<512x32xf32, #tpu.memory_space<vmem>>, vector<1x32xf32>
    %cst_51 = arith.constant dense<0.000000e+00> : vector<8xf32>
    %143 = vector.multi_reduction <add>, %140, %cst_51 [1] : vector<8x32xf32> to vector<8xf32>
    %144 = vector.shape_cast %143 : vector<8xf32> to vector<8x1xf32>
    %cst_52 = arith.constant 3.200000e+01 : f32
    %145 = vector.broadcast %cst_52 : f32 to vector<8x1xf32>
    %146 = arith.divf %144, %145 : vector<8x1xf32>
    %147 = arith.mulf %140, %140 : vector<8x32xf32>
    %cst_53 = arith.constant dense<0.000000e+00> : vector<8xf32>
    %148 = vector.multi_reduction <add>, %147, %cst_53 [1] : vector<8x32xf32> to vector<8xf32>
    %149 = vector.shape_cast %148 : vector<8xf32> to vector<8x1xf32>
    %cst_54 = arith.constant 3.200000e+01 : f32
    %150 = vector.broadcast %cst_54 : f32 to vector<8x1xf32>
    %151 = arith.divf %149, %150 : vector<8x1xf32>
    %152 = arith.mulf %146, %146 : vector<8x1xf32>
    %153 = arith.subf %151, %152 : vector<8x1xf32>
    %154 = vector.broadcast %146 : vector<8x1xf32> to vector<8x32xf32>
    %155 = arith.subf %140, %154 : vector<8x32xf32>
    %cst_55 = arith.constant 9.99999974E-6 : f32
    %156 = vector.broadcast %cst_55 : f32 to vector<8x1xf32>
    %157 = arith.addf %153, %156 : vector<8x1xf32>
    %158 = math.rsqrt %157 : vector<8x1xf32>
    %159 = vector.broadcast %158 : vector<8x1xf32> to vector<8x32xf32>
    %160 = arith.mulf %155, %159 : vector<8x32xf32>
    %161 = vector.broadcast %141 : vector<1x32xf32> to vector<8x32xf32>
    %162 = arith.mulf %160, %161 : vector<8x32xf32>
    %163 = vector.broadcast %142 : vector<1x32xf32> to vector<8x32xf32>
    %164 = arith.addf %162, %163 : vector<8x32xf32>
    %c272 = arith.constant 272 : index
    %c0_56 = arith.constant 0 : index
    %165 = vector.load %arg2[%c272, %c0_56] : memref<512x32xf32, #tpu.memory_space<vmem>>, vector<32x32xf32>
    %cst_57 = arith.constant dense<0.000000e+00> : vector<8x32xf32>
    %166 = tpu.matmul %164, %165, %cst_57 {dimension_numbers = #tpu.dot_dimension_numbers<[1], [0], [0], [1], [0, 0, 1, 1], [], []>} : vector<8x32xf32>, vector<32x32xf32>, vector<8x32xf32> -> vector<8x32xf32>
    %c432 = arith.constant 432 : index
    %c0_58 = arith.constant 0 : index
    %167 = vector.load %arg2[%c432, %c0_58] : memref<512x32xf32, #tpu.memory_space<vmem>>, vector<1x32xf32>
    %168 = vector.broadcast %167 : vector<1x32xf32> to vector<8x32xf32>
    %169 = arith.addf %166, %168 : vector<8x32xf32>
    %170 = arith.addf %164, %169 : vector<8x32xf32>
    %c436 = arith.constant 436 : index
    %c0_59 = arith.constant 0 : index
    %171 = vector.load %arg2[%c436, %c0_59] : memref<512x32xf32, #tpu.memory_space<vmem>>, vector<1x32xf32>
    %c437 = arith.constant 437 : index
    %c0_60 = arith.constant 0 : index
    %172 = vector.load %arg2[%c437, %c0_60] : memref<512x32xf32, #tpu.memory_space<vmem>>, vector<1x32xf32>
    %cst_61 = arith.constant dense<0.000000e+00> : vector<8xf32>
    %173 = vector.multi_reduction <add>, %170, %cst_61 [1] : vector<8x32xf32> to vector<8xf32>
    %174 = vector.shape_cast %173 : vector<8xf32> to vector<8x1xf32>
    %cst_62 = arith.constant 3.200000e+01 : f32
    %175 = vector.broadcast %cst_62 : f32 to vector<8x1xf32>
    %176 = arith.divf %174, %175 : vector<8x1xf32>
    %177 = arith.mulf %170, %170 : vector<8x32xf32>
    %cst_63 = arith.constant dense<0.000000e+00> : vector<8xf32>
    %178 = vector.multi_reduction <add>, %177, %cst_63 [1] : vector<8x32xf32> to vector<8xf32>
    %179 = vector.shape_cast %178 : vector<8xf32> to vector<8x1xf32>
    %cst_64 = arith.constant 3.200000e+01 : f32
    %180 = vector.broadcast %cst_64 : f32 to vector<8x1xf32>
    %181 = arith.divf %179, %180 : vector<8x1xf32>
    %182 = arith.mulf %176, %176 : vector<8x1xf32>
    %183 = arith.subf %181, %182 : vector<8x1xf32>
    %184 = vector.broadcast %176 : vector<8x1xf32> to vector<8x32xf32>
    %185 = arith.subf %170, %184 : vector<8x32xf32>
    %cst_65 = arith.constant 9.99999974E-6 : f32
    %186 = vector.broadcast %cst_65 : f32 to vector<8x1xf32>
    %187 = arith.addf %183, %186 : vector<8x1xf32>
    %188 = math.rsqrt %187 : vector<8x1xf32>
    %189 = vector.broadcast %188 : vector<8x1xf32> to vector<8x32xf32>
    %190 = arith.mulf %185, %189 : vector<8x32xf32>
    %191 = vector.broadcast %171 : vector<1x32xf32> to vector<8x32xf32>
    %192 = arith.mulf %190, %191 : vector<8x32xf32>
    %193 = vector.broadcast %172 : vector<1x32xf32> to vector<8x32xf32>
    %194 = arith.addf %192, %193 : vector<8x32xf32>
    %c304 = arith.constant 304 : index
    %c0_66 = arith.constant 0 : index
    %195 = vector.load %arg2[%c304, %c0_66] : memref<512x32xf32, #tpu.memory_space<vmem>>, vector<32x32xf32>
    %cst_67 = arith.constant dense<0.000000e+00> : vector<8x32xf32>
    %196 = tpu.matmul %194, %195, %cst_67 {dimension_numbers = #tpu.dot_dimension_numbers<[1], [0], [0], [1], [0, 0, 1, 1], [], []>} : vector<8x32xf32>, vector<32x32xf32>, vector<8x32xf32> -> vector<8x32xf32>
    %c433 = arith.constant 433 : index
    %c0_68 = arith.constant 0 : index
    %197 = vector.load %arg2[%c433, %c0_68] : memref<512x32xf32, #tpu.memory_space<vmem>>, vector<1x32xf32>
    %198 = vector.broadcast %197 : vector<1x32xf32> to vector<8x32xf32>
    %199 = arith.addf %196, %198 : vector<8x32xf32>
    %200 = vector.shape_cast %199 : vector<8x32xf32> to vector<8x1x32xf32>
    %201 = vector.broadcast %200 : vector<8x1x32xf32> to vector<8x8x32xf32>
    %202 = vector.shape_cast %201 : vector<8x8x32xf32> to vector<64x32xf32>
    %203 = vector.extract_strided_slice %40 {offsets = [0, 64], sizes = [64, 32], strides = [1, 1]} : vector<64x128xf32> to vector<64x32xf32>
    %204 = vector.extract_strided_slice %40 {offsets = [0, 96], sizes = [64, 32], strides = [1, 1]} : vector<64x128xf32> to vector<64x32xf32>
    %205 = arith.mulf %203, %202 : vector<64x32xf32>
    %cst_69 = arith.constant dense<0.000000e+00> : vector<64x4xf32>
    %206 = tpu.matmul %205, %12, %cst_69 {dimension_numbers = #tpu.dot_dimension_numbers<[1], [0], [0], [1], [0, 0, 1, 1], [], []>} : vector<64x32xf32>, vector<32x4xf32>, vector<64x4xf32> -> vector<64x4xf32>
    %cst_70 = arith.constant dense<0xFF800000> : vector<4xf32>
    %207 = vector.multi_reduction <maximumf>, %206, %cst_70 [0] : vector<64x4xf32> to vector<4xf32>
    %208 = vector.shape_cast %207 : vector<4xf32> to vector<1x4xf32>
    %209 = vector.broadcast %208 : vector<1x4xf32> to vector<64x4xf32>
    %210 = arith.subf %206, %209 : vector<64x4xf32>
    %211 = math.exp %210 : vector<64x4xf32>
    %cst_71 = arith.constant dense<0.000000e+00> : vector<64x32xf32>
    %212 = tpu.matmul %211, %25, %cst_71 {dimension_numbers = #tpu.dot_dimension_numbers<[1], [0], [0], [1], [0, 0, 1, 1], [], []>} : vector<64x4xf32>, vector<4x32xf32>, vector<64x32xf32> -> vector<64x32xf32>
    %213 = arith.mulf %212, %204 : vector<64x32xf32>
    %214 = vector.shape_cast %213 : vector<64x32xf32> to vector<8x8x32xf32>
    %cst_72 = arith.constant dense<0.000000e+00> : vector<8x32xf32>
    %215 = vector.multi_reduction <add>, %214, %cst_72 [1] : vector<8x8x32xf32> to vector<8x32xf32>
    %216 = vector.shape_cast %212 : vector<64x32xf32> to vector<8x8x32xf32>
    %cst_73 = arith.constant dense<0.000000e+00> : vector<8x32xf32>
    %217 = vector.multi_reduction <add>, %216, %cst_73 [1] : vector<8x8x32xf32> to vector<8x32xf32>
    %218 = tpu.reciprocal %217 {approx = true} : vector<8x32xf32> -> vector<8x32xf32>
    %219 = arith.mulf %215, %218 : vector<8x32xf32>
    %c336 = arith.constant 336 : index
    %c0_74 = arith.constant 0 : index
    %220 = vector.load %arg2[%c336, %c0_74] : memref<512x32xf32, #tpu.memory_space<vmem>>, vector<32x32xf32>
    %cst_75 = arith.constant dense<0.000000e+00> : vector<8x32xf32>
    %221 = tpu.matmul %219, %220, %cst_75 {dimension_numbers = #tpu.dot_dimension_numbers<[1], [0], [0], [1], [0, 0, 1, 1], [], []>} : vector<8x32xf32>, vector<32x32xf32>, vector<8x32xf32> -> vector<8x32xf32>
    %c434 = arith.constant 434 : index
    %c0_76 = arith.constant 0 : index
    %222 = vector.load %arg2[%c434, %c0_76] : memref<512x32xf32, #tpu.memory_space<vmem>>, vector<1x32xf32>
    %223 = vector.broadcast %222 : vector<1x32xf32> to vector<8x32xf32>
    %224 = arith.addf %221, %223 : vector<8x32xf32>
    %225 = arith.addf %194, %224 : vector<8x32xf32>
    %c438 = arith.constant 438 : index
    %c0_77 = arith.constant 0 : index
    %226 = vector.load %arg2[%c438, %c0_77] : memref<512x32xf32, #tpu.memory_space<vmem>>, vector<1x32xf32>
    %c439 = arith.constant 439 : index
    %c0_78 = arith.constant 0 : index
    %227 = vector.load %arg2[%c439, %c0_78] : memref<512x32xf32, #tpu.memory_space<vmem>>, vector<1x32xf32>
    %cst_79 = arith.constant dense<0.000000e+00> : vector<8xf32>
    %228 = vector.multi_reduction <add>, %225, %cst_79 [1] : vector<8x32xf32> to vector<8xf32>
    %229 = vector.shape_cast %228 : vector<8xf32> to vector<8x1xf32>
    %cst_80 = arith.constant 3.200000e+01 : f32
    %230 = vector.broadcast %cst_80 : f32 to vector<8x1xf32>
    %231 = arith.divf %229, %230 : vector<8x1xf32>
    %232 = arith.mulf %225, %225 : vector<8x32xf32>
    %cst_81 = arith.constant dense<0.000000e+00> : vector<8xf32>
    %233 = vector.multi_reduction <add>, %232, %cst_81 [1] : vector<8x32xf32> to vector<8xf32>
    %234 = vector.shape_cast %233 : vector<8xf32> to vector<8x1xf32>
    %cst_82 = arith.constant 3.200000e+01 : f32
    %235 = vector.broadcast %cst_82 : f32 to vector<8x1xf32>
    %236 = arith.divf %234, %235 : vector<8x1xf32>
    %237 = arith.mulf %231, %231 : vector<8x1xf32>
    %238 = arith.subf %236, %237 : vector<8x1xf32>
    %239 = vector.broadcast %231 : vector<8x1xf32> to vector<8x32xf32>
    %240 = arith.subf %225, %239 : vector<8x32xf32>
    %cst_83 = arith.constant 9.99999974E-6 : f32
    %241 = vector.broadcast %cst_83 : f32 to vector<8x1xf32>
    %242 = arith.addf %238, %241 : vector<8x1xf32>
    %243 = math.rsqrt %242 : vector<8x1xf32>
    %244 = vector.broadcast %243 : vector<8x1xf32> to vector<8x32xf32>
    %245 = arith.mulf %240, %244 : vector<8x32xf32>
    %246 = vector.broadcast %226 : vector<1x32xf32> to vector<8x32xf32>
    %247 = arith.mulf %245, %246 : vector<8x32xf32>
    %248 = vector.broadcast %227 : vector<1x32xf32> to vector<8x32xf32>
    %249 = arith.addf %247, %248 : vector<8x32xf32>
    %250 = vector.extract_strided_slice %41 {offsets = [0, 64], sizes = [32, 64], strides = [1, 1]} : vector<32x128xf32> to vector<32x64xf32>
    %cst_84 = arith.constant dense<0.000000e+00> : vector<8x64xf32>
    %251 = tpu.matmul %249, %250, %cst_84 {dimension_numbers = #tpu.dot_dimension_numbers<[1], [0], [0], [1], [0, 0, 1, 1], [], []>} : vector<8x32xf32>, vector<32x64xf32>, vector<8x64xf32> -> vector<8x64xf32>
    %252 = vector.extract_strided_slice %42 {offsets = [0, 64], sizes = [1, 64], strides = [1, 1]} : vector<1x128xf32> to vector<1x64xf32>
    %253 = vector.broadcast %252 : vector<1x64xf32> to vector<8x64xf32>
    %254 = arith.addf %251, %253 : vector<8x64xf32>
    %cst_85 = arith.constant 0.000000e+00 : f32
    %255 = vector.broadcast %cst_85 : f32 to vector<8x64xf32>
    %256 = arith.maximumf %254, %255 : vector<8x64xf32>
    %c368 = arith.constant 368 : index
    %c0_86 = arith.constant 0 : index
    %257 = vector.load %arg2[%c368, %c0_86] : memref<512x32xf32, #tpu.memory_space<vmem>>, vector<64x32xf32>
    %cst_87 = arith.constant dense<0.000000e+00> : vector<8x32xf32>
    %258 = tpu.matmul %256, %257, %cst_87 {dimension_numbers = #tpu.dot_dimension_numbers<[1], [0], [0], [1], [0, 0, 1, 1], [], []>} : vector<8x64xf32>, vector<64x32xf32>, vector<8x32xf32> -> vector<8x32xf32>
    %c435 = arith.constant 435 : index
    %c0_88 = arith.constant 0 : index
    %259 = vector.load %arg2[%c435, %c0_88] : memref<512x32xf32, #tpu.memory_space<vmem>>, vector<1x32xf32>
    %260 = vector.broadcast %259 : vector<1x32xf32> to vector<8x32xf32>
    %261 = arith.addf %258, %260 : vector<8x32xf32>
    %262 = arith.addf %249, %261 : vector<8x32xf32>
    %c440 = arith.constant 440 : index
    %c0_89 = arith.constant 0 : index
    %263 = vector.load %arg2[%c440, %c0_89] : memref<512x32xf32, #tpu.memory_space<vmem>>, vector<1x32xf32>
    %c441 = arith.constant 441 : index
    %c0_90 = arith.constant 0 : index
    %264 = vector.load %arg2[%c441, %c0_90] : memref<512x32xf32, #tpu.memory_space<vmem>>, vector<1x32xf32>
    %cst_91 = arith.constant dense<0.000000e+00> : vector<8xf32>
    %265 = vector.multi_reduction <add>, %262, %cst_91 [1] : vector<8x32xf32> to vector<8xf32>
    %266 = vector.shape_cast %265 : vector<8xf32> to vector<8x1xf32>
    %cst_92 = arith.constant 3.200000e+01 : f32
    %267 = vector.broadcast %cst_92 : f32 to vector<8x1xf32>
    %268 = arith.divf %266, %267 : vector<8x1xf32>
    %269 = arith.mulf %262, %262 : vector<8x32xf32>
    %cst_93 = arith.constant dense<0.000000e+00> : vector<8xf32>
    %270 = vector.multi_reduction <add>, %269, %cst_93 [1] : vector<8x32xf32> to vector<8xf32>
    %271 = vector.shape_cast %270 : vector<8xf32> to vector<8x1xf32>
    %cst_94 = arith.constant 3.200000e+01 : f32
    %272 = vector.broadcast %cst_94 : f32 to vector<8x1xf32>
    %273 = arith.divf %271, %272 : vector<8x1xf32>
    %274 = arith.mulf %268, %268 : vector<8x1xf32>
    %275 = arith.subf %273, %274 : vector<8x1xf32>
    %276 = vector.broadcast %268 : vector<8x1xf32> to vector<8x32xf32>
    %277 = arith.subf %262, %276 : vector<8x32xf32>
    %cst_95 = arith.constant 9.99999974E-6 : f32
    %278 = vector.broadcast %cst_95 : f32 to vector<8x1xf32>
    %279 = arith.addf %275, %278 : vector<8x1xf32>
    %280 = math.rsqrt %279 : vector<8x1xf32>
    %281 = vector.broadcast %280 : vector<8x1xf32> to vector<8x32xf32>
    %282 = arith.mulf %277, %281 : vector<8x32xf32>
    %283 = vector.broadcast %263 : vector<1x32xf32> to vector<8x32xf32>
    %284 = arith.mulf %282, %283 : vector<8x32xf32>
    %285 = vector.broadcast %264 : vector<1x32xf32> to vector<8x32xf32>
    %286 = arith.addf %284, %285 : vector<8x32xf32>
    %287 = tpu.concatenate %286, %32 in 1 : vector<8x32xf32>, vector<8x32xf32> -> vector<8x64xf32>
    %c448 = arith.constant 448 : index
    %c0_96 = arith.constant 0 : index
    %288 = vector.load %arg2[%c448, %c0_96] : memref<512x32xf32, #tpu.memory_space<vmem>>, vector<64x32xf32>
    %cst_97 = arith.constant dense<0.000000e+00> : vector<8x32xf32>
    %289 = tpu.matmul %287, %288, %cst_97 {dimension_numbers = #tpu.dot_dimension_numbers<[1], [0], [0], [1], [0, 0, 1, 1], [], []>} : vector<8x64xf32>, vector<64x32xf32>, vector<8x32xf32> -> vector<8x32xf32>
    %c89 = arith.constant 89 : index
    %c0_98 = arith.constant 0 : index
    %290 = vector.load %arg2[%c89, %c0_98] : memref<512x32xf32, #tpu.memory_space<vmem>>, vector<1x32xf32>
    %291 = vector.broadcast %290 : vector<1x32xf32> to vector<8x32xf32>
    %292 = arith.addf %289, %291 : vector<8x32xf32>
    %cst_99 = arith.constant 0.000000e+00 : f32
    %293 = vector.broadcast %cst_99 : f32 to vector<8x32xf32>
    %294 = arith.maximumf %292, %293 : vector<8x32xf32>
    %c64 = arith.constant 64 : index
    %c0_100 = arith.constant 0 : index
    %295 = vector.load %arg3[%c64, %c0_100] : memref<104x128xf32, #tpu.memory_space<vmem>>, vector<32x128xf32>
    %cst_101 = arith.constant dense<0.000000e+00> : vector<8x128xf32>
    %296 = tpu.matmul %294, %295, %cst_101 {dimension_numbers = #tpu.dot_dimension_numbers<[1], [0], [0], [1], [0, 0, 1, 1], [], []>} : vector<8x32xf32>, vector<32x128xf32>, vector<8x128xf32> -> vector<8x128xf32>
    %c98 = arith.constant 98 : index
    %c0_102 = arith.constant 0 : index
    %297 = vector.load %arg3[%c98, %c0_102] : memref<104x128xf32, #tpu.memory_space<vmem>>, vector<1x128xf32>
    %298 = vector.broadcast %297 : vector<1x128xf32> to vector<8x128xf32>
    %299 = arith.addf %296, %298 : vector<8x128xf32>
    %c0_103 = arith.constant 0 : index
    %c0_104 = arith.constant 0 : index
    %300 = vector.load %arg4[%c0_103, %c0_104] : memref<8x128xf32, #tpu.memory_space<vmem>>, vector<8x128xf32>
    tpu.vector_store %arg4[%c0_103, %c0_104], %299 {strides = array<i32>} : memref<8x128xf32, #tpu.memory_space<vmem>>, vector<8x128xf32>,
    return
  }
  func.func @transform_0(%arg0: i32) -> (i32, i32) {
    %c0_i32 = arith.constant 0 : i32
    %c0_i32_0 = arith.constant 0 : i32
    return %arg0, %c0_i32 : i32, i32
  }
  func.func @transform_1(%arg0: i32) -> (i32, i32) {
    %c0_i32 = arith.constant 0 : i32
    %c0_i32_0 = arith.constant 0 : i32
    %c0_i32_1 = arith.constant 0 : i32
    return %c0_i32, %c0_i32_0 : i32, i32
  }
  func.func @transform_2(%arg0: i32) -> (i32, i32) {
    %c0_i32 = arith.constant 0 : i32
    %c0_i32_0 = arith.constant 0 : i32
    %c0_i32_1 = arith.constant 0 : i32
    return %c0_i32, %c0_i32_0 : i32, i32
  }
  func.func @transform_3(%arg0: i32) -> (i32, i32) {
    %c0_i32 = arith.constant 0 : i32
    %c0_i32_0 = arith.constant 0 : i32
    return %arg0, %c0_i32 : i32, i32
  }
}

</mosaic_0001>

<llo_original>
// kernel: daqn_forward.1
$region0: #{daqn_forward.1}
  #allocation0 [shape = 'u32[]', space=smem, size = 0x4, offset = 0x4, fixed_abs, tag = 'smem constant byte address 0x4 - core index']
  #allocation1 [shape = 'u32[144,128]{1,0:T(1,128)}', space=vmem, size = 0x12000, scoped, tag = 'internal scratch']
  %s0 = inlined_call_operand.vmem [shape: f32[72,16], index: 0, kind: input, shape index: {}]
  %s1 = inlined_call_operand.vmem [shape: f32[512,32], index: 1, kind: input, shape index: {}]
  %s2 = inlined_call_operand.vmem [shape: f32[104,128], index: 2, kind: input, shape index: {}]
  %s3 = inlined_call_operand.vmem [shape: f32[8,128], index: 3, kind: output, shape index: {}]
  %s4 = sld [smem:[#allocation0]]
  $region22: #{daqn_forward.1} parent=0
    _
  %s6 = ssub.s32 1, %s4
  %s7 = scalar_select 0, %s6, %s4
  // Predicated region
  $region2: #{daqn_forward.1} parent=0 // pred_check
    _
  $region3: #{daqn_forward.1} parent=0 // pred_check_branch
    %9 = sbr.rel (0) target = $region5
  $region4: #{daqn_forward.1} parent=0 // pred_region
    _
  $region5: #{daqn_forward.1} parent=0 // pred_fallthru
    _
  // Predicated region
  $region6: #{daqn_forward.1} parent=0 // pred_check
    _
  $region7: #{daqn_forward.1} parent=0 // pred_check_branch
    %11 = sbr.rel (0) target = $region9
  $region8: #{daqn_forward.1} parent=0 // pred_region
    _
  $region9: #{daqn_forward.1} parent=0 // pred_fallthru
    _
  // Predicated region
  $region10: #{daqn_forward.1} parent=0 // pred_check
    _
  $region11: #{daqn_forward.1} parent=0 // pred_check_branch
    %13 = sbr.rel (0) target = $region13
  $region12: #{daqn_forward.1} parent=0 // pred_region
    _
  $region13: #{daqn_forward.1} parent=0 // pred_fallthru
    _
  %v14 = vlaneseq
  %v15 = vshrl.u32 %v14, 7
  %v16 = vadd.s32 %v15, 8
  %v17 = vadd.s32 %v15, 16
  %v18 = vadd.s32 %v15, 24
  %v19 = vlaneseq
  %v20 = vand.u32 %v19, 127
  %v21 = vmul.u32 %v20, 8
  %vm22 = vcmp.ge.s32.totalorder %v15, %v21
  %vm23 = vcmp.ge.s32.totalorder %v16, %v21
  %vm24 = vcmp.ge.s32.totalorder %v17, %v21
  %vm25 = vcmp.ge.s32.totalorder %v18, %v21
  %v26 = vadd.s32 %v20, 1
  %v27 = vmul.u32 %v26, 8
  %vm28 = vcmp.lt.s32.totalorder %v15, %v27
  %vm29 = vcmp.lt.s32.totalorder %v16, %v27
  %vm30 = vcmp.lt.s32.totalorder %v17, %v27
  %vm31 = vcmp.lt.s32.totalorder %v18, %v27
  %vm32 = vmand %vm22, %vm28
  %vm33 = vmand %vm23, %vm29
  %vm34 = vmand %vm24, %vm30
  %vm35 = vmand %vm25, %vm31
  %v36 = vsel %vm32, 1, 0
  %v37 = vsel %vm33, 1, 0
  %v38 = vsel %vm34, 1, 0
  %v39 = vsel %vm35, 1, 0
  %v40 = vcvt.s32.f32 %v36
  %v41 = vcvt.s32.f32 %v37
  %v42 = vcvt.s32.f32 %v38
  %v43 = vcvt.s32.f32 %v39
  %v44 = vmul.u32 %v15, 8
  %vm45 = vcmp.ge.s32.totalorder %v20, %v44
  %v46 = vadd.s32 %v15, 1
  %v47 = vmul.u32 %v46, 8
  %vm48 = vcmp.lt.s32.totalorder %v20, %v47
  %vm49 = vmand %vm45, %vm48
  %v50 = vsel %vm49, 1, 0
  %v51 = vcvt.s32.f32 %v50
  %v52 = vld [vmem:[%s0] sm:$0xff]
  %v53 = vld [vmem:[%s0 + $0x8] sm:$0xff]
  %v54 = vld [vmem:[%s0 + $0x10] sm:$0xff]
  %v55 = vld [vmem:[%s0 + $0x18] sm:$0xff]
  %v56 = vld [vmem:[%s0 + $0x20] sm:$0xff]
  %v57 = vld [vmem:[%s0 + $0x28] sm:$0xff]
  %v58 = vld [vmem:[%s0 + $0x30] sm:$0xff]
  %v59 = vld [vmem:[%s0 + $0x38] sm:$0xff]
  %v60 = vld [vmem:[%s0 + $0x40] sm:$0xff]
  %v61 = vld [vmem:[%s1] sm:$0xff]
  %v62 = vld [vmem:[%s1 + $0x8] sm:$0xff]
  %v63 = vld [vmem:[%s1 + $0x10] sm:$0xff]
  %v64 = vld [vmem:[%s1 + $0x18] sm:$0xff]
  %v65 = vld [vmem:[%s1 + $0x20] sm:$0xff]
  %v66 = vld [vmem:[%s1 + $0x28] sm:$0xff]
  %v67 = vld [vmem:[%s1 + $0x30] sm:$0xff]
  %v68 = vld [vmem:[%s1 + $0x38] sm:$0xff]
  %v69 = vld [vmem:[%s1 + $0x40] sm:$0xff]
  %v70 = vld [vmem:[%s1 + $0x48] sm:$0xff]
  %v71 = vld [vmem:[%s1 + $0x50] sm:$0xff]
  %vm72 = vcmask 130048
  %v74 = vsel %vm72, %v52, 0
  %v77 = vsel %vm72, %v53, 0
  %v80 = vsel %vm72, %v54, 0
  %v83 = vsel %vm72, %v55, 0
  %v86 = vsel %vm72, %v56, 0
  %v89 = vsel %vm72, %v57, 0
  %v92 = vsel %vm72, %v58, 0
  %v95 = vsel %vm72, %v59, 0
  %v98 = vsel %vm72, %v60, 0
  %100 = vmatprep.subr.mxu0 0.0
  %101 = vmatpush1.msra.mxu0 %v61
  %102 = vmatprep.subr.mxu0 0.0
  %103 = vmatpush1.msra.mxu0 %v62
  %104 = vmatprep.subr.mxu0 0.0
  %105 = vmatpush1.msra.mxu0 0.0
  %106 = vmatprep.subr.mxu0 0.0
  %107 = vmatpush1.msra.mxu0 0.0
  %108 = vmatprep.subr.mxu0 0.0
  %109 = vmatpush1.msra.mxu0 0.0
  %110 = vmatprep.subr.mxu0 0.0
  %111 = vmatpush1.msra.mxu0 0.0
  %112 = vmatprep.subr.mxu0 0.0
  %113 = vmatpush1.msra.mxu0 0.0
  %114 = vmatprep.subr.mxu0 0.0
  %115 = vmatpush1.msra.mxu0 0.0
  %116 = vmatprep.subr.mxu0 0.0
  %117 = vmatpush1.msra.mxu0 0.0
  %118 = vmatprep.subr.mxu0 0.0
  %119 = vmatpush1.msra.mxu0 0.0
  %120 = vmatprep.subr.mxu0 0.0
  %121 = vmatpush1.msra.mxu0 0.0
  %122 = vmatprep.subr.mxu0 0.0
  %123 = vmatpush1.msra.mxu0 0.0
  %124 = vmatprep.subr.mxu0 0.0
  %125 = vmatpush1.msra.mxu0 0.0
  %126 = vmatprep.subr.mxu0 0.0
  %127 = vmatpush1.msra.mxu0 0.0
  %128 = vmatprep.subr.mxu0 0.0
  %129 = vmatpush1.msra.mxu0 0.0
  %130 = vmatprep.subr.mxu0 0.0
  %131 = vmatpush1.msra.mxu0 0.0
  %132 = vmatprep.subr.mxu0 0.0
  %133 = vmatpush1.msra.mxu0 0.0
  %134 = vmatprep.subr.mxu0 0.0
  %135 = vmatpush1.msra.mxu0 0.0
  %136 = vmatprep.subr.mxu0 0.0
  %137 = vmatpush1.msra.mxu0 0.0
  %138 = vmatprep.subr.mxu0 0.0
  %139 = vmatpush1.msra.mxu0 0.0
  %140 = vmatprep.subr.mxu0 0.0
  %141 = vmatpush1.msra.mxu0 0.0
  %142 = vmatprep.subr.mxu0 0.0
  %143 = vmatpush1.msra.mxu0 0.0
  %144 = vmatprep.subr.mxu0 0.0
  %145 = vmatpush1.msra.mxu0 0.0
  %146 = vmatprep.subr.mxu0 0.0
  %147 = vmatpush1.msra.mxu0 0.0
  %148 = vmatprep.subr.mxu0 0.0
  %149 = vmatpush1.msra.mxu0 0.0
  %150 = vmatprep.subr.mxu0 0.0
  %151 = vmatpush1.msra.mxu0 0.0
  %152 = vmatprep.subr.mxu0 0.0
  %153 = vmatpush1.msra.mxu0 0.0
  %154 = vmatprep.subr.mxu0 0.0
  %155 = vmatpush1.msra.mxu0 0.0
  %156 = vmatprep.subr.mxu0 0.0
  %157 = vmatpush1.msra.mxu0 0.0
  %158 = vmatprep.subr.mxu0 0.0
  %159 = vmatpush1.msra.mxu0 0.0
  %160 = vmatprep.subr.mxu0 0.0
  %161 = vmatpush1.msra.mxu0 0.0
  %162 = vmatprep.subr.mxu0 0.0
  %163 = vmatpush1.msra.mxu0 0.0
  %164 = vmatprep.mubr.f32.mxu0 0.0
  %165 = vmatmul.mubr.f32.gmra.mrb[0].mxu0 %v74
  %v166 = vpop.f32.mrb[0].mxu0
  %v167 = vadd.f32 %v63, %v166
  %v168 = vpop.f32.mrb[0].mxu0
  %169 = vmatprep.mubr.f32.mxu0 0.0
  %170 = vmatmul.mubr.f32.gmra.mrb[0].mxu0 %v77
  %v171 = vpop.f32.mrb[0].mxu0
  %v172 = vadd.f32 %v64, %v171
  %v173 = vpop.f32.mrb[0].mxu0
  %174 = vmatprep.mubr.f32.mxu0 0.0
  %175 = vmatmul.mubr.f32.gmra.mrb[0].mxu0 %v80
  %v176 = vpop.f32.mrb[0].mxu0
  %v177 = vadd.f32 %v65, %v176
  %v178 = vpop.f32.mrb[0].mxu0
  %179 = vmatprep.mubr.f32.mxu0 0.0
  %180 = vmatmul.mubr.f32.gmra.mrb[0].mxu0 %v83
  %v181 = vpop.f32.mrb[0].mxu0
  %v182 = vadd.f32 %v66, %v181
  %v183 = vpop.f32.mrb[0].mxu0
  %184 = vmatprep.mubr.f32.mxu0 0.0
  %185 = vmatmul.mubr.f32.gmra.mrb[0].mxu0 %v86
  %v186 = vpop.f32.mrb[0].mxu0
  %v187 = vadd.f32 %v67, %v186
  %v188 = vpop.f32.mrb[0].mxu0
  %189 = vmatprep.mubr.f32.mxu0 0.0
  %190 = vmatmul.mubr.f32.gmra.mrb[0].mxu0 %v89
  %v191 = vpop.f32.mrb[0].mxu0
  %v192 = vadd.f32 %v68, %v191
  %v193 = vpop.f32.mrb[0].mxu0
  %194 = vmatprep.mubr.f32.mxu0 0.0
  %195 = vmatmul.mubr.f32.gmra.mrb[0].mxu0 %v92
  %v196 = vpop.f32.mrb[0].mxu0
  %v197 = vadd.f32 %v69, %v196
  %v198 = vpop.f32.mrb[0].mxu0
  %199 = vmatprep.mubr.f32.mxu0 0.0
  %200 = vmatmul.mubr.f32.gmra.mrb[0].mxu0 %v95
  %v201 = vpop.f32.mrb[0].mxu0
  %v202 = vadd.f32 %v70, %v201
  %v203 = vpop.f32.mrb[0].mxu0
  %204 = vmatprep.mubr.f32.mxu0 0.0
  %205 = vmatmul.mubr.f32.gmra.mrb[0].mxu0 %v98
  %v206 = vpop.f32.mrb[0].mxu0
  %v207 = vadd.f32 %v71, %v206
  %v208 = vpop.f32.mrb[0].mxu0
  %209 = vdwg.mxu0
  %v210 = vld [vmem:[%s1 + $0x58] sm:$0x1]
  %v211 = vlaneseq
  %v212 = vshrl.u32 %v211, 7
  %v213 = vsub.s32 0, %v212
  %v214 = vrot.slane %v210, %v213
  %v215 = vld [vmem:[%s2] sm:$0xff]
  %v216 = vld [vmem:[%s2 + $0x8] sm:$0xff]
  %v217 = vld [vmem:[%s2 + $0x10] sm:$0xff]
  %v218 = vld [vmem:[%s2 + $0x18] sm:$0xff]
  %v219 = vld [vmem:[%s2 + $0x60] sm:$0x1]
  %v220 = vlaneseq
  %v221 = vshrl.u32 %v220, 7
  %v222 = vsub.s32 0, %v221
  %v223 = vrot.slane %v219, %v222
  %vm224 = vcmask 261120
  %v226 = vsel %vm224, %v167, 0
  %v229 = vsel %vm224, %v172, 0
  %v232 = vsel %vm224, %v177, 0
  %v235 = vsel %vm224, %v182, 0
  %v238 = vsel %vm224, %v187, 0
  %v241 = vsel %vm224, %v192, 0
  %v244 = vsel %vm224, %v197, 0
  %v247 = vsel %vm224, %v202, 0
  %249 = vmatprep.subr.mxu0 0.0
  %250 = vmatpush1.msra.mxu0 %v215
  %251 = vmatprep.subr.mxu0 0.0
  %252 = vmatpush1.msra.mxu0 %v216
  %253 = vmatprep.subr.mxu0 0.0
  %254 = vmatpush1.msra.mxu0 %v217
  %255 = vmatprep.subr.mxu0 0.0
  %256 = vmatpush1.msra.mxu0 %v218
  %257 = vmatprep.subr.mxu0 0.0
  %258 = vmatpush1.msra.mxu0 0.0
  %259 = vmatprep.subr.mxu0 0.0
  %260 = vmatpush1.msra.mxu0 0.0
  %261 = vmatprep.subr.mxu0 0.0
  %262 = vmatpush1.msra.mxu0 0.0
  %263 = vmatprep.subr.mxu0 0.0
  %264 = vmatpush1.msra.mxu0 0.0
  %265 = vmatprep.subr.mxu0 0.0
  %266 = vmatpush1.msra.mxu0 0.0
  %267 = vmatprep.subr.mxu0 0.0
  %268 = vmatpush1.msra.mxu0 0.0
  %269 = vmatprep.subr.mxu0 0.0
  %270 = vmatpush1.msra.mxu0 0.0
  %271 = vmatprep.subr.mxu0 0.0
  %272 = vmatpush1.msra.mxu0 0.0
  %273 = vmatprep.subr.mxu0 0.0
  %274 = vmatpush1.msra.mxu0 0.0
  %275 = vmatprep.subr.mxu0 0.0
  %276 = vmatpush1.msra.mxu0 0.0
  %277 = vmatprep.subr.mxu0 0.0
  %278 = vmatpush1.msra.mxu0 0.0
  %279 = vmatprep.subr.mxu0 0.0
  %280 = vmatpush1.msra.mxu0 0.0
  %281 = vmatprep.subr.mxu0 0.0
  %282 = vmatpush1.msra.mxu0 0.0
  %283 = vmatprep.subr.mxu0 0.0
  %284 = vmatpush1.msra.mxu0 0.0
  %285 = vmatprep.subr.mxu0 0.0
  %286 = vmatpush1.msra.mxu0 0.0
  %287 = vmatprep.subr.mxu0 0.0
  %288 = vmatpush1.msra.mxu0 0.0
  %289 = vmatprep.subr.mxu0 0.0
  %290 = vmatpush1.msra.mxu0 0.0
  %291 = vmatprep.subr.mxu0 0.0
  %292 = vmatpush1.msra.mxu0 0.0
  %293 = vmatprep.subr.mxu0 0.0
  %294 = vmatpush1.msra.mxu0 0.0
  %295 = vmatprep.subr.mxu0 0.0
  %296 = vmatpush1.msra.mxu0 0.0
  %297 = vmatprep.subr.mxu0 0.0
  %298 = vmatpush1.msra.mxu0 0.0
  %299 = vmatprep.subr.mxu0 0.0
  %300 = vmatpush1.msra.mxu0 0.0
  %301 = vmatprep.subr.mxu0 0.0
  %302 = vmatpush1.msra.mxu0 0.0
  %303 = vmatprep.subr.mxu0 0.0
  %304 = vmatpush1.msra.mxu0 0.0
  %305 = vmatprep.subr.mxu0 0.0
  %306 = vmatpush1.msra.mxu0 0.0
  %307 = vmatprep.subr.mxu0 0.0
  %308 = vmatpush1.msra.mxu0 0.0
  %309 = vmatprep.subr.mxu0 0.0
  %310 = vmatpush1.msra.mxu0 0.0
  %311 = vmatprep.subr.mxu0 0.0
  %312 = vmatpush1.msra.mxu0 0.0
  %313 = vmatprep.mubr.f32.mxu0 0.0
  %314 = vmatmul.mubr.f32.gmra.mrb[0].mxu0 %v226
  %v315 = vpop.f32.mrb[0].mxu0
  %v316 = vadd.f32 %v223, %v315
  %v317 = vpop.f32.mrb[0].mxu0
  %318 = vmatprep.mubr.f32.mxu0 0.0
  %319 = vmatmul.mubr.f32.gmra.mrb[0].mxu0 %v229
  %v320 = vpop.f32.mrb[0].mxu0
  %v321 = vadd.f32 %v223, %v320
  %v322 = vpop.f32.mrb[0].mxu0
  %323 = vmatprep.mubr.f32.mxu0 0.0
  %324 = vmatmul.mubr.f32.gmra.mrb[0].mxu0 %v232
  %v325 = vpop.f32.mrb[0].mxu0
  %v326 = vadd.f32 %v223, %v325
  %v327 = vpop.f32.mrb[0].mxu0
  %328 = vmatprep.mubr.f32.mxu0 0.0
  %329 = vmatmul.mubr.f32.gmra.mrb[0].mxu0 %v235
  %v330 = vpop.f32.mrb[0].mxu0
  %v331 = vadd.f32 %v223, %v330
  %v332 = vpop.f32.mrb[0].mxu0
  %333 = vmatprep.mubr.f32.mxu0 0.0
  %334 = vmatmul.mubr.f32.gmra.mrb[0].mxu0 %v238
  %v335 = vpop.f32.mrb[0].mxu0
  %v336 = vadd.f32 %v223, %v335
  %v337 = vpop.f32.mrb[0].mxu0
  %338 = vmatprep.mubr.f32.mxu0 0.0
  %339 = vmatmul.mubr.f32.gmra.mrb[0].mxu0 %v241
  %v340 = vpop.f32.mrb[0].mxu0
  %v341 = vadd.f32 %v223, %v340
  %v342 = vpop.f32.mrb[0].mxu0
  %343 = vmatprep.mubr.f32.mxu0 0.0
  %344 = vmatmul.mubr.f32.gmra.mrb[0].mxu0 %v244
  %v345 = vpop.f32.mrb[0].mxu0
  %v346 = vadd.f32 %v223, %v345
  %v347 = vpop.f32.mrb[0].mxu0
  %348 = vmatprep.mubr.f32.mxu0 0.0
  %349 = vmatmul.mubr.f32.gmra.mrb[0].mxu0 %v247
  %v350 = vpop.f32.mrb[0].mxu0
  %v351 = vadd.f32 %v223, %v350
  %v352 = vpop.f32.mrb[0].mxu0
  %353 = vdwg.mxu0
  %v354 = vld [vmem:[%s2 + $0x20] sm:$0xff]
  %v355 = vld [vmem:[%s2 + $0x28] sm:$0xff]
  %v356 = vld [vmem:[%s2 + $0x30] sm:$0xff]
  %v357 = vld [vmem:[%s2 + $0x38] sm:$0xff]
  %v358 = vld [vmem:[%s2 + $0x61] sm:$0x1]
  %v359 = vld [vmem:[%s1 + $0x60] sm:$0xff]
  %v360 = vld [vmem:[%s1 + $0x68] sm:$0xff]
  %v361 = vld [vmem:[%s1 + $0x70] sm:$0xff]
  %v362 = vld [vmem:[%s1 + $0x78] sm:$0xff]
  %v363 = vld [vmem:[%s1 + $0x100] sm:$0x1]
  %v364 = vlaneseq
  %v365 = vshrl.u32 %v364, 7
  %v366 = vsub.s32 0, %v365
  %v367 = vrot.slane %v363, %v366
  %v369 = vsel %vm224, %v214, 0
  %371 = vmatprep.subr.mxu0 0.0
  %372 = vmatpush1.msra.mxu0 %v359
  %373 = vmatprep.subr.mxu0 0.0
  %374 = vmatpush1.msra.mxu0 %v360
  %375 = vmatprep.subr.mxu0 0.0
  %376 = vmatpush1.msra.mxu0 %v361
  %377 = vmatprep.subr.mxu0 0.0
  %378 = vmatpush1.msra.mxu0 %v362
  %379 = vmatprep.subr.mxu0 0.0
  %380 = vmatpush1.msra.mxu0 0.0
  %381 = vmatprep.subr.mxu0 0.0
  %382 = vmatpush1.msra.mxu0 0.0
  %383 = vmatprep.subr.mxu0 0.0
  %384 = vmatpush1.msra.mxu0 0.0
  %385 = vmatprep.subr.mxu0 0.0
  %386 = vmatpush1.msra.mxu0 0.0
  %387 = vmatprep.subr.mxu0 0.0
  %388 = vmatpush1.msra.mxu0 0.0
  %389 = vmatprep.subr.mxu0 0.0
  %390 = vmatpush1.msra.mxu0 0.0
  %391 = vmatprep.subr.mxu0 0.0
  %392 = vmatpush1.msra.mxu0 0.0
  %393 = vmatprep.subr.mxu0 0.0
  %394 = vmatpush1.msra.mxu0 0.0
  %395 = vmatprep.subr.mxu0 0.0
  %396 = vmatpush1.msra.mxu0 0.0
  %397 = vmatprep.subr.mxu0 0.0
  %398 = vmatpush1.msra.mxu0 0.0
  %399 = vmatprep.subr.mxu0 0.0
  %400 = vmatpush1.msra.mxu0 0.0
  %401 = vmatprep.subr.mxu0 0.0
  %402 = vmatpush1.msra.mxu0 0.0
  %403 = vmatprep.subr.mxu0 0.0
  %404 = vmatpush1.msra.mxu0 0.0
  %405 = vmatprep.subr.mxu0 0.0
  %406 = vmatpush1.msra.mxu0 0.0
  %407 = vmatprep.subr.mxu0 0.0
  %408 = vmatpush1.msra.mxu0 0.0
  %409 = vmatprep.subr.mxu0 0.0
  %410 = vmatpush1.msra.mxu0 0.0
  %411 = vmatprep.subr.mxu0 0.0
  %412 = vmatpush1.msra.mxu0 0.0
  %413 = vmatprep.subr.mxu0 0.0
  %414 = vmatpush1.msra.mxu0 0.0
  %415 = vmatprep.subr.mxu0 0.0
  %416 = vmatpush1.msra.mxu0 0.0
  %417 = vmatprep.subr.mxu0 0.0
  %418 = vmatpush1.msra.mxu0 0.0
  %419 = vmatprep.subr.mxu0 0.0
  %420 = vmatpush1.msra.mxu0 0.0
  %421 = vmatprep.subr.mxu0 0.0
  %422 = vmatpush1.msra.mxu0 0.0
  %423 = vmatprep.subr.mxu0 0.0
  %424 = vmatpush1.msra.mxu0 0.0
  %425 = vmatprep.subr.mxu0 0.0
  %426 = vmatpush1.msra.mxu0 0.0
  %427 = vmatprep.subr.mxu0 0.0
  %428 = vmatpush1.msra.mxu0 0.0
  %429 = vmatprep.subr.mxu0 0.0
  %430 = vmatpush1.msra.mxu0 0.0
  %431 = vmatprep.subr.mxu0 0.0
  %432 = vmatpush1.msra.mxu0 0.0
  %433 = vmatprep.subr.mxu0 0.0
  %434 = vmatpush1.msra.mxu0 0.0
  %435 = vmatprep.mubr.f32.mxu0 0.0
  %436 = vmatmul.mubr.f32.gmra.mrb[0].mxu0 %v369
  %v437 = vpop.f32.mrb[0].mxu0
  %v438 = vadd.f32 %v367, %v437
  %v439 = vpop.f32.mrb[0].mxu0
  %440 = vdwg.mxu0
  %v441 = vadd.f32 %v214, %v438
  %v442 = vld [vmem:[%s1 + $0x104] sm:$0x1]
  %v443 = vld [vmem:[%s1 + $0x105] sm:$0x1]
  %v444 = vsel %vm224, %v441, 0.0
  %445 = vadd.xlane.f32.xlu0 %v444
  %v446 = vpop.xlane.xlu0 %445
  %v447 = vrcp.pop 32.0
  %v448 = vmul.f32 %v446, %v447
  %v449 = vmul.f32 %v441, %v441
  %v450 = vsel %vm224, %v449, 0.0
  %451 = vadd.xlane.f32.xlu0 %v450
  %v452 = vpop.xlane.xlu0 %451
  %v453 = vmul.f32 %v452, %v447
  %v454 = vmul.f32 %v448, %v448
  %v455 = vsub.f32 %v453, %v454
  %v456 = vsub.f32 %v441, %v448
  %v457 = vadd.f32 %v455, 1e-05
  %v458 = vrsqrt.pop %v457
  %v459 = vmul.f32 %v456, %v458
  %v460 = vlaneseq
  %v461 = vshrl.u32 %v460, 7
  %v462 = vsub.s32 0, %v461
  %v463 = vrot.slane %v442, %v462
  %v464 = vmul.f32 %v459, %v463
  %v465 = vlaneseq
  %v466 = vshrl.u32 %v465, 7
  %v467 = vsub.s32 0, %v466
  %v468 = vrot.slane %v443, %v467
  %v469 = vadd.f32 %v464, %v468
  %v470 = vld [vmem:[%s1 + $0x80] sm:$0xff]
  %v471 = vld [vmem:[%s1 + $0x88] sm:$0xff]
  %v472 = vld [vmem:[%s1 + $0x90] sm:$0xff]
  %v473 = vld [vmem:[%s1 + $0x98] sm:$0xff]
  %v474 = vld [vmem:[%s1 + $0x101] sm:$0x1]
  %v475 = vlaneseq
  %v476 = vshrl.u32 %v475, 7
  %v477 = vsub.s32 0, %v476
  %v478 = vrot.slane %v474, %v477
  %v480 = vsel %vm224, %v469, 0
  %482 = vmatprep.subr.mxu0 0.0
  %483 = vmatpush1.msra.mxu0 %v470
  %484 = vmatprep.subr.mxu0 0.0
  %485 = vmatpush1.msra.mxu0 %v471
  %486 = vmatprep.subr.mxu0 0.0
  %487 = vmatpush1.msra.mxu0 %v472
  %488 = vmatprep.subr.mxu0 0.0
  %489 = vmatpush1.msra.mxu0 %v473
  %490 = vmatprep.subr.mxu0 0.0
  %491 = vmatpush1.msra.mxu0 0.0
  %492 = vmatprep.subr.mxu0 0.0
  %493 = vmatpush1.msra.mxu0 0.0
  %494 = vmatprep.subr.mxu0 0.0
  %495 = vmatpush1.msra.mxu0 0.0
  %496 = vmatprep.subr.mxu0 0.0
  %497 = vmatpush1.msra.mxu0 0.0
  %498 = vmatprep.subr.mxu0 0.0
  %499 = vmatpush1.msra.mxu0 0.0
  %500 = vmatprep.subr.mxu0 0.0
  %501 = vmatpush1.msra.mxu0 0.0
  %502 = vmatprep.subr.mxu0 0.0
  %503 = vmatpush1.msra.mxu0 0.0
  %504 = vmatprep.subr.mxu0 0.0
  %505 = vmatpush1.msra.mxu0 0.0
  %506 = vmatprep.subr.mxu0 0.0
  %507 = vmatpush1.msra.mxu0 0.0
  %508 = vmatprep.subr.mxu0 0.0
  %509 = vmatpush1.msra.mxu0 0.0
  %510 = vmatprep.subr.mxu0 0.0
  %511 = vmatpush1.msra.mxu0 0.0
  %512 = vmatprep.subr.mxu0 0.0
  %513 = vmatpush1.msra.mxu0 0.0
  %514 = vmatprep.subr.mxu0 0.0
  %515 = vmatpush1.msra.mxu0 0.0
  %516 = vmatprep.subr.mxu0 0.0
  %517 = vmatpush1.msra.mxu0 0.0
  %518 = vmatprep.subr.mxu0 0.0
  %519 = vmatpush1.msra.mxu0 0.0
  %520 = vmatprep.subr.mxu0 0.0
  %521 = vmatpush1.msra.mxu0 0.0
  %522 = vmatprep.subr.mxu0 0.0
  %523 = vmatpush1.msra.mxu0 0.0
  %524 = vmatprep.subr.mxu0 0.0
  %525 = vmatpush1.msra.mxu0 0.0
  %526 = vmatprep.subr.mxu0 0.0
  %527 = vmatpush1.msra.mxu0 0.0
  %528 = vmatprep.subr.mxu0 0.0
  %529 = vmatpush1.msra.mxu0 0.0
  %530 = vmatprep.subr.mxu0 0.0
  %531 = vmatpush1.msra.mxu0 0.0
  %532 = vmatprep.subr.mxu0 0.0
  %533 = vmatpush1.msra.mxu0 0.0
  %534 = vmatprep.subr.mxu0 0.0
  %535 = vmatpush1.msra.mxu0 0.0
  %536 = vmatprep.subr.mxu0 0.0
  %537 = vmatpush1.msra.mxu0 0.0
  %538 = vmatprep.subr.mxu0 0.0
  %539 = vmatpush1.msra.mxu0 0.0
  %540 = vmatprep.subr.mxu0 0.0
  %541 = vmatpush1.msra.mxu0 0.0
  %542 = vmatprep.subr.mxu0 0.0
  %543 = vmatpush1.msra.mxu0 0.0
  %544 = vmatprep.subr.mxu0 0.0
  %545 = vmatpush1.msra.mxu0 0.0
  %546 = vmatprep.mubr.f32.mxu0 0.0
  %547 = vmatmul.mubr.f32.gmra.mrb[0].mxu0 %v480
  %v548 = vpop.f32.mrb[0].mxu0
  %v549 = vadd.f32 %v478, %v548
  %v550 = vpop.f32.mrb[0].mxu0
  %551 = vdwg.mxu0
  %v553 = vcombine.high %v549, %v549
  %v555 = vunpack.c.l.s4 1966171168
  %v556 = vunpack.c.0.s8 %v555
  %v557 = vlaneseq
  %v558 = vshrl.u32 %v557, 7
  %v559 = vsub.s32 %v556, %v558
  %v560 = vrot.slane %v549, %v559
  %v562 = vunpack.c.l.s4 1966171168
  %v563 = vunpack.c.0.s8 %v562
  %v564 = vlaneseq
  %v565 = vshrl.u32 %v564, 7
  %v566 = vsub.s32 %v563, %v565
  %v567 = vrot.slane %v553, %v566
  %v568 = vcombine.high %v560, %v560
  %v569 = vcombine.high %v567, %v567
  %v571 = vunpack.c.l.s4 1966171168
  %v572 = vunpack.c.0.s8 %v571
  %v573 = vlaneseq
  %v574 = vshrl.u32 %v573, 7
  %v575 = vsub.s32 %v572, %v574
  %v576 = vrot.slane %v560, %v575
  %v578 = vunpack.c.l.s4 1966171168
  %v579 = vunpack.c.0.s8 %v578
  %v580 = vlaneseq
  %v581 = vshrl.u32 %v580, 7
  %v582 = vsub.s32 %v579, %v581
  %v583 = vrot.slane %v567, %v582
  %v585 = vunpack.c.l.s4 1966171168
  %v586 = vunpack.c.0.s8 %v585
  %v587 = vlaneseq
  %v588 = vshrl.u32 %v587, 7
  %v589 = vsub.s32 %v586, %v588
  %v590 = vrot.slane %v568, %v589
  %v592 = vunpack.c.l.s4 1966171168
  %v593 = vunpack.c.0.s8 %v592
  %v594 = vlaneseq
  %v595 = vshrl.u32 %v594, 7
  %v596 = vsub.s32 %v593, %v595
  %v597 = vrot.slane %v569, %v596
  %v598 = vcombine.high %v576, %v576
  %v599 = vcombine.high %v583, %v583
  %v600 = vcombine.high %v590, %v590
  %v601 = vcombine.high %v597, %v597
  %v602 = vlaneseq
  %v603 = vshrl.u32 %v602, 7
  %v604 = vsub.s32 0, %v603
  %v605 = vrot.slane %v576, %v604
  %v606 = vlaneseq
  %v607 = vshrl.u32 %v606, 7
  %v608 = vsub.s32 0, %v607
  %v609 = vrot.slane %v590, %v608
  %v610 = vlaneseq
  %v611 = vshrl.u32 %v610, 7
  %v612 = vsub.s32 0, %v611
  %v613 = vrot.slane %v598, %v612
  %v614 = vlaneseq
  %v615 = vshrl.u32 %v614, 7
  %v616 = vsub.s32 0, %v615
  %v617 = vrot.slane %v600, %v616
  %v618 = vlaneseq
  %v619 = vshrl.u32 %v618, 7
  %v620 = vsub.s32 0, %v619
  %v621 = vrot.slane %v583, %v620
  %v622 = vlaneseq
  %v623 = vshrl.u32 %v622, 7
  %v624 = vsub.s32 0, %v623
  %v625 = vrot.slane %v597, %v624
  %v626 = vlaneseq
  %v627 = vshrl.u32 %v626, 7
  %v628 = vsub.s32 0, %v627
  %v629 = vrot.slane %v599, %v628
  %v630 = vlaneseq
  %v631 = vshrl.u32 %v630, 7
  %v632 = vsub.s32 0, %v631
  %v633 = vrot.slane %v601, %v632
  %v642 = vmul.f32 %v316, %v605
  %v643 = vmul.f32 %v321, %v609
  %v644 = vmul.f32 %v326, %v613
  %v645 = vmul.f32 %v331, %v617
  %v646 = vmul.f32 %v336, %v621
  %v647 = vmul.f32 %v341, %v625
  %v648 = vmul.f32 %v346, %v629
  %v649 = vmul.f32 %v351, %v633
  %v651 = vsel %vm224, %v642, 0
  %v654 = vsel %vm224, %v643, 0
  %v657 = vsel %vm224, %v644, 0
  %v660 = vsel %vm224, %v645, 0
  %v663 = vsel %vm224, %v646, 0
  %v666 = vsel %vm224, %v647, 0
  %v669 = vsel %vm224, %v648, 0
  %v672 = vsel %vm224, %v649, 0
  %674 = vmatprep.subr.mxu0 0.0
  %675 = vmatpush1.msra.mxu0 %v40
  %676 = vmatprep.subr.mxu0 0.0
  %677 = vmatpush1.msra.mxu0 %v41
  %678 = vmatprep.subr.mxu0 0.0
  %679 = vmatpush1.msra.mxu0 %v42
  %680 = vmatprep.subr.mxu0 0.0
  %681 = vmatpush1.msra.mxu0 %v43
  %682 = vmatprep.subr.mxu0 0.0
  %683 = vmatpush1.msra.mxu0 0.0
  %684 = vmatprep.subr.mxu0 0.0
  %685 = vmatpush1.msra.mxu0 0.0
  %686 = vmatprep.subr.mxu0 0.0
  %687 = vmatpush1.msra.mxu0 0.0
  %688 = vmatprep.subr.mxu0 0.0
  %689 = vmatpush1.msra.mxu0 0.0
  %690 = vmatprep.subr.mxu0 0.0
  %691 = vmatpush1.msra.mxu0 0.0
  %692 = vmatprep.subr.mxu0 0.0
  %693 = vmatpush1.msra.mxu0 0.0
  %694 = vmatprep.subr.mxu0 0.0
  %695 = vmatpush1.msra.mxu0 0.0
  %696 = vmatprep.subr.mxu0 0.0
  %697 = vmatpush1.msra.mxu0 0.0
  %698 = vmatprep.subr.mxu0 0.0
  %699 = vmatpush1.msra.mxu0 0.0
  %700 = vmatprep.subr.mxu0 0.0
  %701 = vmatpush1.msra.mxu0 0.0
  %702 = vmatprep.subr.mxu0 0.0
  %703 = vmatpush1.msra.mxu0 0.0
  %704 = vmatprep.subr.mxu0 0.0
  %705 = vmatpush1.msra.mxu0 0.0
  %706 = vmatprep.subr.mxu0 0.0
  %707 = vmatpush1.msra.mxu0 0.0
  %708 = vmatprep.subr.mxu0 0.0
  %709 = vmatpush1.msra.mxu0 0.0
  %710 = vmatprep.subr.mxu0 0.0
  %711 = vmatpush1.msra.mxu0 0.0
  %712 = vmatprep.subr.mxu0 0.0
  %713 = vmatpush1.msra.mxu0 0.0
  %714 = vmatprep.subr.mxu0 0.0
  %715 = vmatpush1.msra.mxu0 0.0
  %716 = vmatprep.subr.mxu0 0.0
  %717 = vmatpush1.msra.mxu0 0.0
  %718 = vmatprep.subr.mxu0 0.0
  %719 = vmatpush1.msra.mxu0 0.0
  %720 = vmatprep.subr.mxu0 0.0
  %721 = vmatpush1.msra.mxu0 0.0
  %722 = vmatprep.subr.mxu0 0.0
  %723 = vmatpush1.msra.mxu0 0.0
  %724 = vmatprep.subr.mxu0 0.0
  %725 = vmatpush1.msra.mxu0 0.0
  %726 = vmatprep.subr.mxu0 0.0
  %727 = vmatpush1.msra.mxu0 0.0
  %728 = vmatprep.subr.mxu0 0.0
  %729 = vmatpush1.msra.mxu0 0.0
  %730 = vmatprep.subr.mxu0 0.0
  %731 = vmatpush1.msra.mxu0 0.0
  %732 = vmatprep.subr.mxu0 0.0
  %733 = vmatpush1.msra.mxu0 0.0
  %734 = vmatprep.subr.mxu0 0.0
  %735 = vmatpush1.msra.mxu0 0.0
  %736 = vmatprep.subr.mxu0 0.0
  %737 = vmatpush1.msra.mxu0 0.0
  %738 = vmatprep.mubr.f32.mxu0 0.0
  %739 = vmatmul.mubr.f32.gmra.mrb[0].mxu0 %v651
  %v740 = vpop.f32.mrb[0].mxu0
  %v741 = vadd.f32 0.0, %v740
  %v742 = vpop.f32.mrb[0].mxu0
  %743 = vmatprep.mubr.f32.mxu0 0.0
  %744 = vmatmul.mubr.f32.gmra.mrb[0].mxu0 %v654
  %v745 = vpop.f32.mrb[0].mxu0
  %v746 = vadd.f32 0.0, %v745
  %v747 = vpop.f32.mrb[0].mxu0
  %748 = vmatprep.mubr.f32.mxu0 0.0
  %749 = vmatmul.mubr.f32.gmra.mrb[0].mxu0 %v657
  %v750 = vpop.f32.mrb[0].mxu0
  %v751 = vadd.f32 0.0, %v750
  %v752 = vpop.f32.mrb[0].mxu0
  %753 = vmatprep.mubr.f32.mxu0 0.0
  %754 = vmatmul.mubr.f32.gmra.mrb[0].mxu0 %v660
  %v755 = vpop.f32.mrb[0].mxu0
  %v756 = vadd.f32 0.0, %v755
  %v757 = vpop.f32.mrb[0].mxu0
  %758 = vmatprep.mubr.f32.mxu0 0.0
  %759 = vmatmul.mubr.f32.gmra.mrb[0].mxu0 %v663
  %v760 = vpop.f32.mrb[0].mxu0
  %v761 = vadd.f32 0.0, %v760
  %v762 = vpop.f32.mrb[0].mxu0
  %763 = vmatprep.mubr.f32.mxu0 0.0
  %764 = vmatmul.mubr.f32.gmra.mrb[0].mxu0 %v666
  %v765 = vpop.f32.mrb[0].mxu0
  %v766 = vadd.f32 0.0, %v765
  %v767 = vpop.f32.mrb[0].mxu0
  %768 = vmatprep.mubr.f32.mxu0 0.0
  %769 = vmatmul.mubr.f32.gmra.mrb[0].mxu0 %v669
  %v770 = vpop.f32.mrb[0].mxu0
  %v771 = vadd.f32 0.0, %v770
  %v772 = vpop.f32.mrb[0].mxu0
  %773 = vmatprep.mubr.f32.mxu0 0.0
  %774 = vmatmul.mubr.f32.gmra.mrb[0].mxu0 %v672
  %v775 = vpop.f32.mrb[0].mxu0
  %v776 = vadd.f32 0.0, %v775
  %v777 = vpop.f32.mrb[0].mxu0
  %778 = vdwg.mxu0
  %vm779 = vcmask 31744
  %v780 = vsel %vm779, %v741, -inf
  %v781 = vsel %vm779, %v746, -inf
  %v782 = vsel %vm779, %v751, -inf
  %v783 = vsel %vm779, %v756, -inf
  %v784 = vsel %vm779, %v761, -inf
  %v785 = vmax.f32 %v780, %v784
  %v786 = vsel %vm779, %v766, -inf
  %v787 = vmax.f32 %v781, %v786
  %v788 = vsel %vm779, %v771, -inf
  %v789 = vmax.f32 %v782, %v788
  %v790 = vsel %vm779, %v776, -inf
  %v791 = vmax.f32 %v783, %v790
  %v792 = vmax.f32 %v785, %v787
  %v793 = vmax.f32 %v789, %v791
  %v794 = vmax.f32 %v792, %v793
  %v795 = vrot.slane %v794, 4
  %v796 = vmax.f32 %v794, %v795
  %v797 = vrot.slane %v796, 2
  %v798 = vmax.f32 %v796, %v797
  %v799 = vrot.slane %v798, 1
  %v800 = vmax.f32 %v798, %v799
  %v801 = vsub.f32 %v741, %v800
  %v802 = vsub.f32 %v746, %v800
  %v803 = vsub.f32 %v751, %v800
  %v804 = vsub.f32 %v756, %v800
  %v805 = vsub.f32 %v761, %v800
  %v806 = vsub.f32 %v766, %v800
  %v807 = vsub.f32 %v771, %v800
  %v808 = vsub.f32 %v776, %v800
  %v809 = vmul.f32 %v801, 1.442695
  %v810 = vpow.pop %v809
  %v811 = vmul.f32 %v802, 1.442695
  %v812 = vpow.pop %v811
  %v813 = vmul.f32 %v803, 1.442695
  %v814 = vpow.pop %v813
  %v815 = vmul.f32 %v804, 1.442695
  %v816 = vpow.pop %v815
  %v817 = vmul.f32 %v805, 1.442695
  %v818 = vpow.pop %v817
  %v819 = vmul.f32 %v806, 1.442695
  %v820 = vpow.pop %v819
  %v821 = vmul.f32 %v807, 1.442695
  %v822 = vpow.pop %v821
  %v823 = vmul.f32 %v808, 1.442695
  %v824 = vpow.pop %v823
  %v826 = vsel %vm779, %v810, 0
  %v829 = vsel %vm779, %v812, 0
  %v832 = vsel %vm779, %v814, 0
  %v835 = vsel %vm779, %v816, 0
  %v838 = vsel %vm779, %v818, 0
  %v841 = vsel %vm779, %v820, 0
  %v844 = vsel %vm779, %v822, 0
  %v847 = vsel %vm779, %v824, 0
  %vm849 = vcmask 1043456
  %v851 = vsel %vm849, %v51, 0
  %853 = vmatprep.subr.mxu0 0.0
  %854 = vmatpush1.msra.mxu0 %v851
  %855 = vmatprep.subr.mxu0 0.0
  %856 = vmatpush1.msra.mxu0 0.0
  %857 = vmatprep.subr.mxu0 0.0
  %858 = vmatpush1.msra.mxu0 0.0
  %859 = vmatprep.subr.mxu0 0.0
  %860 = vmatpush1.msra.mxu0 0.0
  %861 = vmatprep.subr.mxu0 0.0
  %862 = vmatpush1.msra.mxu0 0.0
  %863 = vmatprep.subr.mxu0 0.0
  %864 = vmatpush1.msra.mxu0 0.0
  %865 = vmatprep.subr.mxu0 0.0
  %866 = vmatpush1.msra.mxu0 0.0
  %867 = vmatprep.subr.mxu0 0.0
  %868 = vmatpush1.msra.mxu0 0.0
  %869 = vmatprep.subr.mxu0 0.0
  %870 = vmatpush1.msra.mxu0 0.0
  %871 = vmatprep.subr.mxu0 0.0
  %872 = vmatpush1.msra.mxu0 0.0
  %873 = vmatprep.subr.mxu0 0.0
  %874 = vmatpush1.msra.mxu0 0.0
  %875 = vmatprep.subr.mxu0 0.0
  %876 = vmatpush1.msra.mxu0 0.0
  %877 = vmatprep.subr.mxu0 0.0
  %878 = vmatpush1.msra.mxu0 0.0
  %879 = vmatprep.subr.mxu0 0.0
  %880 = vmatpush1.msra.mxu0 0.0
  %881 = vmatprep.subr.mxu0 0.0
  %882 = vmatpush1.msra.mxu0 0.0
  %883 = vmatprep.subr.mxu0 0.0
  %884 = vmatpush1.msra.mxu0 0.0
  %885 = vmatprep.subr.mxu0 0.0
  %886 = vmatpush1.msra.mxu0 0.0
  %887 = vmatprep.subr.mxu0 0.0
  %888 = vmatpush1.msra.mxu0 0.0
  %889 = vmatprep.subr.mxu0 0.0
  %890 = vmatpush1.msra.mxu0 0.0
  %891 = vmatprep.subr.mxu0 0.0
  %892 = vmatpush1.msra.mxu0 0.0
  %893 = vmatprep.subr.mxu0 0.0
  %894 = vmatpush1.msra.mxu0 0.0
  %895 = vmatprep.subr.mxu0 0.0
  %896 = vmatpush1.msra.mxu0 0.0
  %897 = vmatprep.subr.mxu0 0.0
  %898 = vmatpush1.msra.mxu0 0.0
  %899 = vmatprep.subr.mxu0 0.0
  %900 = vmatpush1.msra.mxu0 0.0
  %901 = vmatprep.subr.mxu0 0.0
  %902 = vmatpush1.msra.mxu0 0.0
  %903 = vmatprep.subr.mxu0 0.0
  %904 = vmatpush1.msra.mxu0 0.0
  %905 = vmatprep.subr.mxu0 0.0
  %906 = vmatpush1.msra.mxu0 0.0
  %907 = vmatprep.subr.mxu0 0.0
  %908 = vmatpush1.msra.mxu0 0.0
  %909 = vmatprep.subr.mxu0 0.0
  %910 = vmatpush1.msra.mxu0 0.0
  %911 = vmatprep.subr.mxu0 0.0
  %912 = vmatpush1.msra.mxu0 0.0
  %913 = vmatprep.subr.mxu0 0.0
  %914 = vmatpush1.msra.mxu0 0.0
  %915 = vmatprep.subr.mxu0 0.0
  %916 = vmatpush1.msra.mxu0 0.0
  %917 = vmatprep.mubr.f32.mxu0 0.0
  %918 = vmatmul.mubr.f32.gmra.mrb[0].mxu0 %v826
  %v919 = vpop.f32.mrb[0].mxu0
  %v920 = vadd.f32 0.0, %v919
  %v921 = vpop.f32.mrb[0].mxu0
  %922 = vmatprep.mubr.f32.mxu0 0.0
  %923 = vmatmul.mubr.f32.gmra.mrb[0].mxu0 %v829
  %v924 = vpop.f32.mrb[0].mxu0
  %v925 = vadd.f32 0.0, %v924
  %v926 = vpop.f32.mrb[0].mxu0
  %927 = vmatprep.mubr.f32.mxu0 0.0
  %928 = vmatmul.mubr.f32.gmra.mrb[0].mxu0 %v832
  %v929 = vpop.f32.mrb[0].mxu0
  %v930 = vadd.f32 0.0, %v929
  %v931 = vpop.f32.mrb[0].mxu0
  %932 = vmatprep.mubr.f32.mxu0 0.0
  %933 = vmatmul.mubr.f32.gmra.mrb[0].mxu0 %v835
  %v934 = vpop.f32.mrb[0].mxu0
  %v935 = vadd.f32 0.0, %v934
  %v936 = vpop.f32.mrb[0].mxu0
  %937 = vmatprep.mubr.f32.mxu0 0.0
  %938 = vmatmul.mubr.f32.gmra.mrb[0].mxu0 %v838
  %v939 = vpop.f32.mrb[0].mxu0
  %v940 = vadd.f32 0.0, %v939
  %v941 = vpop.f32.mrb[0].mxu0
  %942 = vmatprep.mubr.f32.mxu0 0.0
  %943 = vmatmul.mubr.f32.gmra.mrb[0].mxu0 %v841
  %v944 = vpop.f32.mrb[0].mxu0
  %v945 = vadd.f32 0.0, %v944
  %v946 = vpop.f32.mrb[0].mxu0
  %947 = vmatprep.mubr.f32.mxu0 0.0
  %948 = vmatmul.mubr.f32.gmra.mrb[0].mxu0 %v844
  %v949 = vpop.f32.mrb[0].mxu0
  %v950 = vadd.f32 0.0, %v949
  %v951 = vpop.f32.mrb[0].mxu0
  %952 = vmatprep.mubr.f32.mxu0 0.0
  %953 = vmatmul.mubr.f32.gmra.mrb[0].mxu0 %v847
  %v954 = vpop.f32.mrb[0].mxu0
  %v955 = vadd.f32 0.0, %v954
  %v956 = vpop.f32.mrb[0].mxu0
  %957 = vdwg.mxu0
  %966 = vrot.lane.b32.xlu0 %v316, 96
  %v967 = vpop.permute.xlu0 %966
  %968 = vrot.lane.b32.xlu0 %v321, 96
  %v969 = vpop.permute.xlu0 %968
  %970 = vrot.lane.b32.xlu0 %v326, 96
  %v971 = vpop.permute.xlu0 %970
  %972 = vrot.lane.b32.xlu0 %v331, 96
  %v973 = vpop.permute.xlu0 %972
  %974 = vrot.lane.b32.xlu0 %v336, 96
  %v975 = vpop.permute.xlu0 %974
  %976 = vrot.lane.b32.xlu0 %v341, 96
  %v977 = vpop.permute.xlu0 %976
  %978 = vrot.lane.b32.xlu0 %v346, 96
  %v979 = vpop.permute.xlu0 %978
  %980 = vrot.lane.b32.xlu0 %v351, 96
  %v981 = vpop.permute.xlu0 %980
  %v990 = vmul.f32 %v920, %v967
  %v991 = vmul.f32 %v925, %v969
  %v992 = vmul.f32 %v930, %v971
  %v993 = vmul.f32 %v935, %v973
  %v994 = vmul.f32 %v940, %v975
  %v995 = vmul.f32 %v945, %v977
  %v996 = vmul.f32 %v950, %v979
  %v997 = vmul.f32 %v955, %v981
  %v998 = vsel %vm224, %v990, 0.0
  %v999 = vrot.slane %v998, 4
  %v1000 = vadd.f32 %v998, %v999
  %v1001 = vrot.slane %v1000, 2
  %v1002 = vadd.f32 %v1000, %v1001
  %v1003 = vrot.slane %v1002, 1
  %v1004 = vadd.f32 %v1002, %v1003
  %v1005 = vsel %vm224, %v991, 0.0
  %v1006 = vrot.slane %v1005, 4
  %v1007 = vadd.f32 %v1005, %v1006
  %v1008 = vrot.slane %v1007, 2
  %v1009 = vadd.f32 %v1007, %v1008
  %v1010 = vrot.slane %v1009, 1
  %v1011 = vadd.f32 %v1009, %v1010
  %v1012 = vsel %vm224, %v992, 0.0
  %v1013 = vrot.slane %v1012, 4
  %v1014 = vadd.f32 %v1012, %v1013
  %v1015 = vrot.slane %v1014, 2
  %v1016 = vadd.f32 %v1014, %v1015
  %v1017 = vrot.slane %v1016, 1
  %v1018 = vadd.f32 %v1016, %v1017
  %v1019 = vsel %vm224, %v993, 0.0
  %v1020 = vrot.slane %v1019, 4
  %v1021 = vadd.f32 %v1019, %v1020
  %v1022 = vrot.slane %v1021, 2
  %v1023 = vadd.f32 %v1021, %v1022
  %v1024 = vrot.slane %v1023, 1
  %v1025 = vadd.f32 %v1023, %v1024
  %v1026 = vsel %vm224, %v994, 0.0
  %v1027 = vrot.slane %v1026, 4
  %v1028 = vadd.f32 %v1026, %v1027
  %v1029 = vrot.slane %v1028, 2
  %v1030 = vadd.f32 %v1028, %v1029
  %v1031 = vrot.slane %v1030, 1
  %v1032 = vadd.f32 %v1030, %v1031
  %v1033 = vsel %vm224, %v995, 0.0
  %v1034 = vrot.slane %v1033, 4
  %v1035 = vadd.f32 %v1033, %v1034
  %v1036 = vrot.slane %v1035, 2
  %v1037 = vadd.f32 %v1035, %v1036
  %v1038 = vrot.slane %v1037, 1
  %v1039 = vadd.f32 %v1037, %v1038
  %v1040 = vsel %vm224, %v996, 0.0
  %v1041 = vrot.slane %v1040, 4
  %v1042 = vadd.f32 %v1040, %v1041
  %v1043 = vrot.slane %v1042, 2
  %v1044 = vadd.f32 %v1042, %v1043
  %v1045 = vrot.slane %v1044, 1
  %v1046 = vadd.f32 %v1044, %v1045
  %v1047 = vsel %vm224, %v997, 0.0
  %v1048 = vrot.slane %v1047, 4
  %v1049 = vadd.f32 %v1047, %v1048
  %v1050 = vrot.slane %v1049, 2
  %v1051 = vadd.f32 %v1049, %v1050
  %v1052 = vrot.slane %v1051, 1
  %v1053 = vadd.f32 %v1051, %v1052
  %v1054 = vsel %vm224, %v920, 0.0
  %v1055 = vrot.slane %v1054, 4
  %v1056 = vadd.f32 %v1054, %v1055
  %v1057 = vrot.slane %v1056, 2
  %v1058 = vadd.f32 %v1056, %v1057
  %v1059 = vrot.slane %v1058, 1
  %v1060 = vadd.f32 %v1058, %v1059
  %v1061 = vsel %vm224, %v925, 0.0
  %v1062 = vrot.slane %v1061, 4
  %v1063 = vadd.f32 %v1061, %v1062
  %v1064 = vrot.slane %v1063, 2
  %v1065 = vadd.f32 %v1063, %v1064
  %v1066 = vrot.slane %v1065, 1
  %v1067 = vadd.f32 %v1065, %v1066
  %v1068 = vsel %vm224, %v930, 0.0
  %v1069 = vrot.slane %v1068, 4
  %v1070 = vadd.f32 %v1068, %v1069
  %v1071 = vrot.slane %v1070, 2
  %v1072 = vadd.f32 %v1070, %v1071
  %v1073 = vrot.slane %v1072, 1
  %v1074 = vadd.f32 %v1072, %v1073
  %v1075 = vsel %vm224, %v935, 0.0
  %v1076 = vrot.slane %v1075, 4
  %v1077 = vadd.f32 %v1075, %v1076
  %v1078 = vrot.slane %v1077, 2
  %v1079 = vadd.f32 %v1077, %v1078
  %v1080 = vrot.slane %v1079, 1
  %v1081 = vadd.f32 %v1079, %v1080
  %v1082 = vsel %vm224, %v940, 0.0
  %v1083 = vrot.slane %v1082, 4
  %v1084 = vadd.f32 %v1082, %v1083
  %v1085 = vrot.slane %v1084, 2
  %v1086 = vadd.f32 %v1084, %v1085
  %v1087 = vrot.slane %v1086, 1
  %v1088 = vadd.f32 %v1086, %v1087
  %v1089 = vsel %vm224, %v945, 0.0
  %v1090 = vrot.slane %v1089, 4
  %v1091 = vadd.f32 %v1089, %v1090
  %v1092 = vrot.slane %v1091, 2
  %v1093 = vadd.f32 %v1091, %v1092
  %v1094 = vrot.slane %v1093, 1
  %v1095 = vadd.f32 %v1093, %v1094
  %v1096 = vsel %vm224, %v950, 0.0
  %v1097 = vrot.slane %v1096, 4
  %v1098 = vadd.f32 %v1096, %v1097
  %v1099 = vrot.slane %v1098, 2
  %v1100 = vadd.f32 %v1098, %v1099
  %v1101 = vrot.slane %v1100, 1
  %v1102 = vadd.f32 %v1100, %v1101
  %v1103 = vsel %vm224, %v955, 0.0
  %v1104 = vrot.slane %v1103, 4
  %v1105 = vadd.f32 %v1103, %v1104
  %v1106 = vrot.slane %v1105, 2
  %v1107 = vadd.f32 %v1105, %v1106
  %v1108 = vrot.slane %v1107, 1
  %v1109 = vadd.f32 %v1107, %v1108
  %v1110 = vrcp.pop %v1060
  %v1111 = vrcp.pop %v1067
  %v1112 = vrcp.pop %v1074
  %v1113 = vrcp.pop %v1081
  %v1114 = vrcp.pop %v1088
  %v1115 = vrcp.pop %v1095
  %v1116 = vrcp.pop %v1102
  %v1117 = vrcp.pop %v1109
  %v1118 = vmul.f32 %v1004, %v1110
  %v1119 = vmul.f32 %v1011, %v1111
  %v1120 = vmul.f32 %v1018, %v1112
  %v1121 = vmul.f32 %v1025, %v1113
  %v1122 = vmul.f32 %v1032, %v1114
  %v1123 = vmul.f32 %v1039, %v1115
  %v1124 = vmul.f32 %v1046, %v1116
  %v1125 = vmul.f32 %v1053, %v1117
  %v1126 = vld [vmem:[%s1 + $0xa0] sm:$0xff]
  %v1127 = vld [vmem:[%s1 + $0xa8] sm:$0xff]
  %v1128 = vld [vmem:[%s1 + $0xb0] sm:$0xff]
  %v1129 = vld [vmem:[%s1 + $0xb8] sm:$0xff]
  %v1130 = vld [vmem:[%s1 + $0x102] sm:$0x1]
  %v1131 = vlaneseq
  %v1132 = vshrl.u32 %v1131, 7
  %v1133 = vsub.s32 0, %v1132
  %v1134 = vrot.slane %v1130, %v1133
  %vm1143 = vcmask 1041409
  %v1144 = vsel %vm1143, %v1119, %v1118
  %vm1145 = vcmask 1042434
  %v1146 = vsel %vm1145, %v1120, %v1144
  %vm1147 = vcmask 1043459
  %v1148 = vsel %vm1147, %v1121, %v1146
  %vm1149 = vcmask 1044484
  %v1150 = vsel %vm1149, %v1122, %v1148
  %vm1151 = vcmask 1045509
  %v1152 = vsel %vm1151, %v1123, %v1150
  %vm1153 = vcmask 1046534
  %v1154 = vsel %vm1153, %v1124, %v1152
  %vm1155 = vcmask 1047559
  %v1156 = vsel %vm1155, %v1125, %v1154
  %v1157 = vsel %vm224, %v1156, 0
  %1159 = vmatprep.subr.mxu0 0.0
  %1160 = vmatpush1.msra.mxu0 %v1126
  %1161 = vmatprep.subr.mxu0 0.0
  %1162 = vmatpush1.msra.mxu0 %v1127
  %1163 = vmatprep.subr.mxu0 0.0
  %1164 = vmatpush1.msra.mxu0 %v1128
  %1165 = vmatprep.subr.mxu0 0.0
  %1166 = vmatpush1.msra.mxu0 %v1129
  %1167 = vmatprep.subr.mxu0 0.0
  %1168 = vmatpush1.msra.mxu0 0.0
  %1169 = vmatprep.subr.mxu0 0.0
  %1170 = vmatpush1.msra.mxu0 0.0
  %1171 = vmatprep.subr.mxu0 0.0
  %1172 = vmatpush1.msra.mxu0 0.0
  %1173 = vmatprep.subr.mxu0 0.0
  %1174 = vmatpush1.msra.mxu0 0.0
  %1175 = vmatprep.subr.mxu0 0.0
  %1176 = vmatpush1.msra.mxu0 0.0
  %1177 = vmatprep.subr.mxu0 0.0
  %1178 = vmatpush1.msra.mxu0 0.0
  %1179 = vmatprep.subr.mxu0 0.0
  %1180 = vmatpush1.msra.mxu0 0.0
  %1181 = vmatprep.subr.mxu0 0.0
  %1182 = vmatpush1.msra.mxu0 0.0
  %1183 = vmatprep.subr.mxu0 0.0
  %1184 = vmatpush1.msra.mxu0 0.0
  %1185 = vmatprep.subr.mxu0 0.0
  %1186 = vmatpush1.msra.mxu0 0.0
  %1187 = vmatprep.subr.mxu0 0.0
  %1188 = vmatpush1.msra.mxu0 0.0
  %1189 = vmatprep.subr.mxu0 0.0
  %1190 = vmatpush1.msra.mxu0 0.0
  %1191 = vmatprep.subr.mxu0 0.0
  %1192 = vmatpush1.msra.mxu0 0.0
  %1193 = vmatprep.subr.mxu0 0.0
  %1194 = vmatpush1.msra.mxu0 0.0
  %1195 = vmatprep.subr.mxu0 0.0
  %1196 = vmatpush1.msra.mxu0 0.0
  %1197 = vmatprep.subr.mxu0 0.0
  %1198 = vmatpush1.msra.mxu0 0.0
  %1199 = vmatprep.subr.mxu0 0.0
  %1200 = vmatpush1.msra.mxu0 0.0
  %1201 = vmatprep.subr.mxu0 0.0
  %1202 = vmatpush1.msra.mxu0 0.0
  %1203 = vmatprep.subr.mxu0 0.0
  %1204 = vmatpush1.msra.mxu0 0.0
  %1205 = vmatprep.subr.mxu0 0.0
  %1206 = vmatpush1.msra.mxu0 0.0
  %1207 = vmatprep.subr.mxu0 0.0
  %1208 = vmatpush1.msra.mxu0 0.0
  %1209 = vmatprep.subr.mxu0 0.0
  %1210 = vmatpush1.msra.mxu0 0.0
  %1211 = vmatprep.subr.mxu0 0.0
  %1212 = vmatpush1.msra.mxu0 0.0
  %1213 = vmatprep.subr.mxu0 0.0
  %1214 = vmatpush1.msra.mxu0 0.0
  %1215 = vmatprep.subr.mxu0 0.0
  %1216 = vmatpush1.msra.mxu0 0.0
  %1217 = vmatprep.subr.mxu0 0.0
  %1218 = vmatpush1.msra.mxu0 0.0
  %1219 = vmatprep.subr.mxu0 0.0
  %1220 = vmatpush1.msra.mxu0 0.0
  %1221 = vmatprep.subr.mxu0 0.0
  %1222 = vmatpush1.msra.mxu0 0.0
  %1223 = vmatprep.mubr.f32.mxu0 0.0
  %1224 = vmatmul.mubr.f32.gmra.mrb[0].mxu0 %v1157
  %v1225 = vpop.f32.mrb[0].mxu0
  %v1226 = vadd.f32 %v1134, %v1225
  %v1227 = vpop.f32.mrb[0].mxu0
  %1228 = vdwg.mxu0
  %v1229 = vadd.f32 %v469, %v1226
  %v1230 = vld [vmem:[%s1 + $0x106] sm:$0x1]
  %v1231 = vld [vmem:[%s1 + $0x107] sm:$0x1]
  %v1232 = vsel %vm224, %v1229, 0.0
  %1233 = vadd.xlane.f32.xlu0 %v1232
  %v1234 = vpop.xlane.xlu0 %1233
  %v1235 = vmul.f32 %v1234, %v447
  %v1236 = vmul.f32 %v1229, %v1229
  %v1237 = vsel %vm224, %v1236, 0.0
  %1238 = vadd.xlane.f32.xlu0 %v1237
  %v1239 = vpop.xlane.xlu0 %1238
  %v1240 = vmul.f32 %v1239, %v447
  %v1241 = vmul.f32 %v1235, %v1235
  %v1242 = vsub.f32 %v1240, %v1241
  %v1243 = vsub.f32 %v1229, %v1235
  %v1244 = vadd.f32 %v1242, 1e-05
  %v1245 = vrsqrt.pop %v1244
  %v1246 = vmul.f32 %v1243, %v1245
  %v1247 = vlaneseq
  %v1248 = vshrl.u32 %v1247, 7
  %v1249 = vsub.s32 0, %v1248
  %v1250 = vrot.slane %v1230, %v1249
  %v1251 = vmul.f32 %v1246, %v1250
  %v1252 = vlaneseq
  %v1253 = vshrl.u32 %v1252, 7
  %v1254 = vsub.s32 0, %v1253
  %v1255 = vrot.slane %v1231, %v1254
  %v1256 = vadd.f32 %v1251, %v1255
  %v1257 = vlaneseq
  %v1258 = vshrl.u32 %v1257, 7
  %v1259 = vsub.s32 0, %v1258
  %v1260 = vrot.slane %v358, %v1259
  %v1262 = vsel %vm224, %v1256, 0
  %1264 = vmatprep.subr.mxu0 0.0
  %1265 = vmatpush1.msra.mxu0 %v354
  %1266 = vmatprep.subr.mxu0 0.0
  %1267 = vmatpush1.msra.mxu0 %v355
  %1268 = vmatprep.subr.mxu0 0.0
  %1269 = vmatpush1.msra.mxu0 %v356
  %1270 = vmatprep.subr.mxu0 0.0
  %1271 = vmatpush1.msra.mxu0 %v357
  %1272 = vmatprep.subr.mxu0 0.0
  %1273 = vmatpush1.msra.mxu0 0.0
  %1274 = vmatprep.subr.mxu0 0.0
  %1275 = vmatpush1.msra.mxu0 0.0
  %1276 = vmatprep.subr.mxu0 0.0
  %1277 = vmatpush1.msra.mxu0 0.0
  %1278 = vmatprep.subr.mxu0 0.0
  %1279 = vmatpush1.msra.mxu0 0.0
  %1280 = vmatprep.subr.mxu0 0.0
  %1281 = vmatpush1.msra.mxu0 0.0
  %1282 = vmatprep.subr.mxu0 0.0
  %1283 = vmatpush1.msra.mxu0 0.0
  %1284 = vmatprep.subr.mxu0 0.0
  %1285 = vmatpush1.msra.mxu0 0.0
  %1286 = vmatprep.subr.mxu0 0.0
  %1287 = vmatpush1.msra.mxu0 0.0
  %1288 = vmatprep.subr.mxu0 0.0
  %1289 = vmatpush1.msra.mxu0 0.0
  %1290 = vmatprep.subr.mxu0 0.0
  %1291 = vmatpush1.msra.mxu0 0.0
  %1292 = vmatprep.subr.mxu0 0.0
  %1293 = vmatpush1.msra.mxu0 0.0
  %1294 = vmatprep.subr.mxu0 0.0
  %1295 = vmatpush1.msra.mxu0 0.0
  %1296 = vmatprep.subr.mxu0 0.0
  %1297 = vmatpush1.msra.mxu0 0.0
  %1298 = vmatprep.subr.mxu0 0.0
  %1299 = vmatpush1.msra.mxu0 0.0
  %1300 = vmatprep.subr.mxu0 0.0
  %1301 = vmatpush1.msra.mxu0 0.0
  %1302 = vmatprep.subr.mxu0 0.0
  %1303 = vmatpush1.msra.mxu0 0.0
  %1304 = vmatprep.subr.mxu0 0.0
  %1305 = vmatpush1.msra.mxu0 0.0
  %1306 = vmatprep.subr.mxu0 0.0
  %1307 = vmatpush1.msra.mxu0 0.0
  %1308 = vmatprep.subr.mxu0 0.0
  %1309 = vmatpush1.msra.mxu0 0.0
  %1310 = vmatprep.subr.mxu0 0.0
  %1311 = vmatpush1.msra.mxu0 0.0
  %1312 = vmatprep.subr.mxu0 0.0
  %1313 = vmatpush1.msra.mxu0 0.0
  %1314 = vmatprep.subr.mxu0 0.0
  %1315 = vmatpush1.msra.mxu0 0.0
  %1316 = vmatprep.subr.mxu0 0.0
  %1317 = vmatpush1.msra.mxu0 0.0
  %1318 = vmatprep.subr.mxu0 0.0
  %1319 = vmatpush1.msra.mxu0 0.0
  %1320 = vmatprep.subr.mxu0 0.0
  %1321 = vmatpush1.msra.mxu0 0.0
  %1322 = vmatprep.subr.mxu0 0.0
  %1323 = vmatpush1.msra.mxu0 0.0
  %1324 = vmatprep.subr.mxu0 0.0
  %1325 = vmatpush1.msra.mxu0 0.0
  %1326 = vmatprep.subr.mxu0 0.0
  %1327 = vmatpush1.msra.mxu0 0.0
  %1328 = vmatprep.mubr.f32.mxu0 0.0
  %1329 = vmatmul.mubr.f32.gmra.mrb[0].mxu0 %v1262
  %v1330 = vpop.f32.mrb[0].mxu0
  %v1331 = vadd.f32 %v1260, %v1330
  %v1332 = vpop.f32.mrb[0].mxu0
  %1333 = vdwg.mxu0
  %v1334 = vmax.f32 %v1331, 0.0
  %v1335 = vld [vmem:[%s1 + $0xc0] sm:$0xff]
  %v1336 = vld [vmem:[%s1 + $0xc8] sm:$0xff]
  %v1337 = vld [vmem:[%s1 + $0xd0] sm:$0xff]
  %v1338 = vld [vmem:[%s1 + $0xd8] sm:$0xff]
  %v1339 = vld [vmem:[%s1 + $0xe0] sm:$0xff]
  %v1340 = vld [vmem:[%s1 + $0xe8] sm:$0xff]
  %v1341 = vld [vmem:[%s1 + $0xf0] sm:$0xff]
  %v1342 = vld [vmem:[%s1 + $0xf8] sm:$0xff]
  %v1343 = vld [vmem:[%s1 + $0x103] sm:$0x1]
  %v1344 = vlaneseq
  %v1345 = vshrl.u32 %v1344, 7
  %v1346 = vsub.s32 0, %v1345
  %v1347 = vrot.slane %v1343, %v1346
  %vm1348 = vcmask 523264
  %v1350 = vsel %vm1348, %v1334, 0
  %1352 = vmatprep.subr.mxu0 0.0
  %1353 = vmatpush1.msra.mxu0 %v1335
  %1354 = vmatprep.subr.mxu0 0.0
  %1355 = vmatpush1.msra.mxu0 %v1336
  %1356 = vmatprep.subr.mxu0 0.0
  %1357 = vmatpush1.msra.mxu0 %v1337
  %1358 = vmatprep.subr.mxu0 0.0
  %1359 = vmatpush1.msra.mxu0 %v1338
  %1360 = vmatprep.subr.mxu0 0.0
  %1361 = vmatpush1.msra.mxu0 %v1339
  %1362 = vmatprep.subr.mxu0 0.0
  %1363 = vmatpush1.msra.mxu0 %v1340
  %1364 = vmatprep.subr.mxu0 0.0
  %1365 = vmatpush1.msra.mxu0 %v1341
  %1366 = vmatprep.subr.mxu0 0.0
  %1367 = vmatpush1.msra.mxu0 %v1342
  %1368 = vmatprep.subr.mxu0 0.0
  %1369 = vmatpush1.msra.mxu0 0.0
  %1370 = vmatprep.subr.mxu0 0.0
  %1371 = vmatpush1.msra.mxu0 0.0
  %1372 = vmatprep.subr.mxu0 0.0
  %1373 = vmatpush1.msra.mxu0 0.0
  %1374 = vmatprep.subr.mxu0 0.0
  %1375 = vmatpush1.msra.mxu0 0.0
  %1376 = vmatprep.subr.mxu0 0.0
  %1377 = vmatpush1.msra.mxu0 0.0
  %1378 = vmatprep.subr.mxu0 0.0
  %1379 = vmatpush1.msra.mxu0 0.0
  %1380 = vmatprep.subr.mxu0 0.0
  %1381 = vmatpush1.msra.mxu0 0.0
  %1382 = vmatprep.subr.mxu0 0.0
  %1383 = vmatpush1.msra.mxu0 0.0
  %1384 = vmatprep.subr.mxu0 0.0
  %1385 = vmatpush1.msra.mxu0 0.0
  %1386 = vmatprep.subr.mxu0 0.0
  %1387 = vmatpush1.msra.mxu0 0.0
  %1388 = vmatprep.subr.mxu0 0.0
  %1389 = vmatpush1.msra.mxu0 0.0
  %1390 = vmatprep.subr.mxu0 0.0
  %1391 = vmatpush1.msra.mxu0 0.0
  %1392 = vmatprep.subr.mxu0 0.0
  %1393 = vmatpush1.msra.mxu0 0.0
  %1394 = vmatprep.subr.mxu0 0.0
  %1395 = vmatpush1.msra.mxu0 0.0
  %1396 = vmatprep.subr.mxu0 0.0
  %1397 = vmatpush1.msra.mxu0 0.0
  %1398 = vmatprep.subr.mxu0 0.0
  %1399 = vmatpush1.msra.mxu0 0.0
  %1400 = vmatprep.subr.mxu0 0.0
  %1401 = vmatpush1.msra.mxu0 0.0
  %1402 = vmatprep.subr.mxu0 0.0
  %1403 = vmatpush1.msra.mxu0 0.0
  %1404 = vmatprep.subr.mxu0 0.0
  %1405 = vmatpush1.msra.mxu0 0.0
  %1406 = vmatprep.subr.mxu0 0.0
  %1407 = vmatpush1.msra.mxu0 0.0
  %1408 = vmatprep.subr.mxu0 0.0
  %1409 = vmatpush1.msra.mxu0 0.0
  %1410 = vmatprep.subr.mxu0 0.0
  %1411 = vmatpush1.msra.mxu0 0.0
  %1412 = vmatprep.subr.mxu0 0.0
  %1413 = vmatpush1.msra.mxu0 0.0
  %1414 = vmatprep.subr.mxu0 0.0
  %1415 = vmatpush1.msra.mxu0 0.0
  %1416 = vmatprep.mubr.f32.mxu0 0.0
  %1417 = vmatmul.mubr.f32.gmra.mrb[0].mxu0 %v1350
  %v1418 = vpop.f32.mrb[0].mxu0
  %v1419 = vadd.f32 %v1347, %v1418
  %v1420 = vpop.f32.mrb[0].mxu0
  %1421 = vdwg.mxu0
  %v1422 = vadd.f32 %v1256, %v1419
  %v1423 = vld [vmem:[%s1 + $0x108] sm:$0x1]
  %v1424 = vld [vmem:[%s1 + $0x109] sm:$0x1]
  %v1425 = vsel %vm224, %v1422, 0.0
  %1426 = vadd.xlane.f32.xlu0 %v1425
  %v1427 = vpop.xlane.xlu0 %1426
  %v1428 = vmul.f32 %v1427, %v447
  %v1429 = vmul.f32 %v1422, %v1422
  %v1430 = vsel %vm224, %v1429, 0.0
  %1431 = vadd.xlane.f32.xlu0 %v1430
  %v1432 = vpop.xlane.xlu0 %1431
  %v1433 = vmul.f32 %v1432, %v447
  %v1434 = vmul.f32 %v1428, %v1428
  %v1435 = vsub.f32 %v1433, %v1434
  %v1436 = vsub.f32 %v1422, %v1428
  %v1437 = vadd.f32 %v1435, 1e-05
  %v1438 = vrsqrt.pop %v1437
  %v1439 = vmul.f32 %v1436, %v1438
  %v1440 = vlaneseq
  %v1441 = vshrl.u32 %v1440, 7
  %v1442 = vsub.s32 0, %v1441
  %v1443 = vrot.slane %v1423, %v1442
  %v1444 = vmul.f32 %v1439, %v1443
  %v1445 = vlaneseq
  %v1446 = vshrl.u32 %v1445, 7
  %v1447 = vsub.s32 0, %v1446
  %v1448 = vrot.slane %v1424, %v1447
  %v1449 = vadd.f32 %v1444, %v1448
  %v1450 = vld [vmem:[%s1 + $0x110] sm:$0xff]
  %v1451 = vld [vmem:[%s1 + $0x118] sm:$0xff]
  %v1452 = vld [vmem:[%s1 + $0x120] sm:$0xff]
  %v1453 = vld [vmem:[%s1 + $0x128] sm:$0xff]
  %v1454 = vld [vmem:[%s1 + $0x1b0] sm:$0x1]
  %v1455 = vlaneseq
  %v1456 = vshrl.u32 %v1455, 7
  %v1457 = vsub.s32 0, %v1456
  %v1458 = vrot.slane %v1454, %v1457
  %v1460 = vsel %vm224, %v1449, 0
  %1462 = vmatprep.subr.mxu0 0.0
  %1463 = vmatpush1.msra.mxu0 %v1450
  %1464 = vmatprep.subr.mxu0 0.0
  %1465 = vmatpush1.msra.mxu0 %v1451
  %1466 = vmatprep.subr.mxu0 0.0
  %1467 = vmatpush1.msra.mxu0 %v1452
  %1468 = vmatprep.subr.mxu0 0.0
  %1469 = vmatpush1.msra.mxu0 %v1453
  %1470 = vmatprep.subr.mxu0 0.0
  %1471 = vmatpush1.msra.mxu0 0.0
  %1472 = vmatprep.subr.mxu0 0.0
  %1473 = vmatpush1.msra.mxu0 0.0
  %1474 = vmatprep.subr.mxu0 0.0
  %1475 = vmatpush1.msra.mxu0 0.0
  %1476 = vmatprep.subr.mxu0 0.0
  %1477 = vmatpush1.msra.mxu0 0.0
  %1478 = vmatprep.subr.mxu0 0.0
  %1479 = vmatpush1.msra.mxu0 0.0
  %1480 = vmatprep.subr.mxu0 0.0
  %1481 = vmatpush1.msra.mxu0 0.0
  %1482 = vmatprep.subr.mxu0 0.0
  %1483 = vmatpush1.msra.mxu0 0.0
  %1484 = vmatprep.subr.mxu0 0.0
  %1485 = vmatpush1.msra.mxu0 0.0
  %1486 = vmatprep.subr.mxu0 0.0
  %1487 = vmatpush1.msra.mxu0 0.0
  %1488 = vmatprep.subr.mxu0 0.0
  %1489 = vmatpush1.msra.mxu0 0.0
  %1490 = vmatprep.subr.mxu0 0.0
  %1491 = vmatpush1.msra.mxu0 0.0
  %1492 = vmatprep.subr.mxu0 0.0
  %1493 = vmatpush1.msra.mxu0 0.0
  %1494 = vmatprep.subr.mxu0 0.0
  %1495 = vmatpush1.msra.mxu0 0.0
  %1496 = vmatprep.subr.mxu0 0.0
  %1497 = vmatpush1.msra.mxu0 0.0
  %1498 = vmatprep.subr.mxu0 0.0
  %1499 = vmatpush1.msra.mxu0 0.0
  %1500 = vmatprep.subr.mxu0 0.0
  %1501 = vmatpush1.msra.mxu0 0.0
  %1502 = vmatprep.subr.mxu0 0.0
  %1503 = vmatpush1.msra.mxu0 0.0
  %1504 = vmatprep.subr.mxu0 0.0
  %1505 = vmatpush1.msra.mxu0 0.0
  %1506 = vmatprep.subr.mxu0 0.0
  %1507 = vmatpush1.msra.mxu0 0.0
  %1508 = vmatprep.subr.mxu0 0.0
  %1509 = vmatpush1.msra.mxu0 0.0
  %1510 = vmatprep.subr.mxu0 0.0
  %1511 = vmatpush1.msra.mxu0 0.0
  %1512 = vmatprep.subr.mxu0 0.0
  %1513 = vmatpush1.msra.mxu0 0.0
  %1514 = vmatprep.subr.mxu0 0.0
  %1515 = vmatpush1.msra.mxu0 0.0
  %1516 = vmatprep.subr.mxu0 0.0
  %1517 = vmatpush1.msra.mxu0 0.0
  %1518 = vmatprep.subr.mxu0 0.0
  %1519 = vmatpush1.msra.mxu0 0.0
  %1520 = vmatprep.subr.mxu0 0.0
  %1521 = vmatpush1.msra.mxu0 0.0
  %1522 = vmatprep.subr.mxu0 0.0
  %1523 = vmatpush1.msra.mxu0 0.0
  %1524 = vmatprep.subr.mxu0 0.0
  %1525 = vmatpush1.msra.mxu0 0.0
  %1526 = vmatprep.mubr.f32.mxu0 0.0
  %1527 = vmatmul.mubr.f32.gmra.mrb[0].mxu0 %v1460
  %v1528 = vpop.f32.mrb[0].mxu0
  %v1529 = vadd.f32 %v1458, %v1528
  %v1530 = vpop.f32.mrb[0].mxu0
  %1531 = vdwg.mxu0
  %v1532 = vadd.f32 %v1449, %v1529
  %v1533 = vld [vmem:[%s1 + $0x1b4] sm:$0x1]
  %v1534 = vld [vmem:[%s1 + $0x1b5] sm:$0x1]
  %v1535 = vsel %vm224, %v1532, 0.0
  %1536 = vadd.xlane.f32.xlu0 %v1535
  %v1537 = vpop.xlane.xlu0 %1536
  %v1538 = vmul.f32 %v1537, %v447
  %v1539 = vmul.f32 %v1532, %v1532
  %v1540 = vsel %vm224, %v1539, 0.0
  %1541 = vadd.xlane.f32.xlu0 %v1540
  %v1542 = vpop.xlane.xlu0 %1541
  %v1543 = vmul.f32 %v1542, %v447
  %v1544 = vmul.f32 %v1538, %v1538
  %v1545 = vsub.f32 %v1543, %v1544
  %v1546 = vsub.f32 %v1532, %v1538
  %v1547 = vadd.f32 %v1545, 1e-05
  %v1548 = vrsqrt.pop %v1547
  %v1549 = vmul.f32 %v1546, %v1548
  %v1550 = vlaneseq
  %v1551 = vshrl.u32 %v1550, 7
  %v1552 = vsub.s32 0, %v1551
  %v1553 = vrot.slane %v1533, %v1552
  %v1554 = vmul.f32 %v1549, %v1553
  %v1555 = vlaneseq
  %v1556 = vshrl.u32 %v1555, 7
  %v1557 = vsub.s32 0, %v1556
  %v1558 = vrot.slane %v1534, %v1557
  %v1559 = vadd.f32 %v1554, %v1558
  %v1560 = vld [vmem:[%s1 + $0x130] sm:$0xff]
  %v1561 = vld [vmem:[%s1 + $0x138] sm:$0xff]
  %v1562 = vld [vmem:[%s1 + $0x140] sm:$0xff]
  %v1563 = vld [vmem:[%s1 + $0x148] sm:$0xff]
  %v1564 = vld [vmem:[%s1 + $0x1b1] sm:$0x1]
  %v1565 = vlaneseq
  %v1566 = vshrl.u32 %v1565, 7
  %v1567 = vsub.s32 0, %v1566
  %v1568 = vrot.slane %v1564, %v1567
  %v1570 = vsel %vm224, %v1559, 0
  %1572 = vmatprep.subr.mxu0 0.0
  %1573 = vmatpush1.msra.mxu0 %v1560
  %1574 = vmatprep.subr.mxu0 0.0
  %1575 = vmatpush1.msra.mxu0 %v1561
  %1576 = vmatprep.subr.mxu0 0.0
  %1577 = vmatpush1.msra.mxu0 %v1562
  %1578 = vmatprep.subr.mxu0 0.0
  %1579 = vmatpush1.msra.mxu0 %v1563
  %1580 = vmatprep.subr.mxu0 0.0
  %1581 = vmatpush1.msra.mxu0 0.0
  %1582 = vmatprep.subr.mxu0 0.0
  %1583 = vmatpush1.msra.mxu0 0.0
  %1584 = vmatprep.subr.mxu0 0.0
  %1585 = vmatpush1.msra.mxu0 0.0
  %1586 = vmatprep.subr.mxu0 0.0
  %1587 = vmatpush1.msra.mxu0 0.0
  %1588 = vmatprep.subr.mxu0 0.0
  %1589 = vmatpush1.msra.mxu0 0.0
  %1590 = vmatprep.subr.mxu0 0.0
  %1591 = vmatpush1.msra.mxu0 0.0
  %1592 = vmatprep.subr.mxu0 0.0
  %1593 = vmatpush1.msra.mxu0 0.0
  %1594 = vmatprep.subr.mxu0 0.0
  %1595 = vmatpush1.msra.mxu0 0.0
  %1596 = vmatprep.subr.mxu0 0.0
  %1597 = vmatpush1.msra.mxu0 0.0
  %1598 = vmatprep.subr.mxu0 0.0
  %1599 = vmatpush1.msra.mxu0 0.0
  %1600 = vmatprep.subr.mxu0 0.0
  %1601 = vmatpush1.msra.mxu0 0.0
  %1602 = vmatprep.subr.mxu0 0.0
  %1603 = vmatpush1.msra.mxu0 0.0
  %1604 = vmatprep.subr.mxu0 0.0
  %1605 = vmatpush1.msra.mxu0 0.0
  %1606 = vmatprep.subr.mxu0 0.0
  %1607 = vmatpush1.msra.mxu0 0.0
  %1608 = vmatprep.subr.mxu0 0.0
  %1609 = vmatpush1.msra.mxu0 0.0
  %1610 = vmatprep.subr.mxu0 0.0
  %1611 = vmatpush1.msra.mxu0 0.0
  %1612 = vmatprep.subr.mxu0 0.0
  %1613 = vmatpush1.msra.mxu0 0.0
  %1614 = vmatprep.subr.mxu0 0.0
  %1615 = vmatpush1.msra.mxu0 0.0
  %1616 = vmatprep.subr.mxu0 0.0
  %1617 = vmatpush1.msra.mxu0 0.0
  %1618 = vmatprep.subr.mxu0 0.0
  %1619 = vmatpush1.msra.mxu0 0.0
  %1620 = vmatprep.subr.mxu0 0.0
  %1621 = vmatpush1.msra.mxu0 0.0
  %1622 = vmatprep.subr.mxu0 0.0
  %1623 = vmatpush1.msra.mxu0 0.0
  %1624 = vmatprep.subr.mxu0 0.0
  %1625 = vmatpush1.msra.mxu0 0.0
  %1626 = vmatprep.subr.mxu0 0.0
  %1627 = vmatpush1.msra.mxu0 0.0
  %1628 = vmatprep.subr.mxu0 0.0
  %1629 = vmatpush1.msra.mxu0 0.0
  %1630 = vmatprep.subr.mxu0 0.0
  %1631 = vmatpush1.msra.mxu0 0.0
  %1632 = vmatprep.subr.mxu0 0.0
  %1633 = vmatpush1.msra.mxu0 0.0
  %1634 = vmatprep.subr.mxu0 0.0
  %1635 = vmatpush1.msra.mxu0 0.0
  %1636 = vmatprep.mubr.f32.mxu0 0.0
  %1637 = vmatmul.mubr.f32.gmra.mrb[0].mxu0 %v1570
  %v1638 = vpop.f32.mrb[0].mxu0
  %v1639 = vadd.f32 %v1568, %v1638
  %v1640 = vpop.f32.mrb[0].mxu0
  %1641 = vdwg.mxu0
  %v1643 = vcombine.high %v1639, %v1639
  %v1645 = vunpack.c.l.s4 1966171168
  %v1646 = vunpack.c.0.s8 %v1645
  %v1647 = vlaneseq
  %v1648 = vshrl.u32 %v1647, 7
  %v1649 = vsub.s32 %v1646, %v1648
  %v1650 = vrot.slane %v1639, %v1649
  %v1652 = vunpack.c.l.s4 1966171168
  %v1653 = vunpack.c.0.s8 %v1652
  %v1654 = vlaneseq
  %v1655 = vshrl.u32 %v1654, 7
  %v1656 = vsub.s32 %v1653, %v1655
  %v1657 = vrot.slane %v1643, %v1656
  %v1658 = vcombine.high %v1650, %v1650
  %v1659 = vcombine.high %v1657, %v1657
  %v1661 = vunpack.c.l.s4 1966171168
  %v1662 = vunpack.c.0.s8 %v1661
  %v1663 = vlaneseq
  %v1664 = vshrl.u32 %v1663, 7
  %v1665 = vsub.s32 %v1662, %v1664
  %v1666 = vrot.slane %v1650, %v1665
  %v1668 = vunpack.c.l.s4 1966171168
  %v1669 = vunpack.c.0.s8 %v1668
  %v1670 = vlaneseq
  %v1671 = vshrl.u32 %v1670, 7
  %v1672 = vsub.s32 %v1669, %v1671
  %v1673 = vrot.slane %v1657, %v1672
  %v1675 = vunpack.c.l.s4 1966171168
  %v1676 = vunpack.c.0.s8 %v1675
  %v1677 = vlaneseq
  %v1678 = vshrl.u32 %v1677, 7
  %v1679 = vsub.s32 %v1676, %v1678
  %v1680 = vrot.slane %v1658, %v1679
  %v1682 = vunpack.c.l.s4 1966171168
  %v1683 = vunpack.c.0.s8 %v1682
  %v1684 = vlaneseq
  %v1685 = vshrl.u32 %v1684, 7
  %v1686 = vsub.s32 %v1683, %v1685
  %v1687 = vrot.slane %v1659, %v1686
  %v1688 = vcombine.high %v1666, %v1666
  %v1689 = vcombine.high %v1673, %v1673
  %v1690 = vcombine.high %v1680, %v1680
  %v1691 = vcombine.high %v1687, %v1687
  %v1692 = vlaneseq
  %v1693 = vshrl.u32 %v1692, 7
  %v1694 = vsub.s32 0, %v1693
  %v1695 = vrot.slane %v1666, %v1694
  %v1696 = vlaneseq
  %v1697 = vshrl.u32 %v1696, 7
  %v1698 = vsub.s32 0, %v1697
  %v1699 = vrot.slane %v1680, %v1698
  %v1700 = vlaneseq
  %v1701 = vshrl.u32 %v1700, 7
  %v1702 = vsub.s32 0, %v1701
  %v1703 = vrot.slane %v1688, %v1702
  %v1704 = vlaneseq
  %v1705 = vshrl.u32 %v1704, 7
  %v1706 = vsub.s32 0, %v1705
  %v1707 = vrot.slane %v1690, %v1706
  %v1708 = vlaneseq
  %v1709 = vshrl.u32 %v1708, 7
  %v1710 = vsub.s32 0, %v1709
  %v1711 = vrot.slane %v1673, %v1710
  %v1712 = vlaneseq
  %v1713 = vshrl.u32 %v1712, 7
  %v1714 = vsub.s32 0, %v1713
  %v1715 = vrot.slane %v1687, %v1714
  %v1716 = vlaneseq
  %v1717 = vshrl.u32 %v1716, 7
  %v1718 = vsub.s32 0, %v1717
  %v1719 = vrot.slane %v1689, %v1718
  %v1720 = vlaneseq
  %v1721 = vshrl.u32 %v1720, 7
  %v1722 = vsub.s32 0, %v1721
  %v1723 = vrot.slane %v1691, %v1722
  %1724 = vrot.lane.b32.xlu0 %v1695, 64
  %v1725 = vpop.permute.xlu0 %1724
  %1726 = vrot.lane.b32.xlu0 %v1699, 64
  %v1727 = vpop.permute.xlu0 %1726
  %1728 = vrot.lane.b32.xlu0 %v1703, 64
  %v1729 = vpop.permute.xlu0 %1728
  %1730 = vrot.lane.b32.xlu0 %v1707, 64
  %v1731 = vpop.permute.xlu0 %1730
  %1732 = vrot.lane.b32.xlu0 %v1711, 64
  %v1733 = vpop.permute.xlu0 %1732
  %1734 = vrot.lane.b32.xlu0 %v1715, 64
  %v1735 = vpop.permute.xlu0 %1734
  %1736 = vrot.lane.b32.xlu0 %v1719, 64
  %v1737 = vpop.permute.xlu0 %1736
  %1738 = vrot.lane.b32.xlu0 %v1723, 64
  %v1739 = vpop.permute.xlu0 %1738
  %v1748 = vmul.f32 %v316, %v1725
  %v1749 = vmul.f32 %v321, %v1727
  %v1750 = vmul.f32 %v326, %v1729
  %v1751 = vmul.f32 %v331, %v1731
  %v1752 = vmul.f32 %v336, %v1733
  %v1753 = vmul.f32 %v341, %v1735
  %v1754 = vmul.f32 %v346, %v1737
  %v1755 = vmul.f32 %v351, %v1739
  %1764 = vrot.lane.b32.xlu0 %v1748, 64
  %v1765 = vpop.permute.xlu0 %1764
  %1766 = vrot.lane.b32.xlu0 %v1749, 64
  %v1767 = vpop.permute.xlu0 %1766
  %1768 = vrot.lane.b32.xlu0 %v1750, 64
  %v1769 = vpop.permute.xlu0 %1768
  %1770 = vrot.lane.b32.xlu0 %v1751, 64
  %v1771 = vpop.permute.xlu0 %1770
  %1772 = vrot.lane.b32.xlu0 %v1752, 64
  %v1773 = vpop.permute.xlu0 %1772
  %1774 = vrot.lane.b32.xlu0 %v1753, 64
  %v1775 = vpop.permute.xlu0 %1774
  %1776 = vrot.lane.b32.xlu0 %v1754, 64
  %v1777 = vpop.permute.xlu0 %1776
  %1778 = vrot.lane.b32.xlu0 %v1755, 64
  %v1779 = vpop.permute.xlu0 %1778
  %v1780 = vsel %vm224, %v1765, 0
  %v1782 = vsel %vm224, %v1767, 0
  %v1784 = vsel %vm224, %v1769, 0
  %v1786 = vsel %vm224, %v1771, 0
  %v1788 = vsel %vm224, %v1773, 0
  %v1790 = vsel %vm224, %v1775, 0
  %v1792 = vsel %vm224, %v1777, 0
  %v1794 = vsel %vm224, %v1779, 0
  %1796 = vmatprep.subr.mxu0 0.0
  %1797 = vmatpush1.msra.mxu0 %v40
  %1798 = vmatprep.subr.mxu0 0.0
  %1799 = vmatpush1.msra.mxu0 %v41
  %1800 = vmatprep.subr.mxu0 0.0
  %1801 = vmatpush1.msra.mxu0 %v42
  %1802 = vmatprep.subr.mxu0 0.0
  %1803 = vmatpush1.msra.mxu0 %v43
  %1804 = vmatprep.subr.mxu0 0.0
  %1805 = vmatpush1.msra.mxu0 0.0
  %1806 = vmatprep.subr.mxu0 0.0
  %1807 = vmatpush1.msra.mxu0 0.0
  %1808 = vmatprep.subr.mxu0 0.0
  %1809 = vmatpush1.msra.mxu0 0.0
  %1810 = vmatprep.subr.mxu0 0.0
  %1811 = vmatpush1.msra.mxu0 0.0
  %1812 = vmatprep.subr.mxu0 0.0
  %1813 = vmatpush1.msra.mxu0 0.0
  %1814 = vmatprep.subr.mxu0 0.0
  %1815 = vmatpush1.msra.mxu0 0.0
  %1816 = vmatprep.subr.mxu0 0.0
  %1817 = vmatpush1.msra.mxu0 0.0
  %1818 = vmatprep.subr.mxu0 0.0
  %1819 = vmatpush1.msra.mxu0 0.0
  %1820 = vmatprep.subr.mxu0 0.0
  %1821 = vmatpush1.msra.mxu0 0.0
  %1822 = vmatprep.subr.mxu0 0.0
  %1823 = vmatpush1.msra.mxu0 0.0
  %1824 = vmatprep.subr.mxu0 0.0
  %1825 = vmatpush1.msra.mxu0 0.0
  %1826 = vmatprep.subr.mxu0 0.0
  %1827 = vmatpush1.msra.mxu0 0.0
  %1828 = vmatprep.subr.mxu0 0.0
  %1829 = vmatpush1.msra.mxu0 0.0
  %1830 = vmatprep.subr.mxu0 0.0
  %1831 = vmatpush1.msra.mxu0 0.0
  %1832 = vmatprep.subr.mxu0 0.0
  %1833 = vmatpush1.msra.mxu0 0.0
  %1834 = vmatprep.subr.mxu0 0.0
  %1835 = vmatpush1.msra.mxu0 0.0
  %1836 = vmatprep.subr.mxu0 0.0
  %1837 = vmatpush1.msra.mxu0 0.0
  %1838 = vmatprep.subr.mxu0 0.0
  %1839 = vmatpush1.msra.mxu0 0.0
  %1840 = vmatprep.subr.mxu0 0.0
  %1841 = vmatpush1.msra.mxu0 0.0
  %1842 = vmatprep.subr.mxu0 0.0
  %1843 = vmatpush1.msra.mxu0 0.0
  %1844 = vmatprep.subr.mxu0 0.0
  %1845 = vmatpush1.msra.mxu0 0.0
  %1846 = vmatprep.subr.mxu0 0.0
  %1847 = vmatpush1.msra.mxu0 0.0
  %1848 = vmatprep.subr.mxu0 0.0
  %1849 = vmatpush1.msra.mxu0 0.0
  %1850 = vmatprep.subr.mxu0 0.0
  %1851 = vmatpush1.msra.mxu0 0.0
  %1852 = vmatprep.subr.mxu0 0.0
  %1853 = vmatpush1.msra.mxu0 0.0
  %1854 = vmatprep.subr.mxu0 0.0
  %1855 = vmatpush1.msra.mxu0 0.0
  %1856 = vmatprep.subr.mxu0 0.0
  %1857 = vmatpush1.msra.mxu0 0.0
  %1858 = vmatprep.subr.mxu0 0.0
  %1859 = vmatpush1.msra.mxu0 0.0
  %1860 = vmatprep.mubr.f32.mxu0 0.0
  %1861 = vmatmul.mubr.f32.gmra.mrb[0].mxu0 %v1780
  %v1862 = vpop.f32.mrb[0].mxu0
  %v1863 = vadd.f32 0.0, %v1862
  %v1864 = vpop.f32.mrb[0].mxu0
  %1865 = vmatprep.mubr.f32.mxu0 0.0
  %1866 = vmatmul.mubr.f32.gmra.mrb[0].mxu0 %v1782
  %v1867 = vpop.f32.mrb[0].mxu0
  %v1868 = vadd.f32 0.0, %v1867
  %v1869 = vpop.f32.mrb[0].mxu0
  %1870 = vmatprep.mubr.f32.mxu0 0.0
  %1871 = vmatmul.mubr.f32.gmra.mrb[0].mxu0 %v1784
  %v1872 = vpop.f32.mrb[0].mxu0
  %v1873 = vadd.f32 0.0, %v1872
  %v1874 = vpop.f32.mrb[0].mxu0
  %1875 = vmatprep.mubr.f32.mxu0 0.0
  %1876 = vmatmul.mubr.f32.gmra.mrb[0].mxu0 %v1786
  %v1877 = vpop.f32.mrb[0].mxu0
  %v1878 = vadd.f32 0.0, %v1877
  %v1879 = vpop.f32.mrb[0].mxu0
  %1880 = vmatprep.mubr.f32.mxu0 0.0
  %1881 = vmatmul.mubr.f32.gmra.mrb[0].mxu0 %v1788
  %v1882 = vpop.f32.mrb[0].mxu0
  %v1883 = vadd.f32 0.0, %v1882
  %v1884 = vpop.f32.mrb[0].mxu0
  %1885 = vmatprep.mubr.f32.mxu0 0.0
  %1886 = vmatmul.mubr.f32.gmra.mrb[0].mxu0 %v1790
  %v1887 = vpop.f32.mrb[0].mxu0
  %v1888 = vadd.f32 0.0, %v1887
  %v1889 = vpop.f32.mrb[0].mxu0
  %1890 = vmatprep.mubr.f32.mxu0 0.0
  %1891 = vmatmul.mubr.f32.gmra.mrb[0].mxu0 %v1792
  %v1892 = vpop.f32.mrb[0].mxu0
  %v1893 = vadd.f32 0.0, %v1892
  %v1894 = vpop.f32.mrb[0].mxu0
  %1895 = vmatprep.mubr.f32.mxu0 0.0
  %1896 = vmatmul.mubr.f32.gmra.mrb[0].mxu0 %v1794
  %v1897 = vpop.f32.mrb[0].mxu0
  %v1898 = vadd.f32 0.0, %v1897
  %v1899 = vpop.f32.mrb[0].mxu0
  %1900 = vdwg.mxu0
  %v1901 = vsel %vm779, %v1863, -inf
  %v1902 = vsel %vm779, %v1868, -inf
  %v1903 = vsel %vm779, %v1873, -inf
  %v1904 = vsel %vm779, %v1878, -inf
  %v1905 = vsel %vm779, %v1883, -inf
  %v1906 = vmax.f32 %v1901, %v1905
  %v1907 = vsel %vm779, %v1888, -inf
  %v1908 = vmax.f32 %v1902, %v1907
  %v1909 = vsel %vm779, %v1893, -inf
  %v1910 = vmax.f32 %v1903, %v1909
  %v1911 = vsel %vm779, %v1898, -inf
  %v1912 = vmax.f32 %v1904, %v1911
  %v1913 = vmax.f32 %v1906, %v1908
  %v1914 = vmax.f32 %v1910, %v1912
  %v1915 = vmax.f32 %v1913, %v1914
  %v1916 = vrot.slane %v1915, 4
  %v1917 = vmax.f32 %v1915, %v1916
  %v1918 = vrot.slane %v1917, 2
  %v1919 = vmax.f32 %v1917, %v1918
  %v1920 = vrot.slane %v1919, 1
  %v1921 = vmax.f32 %v1919, %v1920
  %v1922 = vsub.f32 %v1863, %v1921
  %v1923 = vsub.f32 %v1868, %v1921
  %v1924 = vsub.f32 %v1873, %v1921
  %v1925 = vsub.f32 %v1878, %v1921
  %v1926 = vsub.f32 %v1883, %v1921
  %v1927 = vsub.f32 %v1888, %v1921
  %v1928 = vsub.f32 %v1893, %v1921
  %v1929 = vsub.f32 %v1898, %v1921
  %v1930 = vmul.f32 %v1922, 1.442695
  %v1931 = vpow.pop %v1930
  %v1932 = vmul.f32 %v1923, 1.442695
  %v1933 = vpow.pop %v1932
  %v1934 = vmul.f32 %v1924, 1.442695
  %v1935 = vpow.pop %v1934
  %v1936 = vmul.f32 %v1925, 1.442695
  %v1937 = vpow.pop %v1936
  %v1938 = vmul.f32 %v1926, 1.442695
  %v1939 = vpow.pop %v1938
  %v1940 = vmul.f32 %v1927, 1.442695
  %v1941 = vpow.pop %v1940
  %v1942 = vmul.f32 %v1928, 1.442695
  %v1943 = vpow.pop %v1942
  %v1944 = vmul.f32 %v1929, 1.442695
  %v1945 = vpow.pop %v1944
  %v1947 = vsel %vm779, %v1931, 0
  %v1950 = vsel %vm779, %v1933, 0
  %v1953 = vsel %vm779, %v1935, 0
  %v1956 = vsel %vm779, %v1937, 0
  %v1959 = vsel %vm779, %v1939, 0
  %v1962 = vsel %vm779, %v1941, 0
  %v1965 = vsel %vm779, %v1943, 0
  %v1968 = vsel %vm779, %v1945, 0
  %1970 = vmatprep.subr.mxu0 0.0
  %1971 = vmatpush1.msra.mxu0 %v851
  %1972 = vmatprep.subr.mxu0 0.0
  %1973 = vmatpush1.msra.mxu0 0.0
  %1974 = vmatprep.subr.mxu0 0.0
  %1975 = vmatpush1.msra.mxu0 0.0
  %1976 = vmatprep.subr.mxu0 0.0
  %1977 = vmatpush1.msra.mxu0 0.0
  %1978 = vmatprep.subr.mxu0 0.0
  %1979 = vmatpush1.msra.mxu0 0.0
  %1980 = vmatprep.subr.mxu0 0.0
  %1981 = vmatpush1.msra.mxu0 0.0
  %1982 = vmatprep.subr.mxu0 0.0
  %1983 = vmatpush1.msra.mxu0 0.0
  %1984 = vmatprep.subr.mxu0 0.0
  %1985 = vmatpush1.msra.mxu0 0.0
  %1986 = vmatprep.subr.mxu0 0.0
  %1987 = vmatpush1.msra.mxu0 0.0
  %1988 = vmatprep.subr.mxu0 0.0
  %1989 = vmatpush1.msra.mxu0 0.0
  %1990 = vmatprep.subr.mxu0 0.0
  %1991 = vmatpush1.msra.mxu0 0.0
  %1992 = vmatprep.subr.mxu0 0.0
  %1993 = vmatpush1.msra.mxu0 0.0
  %1994 = vmatprep.subr.mxu0 0.0
  %1995 = vmatpush1.msra.mxu0 0.0
  %1996 = vmatprep.subr.mxu0 0.0
  %1997 = vmatpush1.msra.mxu0 0.0
  %1998 = vmatprep.subr.mxu0 0.0
  %1999 = vmatpush1.msra.mxu0 0.0
  %2000 = vmatprep.subr.mxu0 0.0
  %2001 = vmatpush1.msra.mxu0 0.0
  %2002 = vmatprep.subr.mxu0 0.0
  %2003 = vmatpush1.msra.mxu0 0.0
  %2004 = vmatprep.subr.mxu0 0.0
  %2005 = vmatpush1.msra.mxu0 0.0
  %2006 = vmatprep.subr.mxu0 0.0
  %2007 = vmatpush1.msra.mxu0 0.0
  %2008 = vmatprep.subr.mxu0 0.0
  %2009 = vmatpush1.msra.mxu0 0.0
  %2010 = vmatprep.subr.mxu0 0.0
  %2011 = vmatpush1.msra.mxu0 0.0
  %2012 = vmatprep.subr.mxu0 0.0
  %2013 = vmatpush1.msra.mxu0 0.0
  %2014 = vmatprep.subr.mxu0 0.0
  %2015 = vmatpush1.msra.mxu0 0.0
  %2016 = vmatprep.subr.mxu0 0.0
  %2017 = vmatpush1.msra.mxu0 0.0
  %2018 = vmatprep.subr.mxu0 0.0
  %2019 = vmatpush1.msra.mxu0 0.0
  %2020 = vmatprep.subr.mxu0 0.0
  %2021 = vmatpush1.msra.mxu0 0.0
  %2022 = vmatprep.subr.mxu0 0.0
  %2023 = vmatpush1.msra.mxu0 0.0
  %2024 = vmatprep.subr.mxu0 0.0
  %2025 = vmatpush1.msra.mxu0 0.0
  %2026 = vmatprep.subr.mxu0 0.0
  %2027 = vmatpush1.msra.mxu0 0.0
  %2028 = vmatprep.subr.mxu0 0.0
  %2029 = vmatpush1.msra.mxu0 0.0
  %2030 = vmatprep.subr.mxu0 0.0
  %2031 = vmatpush1.msra.mxu0 0.0
  %2032 = vmatprep.subr.mxu0 0.0
  %2033 = vmatpush1.msra.mxu0 0.0
  %2034 = vmatprep.mubr.f32.mxu0 0.0
  %2035 = vmatmul.mubr.f32.gmra.mrb[0].mxu0 %v1947
  %v2036 = vpop.f32.mrb[0].mxu0
  %v2037 = vadd.f32 0.0, %v2036
  %v2038 = vpop.f32.mrb[0].mxu0
  %2039 = vmatprep.mubr.f32.mxu0 0.0
  %2040 = vmatmul.mubr.f32.gmra.mrb[0].mxu0 %v1950
  %v2041 = vpop.f32.mrb[0].mxu0
  %v2042 = vadd.f32 0.0, %v2041
  %v2043 = vpop.f32.mrb[0].mxu0
  %2044 = vmatprep.mubr.f32.mxu0 0.0
  %2045 = vmatmul.mubr.f32.gmra.mrb[0].mxu0 %v1953
  %v2046 = vpop.f32.mrb[0].mxu0
  %v2047 = vadd.f32 0.0, %v2046
  %v2048 = vpop.f32.mrb[0].mxu0
  %2049 = vmatprep.mubr.f32.mxu0 0.0
  %2050 = vmatmul.mubr.f32.gmra.mrb[0].mxu0 %v1956
  %v2051 = vpop.f32.mrb[0].mxu0
  %v2052 = vadd.f32 0.0, %v2051
  %v2053 = vpop.f32.mrb[0].mxu0
  %2054 = vmatprep.mubr.f32.mxu0 0.0
  %2055 = vmatmul.mubr.f32.gmra.mrb[0].mxu0 %v1959
  %v2056 = vpop.f32.mrb[0].mxu0
  %v2057 = vadd.f32 0.0, %v2056
  %v2058 = vpop.f32.mrb[0].mxu0
  %2059 = vmatprep.mubr.f32.mxu0 0.0
  %2060 = vmatmul.mubr.f32.gmra.mrb[0].mxu0 %v1962
  %v2061 = vpop.f32.mrb[0].mxu0
  %v2062 = vadd.f32 0.0, %v2061
  %v2063 = vpop.f32.mrb[0].mxu0
  %2064 = vmatprep.mubr.f32.mxu0 0.0
  %2065 = vmatmul.mubr.f32.gmra.mrb[0].mxu0 %v1965
  %v2066 = vpop.f32.mrb[0].mxu0
  %v2067 = vadd.f32 0.0, %v2066
  %v2068 = vpop.f32.mrb[0].mxu0
  %2069 = vmatprep.mubr.f32.mxu0 0.0
  %2070 = vmatmul.mubr.f32.gmra.mrb[0].mxu0 %v1968
  %v2071 = vpop.f32.mrb[0].mxu0
  %v2072 = vadd.f32 0.0, %v2071
  %v2073 = vpop.f32.mrb[0].mxu0
  %2074 = vdwg.mxu0
  %2075 = vrot.lane.b32.xlu0 %v316, 32
  %v2076 = vpop.permute.xlu0 %2075
  %2077 = vrot.lane.b32.xlu0 %v321, 32
  %v2078 = vpop.permute.xlu0 %2077
  %2079 = vrot.lane.b32.xlu0 %v326, 32
  %v2080 = vpop.permute.xlu0 %2079
  %2081 = vrot.lane.b32.xlu0 %v331, 32
  %v2082 = vpop.permute.xlu0 %2081
  %2083 = vrot.lane.b32.xlu0 %v336, 32
  %v2084 = vpop.permute.xlu0 %2083
  %2085 = vrot.lane.b32.xlu0 %v341, 32
  %v2086 = vpop.permute.xlu0 %2085
  %2087 = vrot.lane.b32.xlu0 %v346, 32
  %v2088 = vpop.permute.xlu0 %2087
  %2089 = vrot.lane.b32.xlu0 %v351, 32
  %v2090 = vpop.permute.xlu0 %2089
  %v2099 = vmul.f32 %v2037, %v2076
  %v2100 = vmul.f32 %v2042, %v2078
  %v2101 = vmul.f32 %v2047, %v2080
  %v2102 = vmul.f32 %v2052, %v2082
  %v2103 = vmul.f32 %v2057, %v2084
  %v2104 = vmul.f32 %v2062, %v2086
  %v2105 = vmul.f32 %v2067, %v2088
  %v2106 = vmul.f32 %v2072, %v2090
  %v2107 = vsel %vm224, %v2099, 0.0
  %v2108 = vrot.slane %v2107, 4
  %v2109 = vadd.f32 %v2107, %v2108
  %v2110 = vrot.slane %v2109, 2
  %v2111 = vadd.f32 %v2109, %v2110
  %v2112 = vrot.slane %v2111, 1
  %v2113 = vadd.f32 %v2111, %v2112
  %v2114 = vsel %vm224, %v2100, 0.0
  %v2115 = vrot.slane %v2114, 4
  %v2116 = vadd.f32 %v2114, %v2115
  %v2117 = vrot.slane %v2116, 2
  %v2118 = vadd.f32 %v2116, %v2117
  %v2119 = vrot.slane %v2118, 1
  %v2120 = vadd.f32 %v2118, %v2119
  %v2121 = vsel %vm224, %v2101, 0.0
  %v2122 = vrot.slane %v2121, 4
  %v2123 = vadd.f32 %v2121, %v2122
  %v2124 = vrot.slane %v2123, 2
  %v2125 = vadd.f32 %v2123, %v2124
  %v2126 = vrot.slane %v2125, 1
  %v2127 = vadd.f32 %v2125, %v2126
  %v2128 = vsel %vm224, %v2102, 0.0
  %v2129 = vrot.slane %v2128, 4
  %v2130 = vadd.f32 %v2128, %v2129
  %v2131 = vrot.slane %v2130, 2
  %v2132 = vadd.f32 %v2130, %v2131
  %v2133 = vrot.slane %v2132, 1
  %v2134 = vadd.f32 %v2132, %v2133
  %v2135 = vsel %vm224, %v2103, 0.0
  %v2136 = vrot.slane %v2135, 4
  %v2137 = vadd.f32 %v2135, %v2136
  %v2138 = vrot.slane %v2137, 2
  %v2139 = vadd.f32 %v2137, %v2138
  %v2140 = vrot.slane %v2139, 1
  %v2141 = vadd.f32 %v2139, %v2140
  %v2142 = vsel %vm224, %v2104, 0.0
  %v2143 = vrot.slane %v2142, 4
  %v2144 = vadd.f32 %v2142, %v2143
  %v2145 = vrot.slane %v2144, 2
  %v2146 = vadd.f32 %v2144, %v2145
  %v2147 = vrot.slane %v2146, 1
  %v2148 = vadd.f32 %v2146, %v2147
  %v2149 = vsel %vm224, %v2105, 0.0
  %v2150 = vrot.slane %v2149, 4
  %v2151 = vadd.f32 %v2149, %v2150
  %v2152 = vrot.slane %v2151, 2
  %v2153 = vadd.f32 %v2151, %v2152
  %v2154 = vrot.slane %v2153, 1
  %v2155 = vadd.f32 %v2153, %v2154
  %v2156 = vsel %vm224, %v2106, 0.0
  %v2157 = vrot.slane %v2156, 4
  %v2158 = vadd.f32 %v2156, %v2157
  %v2159 = vrot.slane %v2158, 2
  %v2160 = vadd.f32 %v2158, %v2159
  %v2161 = vrot.slane %v2160, 1
  %v2162 = vadd.f32 %v2160, %v2161
  %v2163 = vsel %vm224, %v2037, 0.0
  %v2164 = vrot.slane %v2163, 4
  %v2165 = vadd.f32 %v2163, %v2164
  %v2166 = vrot.slane %v2165, 2
  %v2167 = vadd.f32 %v2165, %v2166
  %v2168 = vrot.slane %v2167, 1
  %v2169 = vadd.f32 %v2167, %v2168
  %v2170 = vsel %vm224, %v2042, 0.0
  %v2171 = vrot.slane %v2170, 4
  %v2172 = vadd.f32 %v2170, %v2171
  %v2173 = vrot.slane %v2172, 2
  %v2174 = vadd.f32 %v2172, %v2173
  %v2175 = vrot.slane %v2174, 1
  %v2176 = vadd.f32 %v2174, %v2175
  %v2177 = vsel %vm224, %v2047, 0.0
  %v2178 = vrot.slane %v2177, 4
  %v2179 = vadd.f32 %v2177, %v2178
  %v2180 = vrot.slane %v2179, 2
  %v2181 = vadd.f32 %v2179, %v2180
  %v2182 = vrot.slane %v2181, 1
  %v2183 = vadd.f32 %v2181, %v2182
  %v2184 = vsel %vm224, %v2052, 0.0
  %v2185 = vrot.slane %v2184, 4
  %v2186 = vadd.f32 %v2184, %v2185
  %v2187 = vrot.slane %v2186, 2
  %v2188 = vadd.f32 %v2186, %v2187
  %v2189 = vrot.slane %v2188, 1
  %v2190 = vadd.f32 %v2188, %v2189
  %v2191 = vsel %vm224, %v2057, 0.0
  %v2192 = vrot.slane %v2191, 4
  %v2193 = vadd.f32 %v2191, %v2192
  %v2194 = vrot.slane %v2193, 2
  %v2195 = vadd.f32 %v2193, %v2194
  %v2196 = vrot.slane %v2195, 1
  %v2197 = vadd.f32 %v2195, %v2196
  %v2198 = vsel %vm224, %v2062, 0.0
  %v2199 = vrot.slane %v2198, 4
  %v2200 = vadd.f32 %v2198, %v2199
  %v2201 = vrot.slane %v2200, 2
  %v2202 = vadd.f32 %v2200, %v2201
  %v2203 = vrot.slane %v2202, 1
  %v2204 = vadd.f32 %v2202, %v2203
  %v2205 = vsel %vm224, %v2067, 0.0
  %v2206 = vrot.slane %v2205, 4
  %v2207 = vadd.f32 %v2205, %v2206
  %v2208 = vrot.slane %v2207, 2
  %v2209 = vadd.f32 %v2207, %v2208
  %v2210 = vrot.slane %v2209, 1
  %v2211 = vadd.f32 %v2209, %v2210
  %v2212 = vsel %vm224, %v2072, 0.0
  %v2213 = vrot.slane %v2212, 4
  %v2214 = vadd.f32 %v2212, %v2213
  %v2215 = vrot.slane %v2214, 2
  %v2216 = vadd.f32 %v2214, %v2215
  %v2217 = vrot.slane %v2216, 1
  %v2218 = vadd.f32 %v2216, %v2217
  %v2219 = vrcp.pop %v2169
  %v2220 = vrcp.pop %v2176
  %v2221 = vrcp.pop %v2183
  %v2222 = vrcp.pop %v2190
  %v2223 = vrcp.pop %v2197
  %v2224 = vrcp.pop %v2204
  %v2225 = vrcp.pop %v2211
  %v2226 = vrcp.pop %v2218
  %v2227 = vmul.f32 %v2113, %v2219
  %v2228 = vmul.f32 %v2120, %v2220
  %v2229 = vmul.f32 %v2127, %v2221
  %v2230 = vmul.f32 %v2134, %v2222
  %v2231 = vmul.f32 %v2141, %v2223
  %v2232 = vmul.f32 %v2148, %v2224
  %v2233 = vmul.f32 %v2155, %v2225
  %v2234 = vmul.f32 %v2162, %v2226
  %v2235 = vld [vmem:[%s1 + $0x150] sm:$0xff]
  %v2236 = vld [vmem:[%s1 + $0x158] sm:$0xff]
  %v2237 = vld [vmem:[%s1 + $0x160] sm:$0xff]
  %v2238 = vld [vmem:[%s1 + $0x168] sm:$0xff]
  %v2239 = vld [vmem:[%s1 + $0x1b2] sm:$0x1]
  %v2240 = vlaneseq
  %v2241 = vshrl.u32 %v2240, 7
  %v2242 = vsub.s32 0, %v2241
  %v2243 = vrot.slane %v2239, %v2242
  %v2252 = vsel %vm1143, %v2228, %v2227
  %v2253 = vsel %vm1145, %v2229, %v2252
  %v2254 = vsel %vm1147, %v2230, %v2253
  %v2255 = vsel %vm1149, %v2231, %v2254
  %v2256 = vsel %vm1151, %v2232, %v2255
  %v2257 = vsel %vm1153, %v2233, %v2256
  %v2258 = vsel %vm1155, %v2234, %v2257
  %v2259 = vsel %vm224, %v2258, 0
  %2261 = vmatprep.subr.mxu0 0.0
  %2262 = vmatpush1.msra.mxu0 %v2235
  %2263 = vmatprep.subr.mxu0 0.0
  %2264 = vmatpush1.msra.mxu0 %v2236
  %2265 = vmatprep.subr.mxu0 0.0
  %2266 = vmatpush1.msra.mxu0 %v2237
  %2267 = vmatprep.subr.mxu0 0.0
  %2268 = vmatpush1.msra.mxu0 %v2238
  %2269 = vmatprep.subr.mxu0 0.0
  %2270 = vmatpush1.msra.mxu0 0.0
  %2271 = vmatprep.subr.mxu0 0.0
  %2272 = vmatpush1.msra.mxu0 0.0
  %2273 = vmatprep.subr.mxu0 0.0
  %2274 = vmatpush1.msra.mxu0 0.0
  %2275 = vmatprep.subr.mxu0 0.0
  %2276 = vmatpush1.msra.mxu0 0.0
  %2277 = vmatprep.subr.mxu0 0.0
  %2278 = vmatpush1.msra.mxu0 0.0
  %2279 = vmatprep.subr.mxu0 0.0
  %2280 = vmatpush1.msra.mxu0 0.0
  %2281 = vmatprep.subr.mxu0 0.0
  %2282 = vmatpush1.msra.mxu0 0.0
  %2283 = vmatprep.subr.mxu0 0.0
  %2284 = vmatpush1.msra.mxu0 0.0
  %2285 = vmatprep.subr.mxu0 0.0
  %2286 = vmatpush1.msra.mxu0 0.0
  %2287 = vmatprep.subr.mxu0 0.0
  %2288 = vmatpush1.msra.mxu0 0.0
  %2289 = vmatprep.subr.mxu0 0.0
  %2290 = vmatpush1.msra.mxu0 0.0
  %2291 = vmatprep.subr.mxu0 0.0
  %2292 = vmatpush1.msra.mxu0 0.0
  %2293 = vmatprep.subr.mxu0 0.0
  %2294 = vmatpush1.msra.mxu0 0.0
  %2295 = vmatprep.subr.mxu0 0.0
  %2296 = vmatpush1.msra.mxu0 0.0
  %2297 = vmatprep.subr.mxu0 0.0
  %2298 = vmatpush1.msra.mxu0 0.0
  %2299 = vmatprep.subr.mxu0 0.0
  %2300 = vmatpush1.msra.mxu0 0.0
  %2301 = vmatprep.subr.mxu0 0.0
  %2302 = vmatpush1.msra.mxu0 0.0
  %2303 = vmatprep.subr.mxu0 0.0
  %2304 = vmatpush1.msra.mxu0 0.0
  %2305 = vmatprep.subr.mxu0 0.0
  %2306 = vmatpush1.msra.mxu0 0.0
  %2307 = vmatprep.subr.mxu0 0.0
  %2308 = vmatpush1.msra.mxu0 0.0
  %2309 = vmatprep.subr.mxu0 0.0
  %2310 = vmatpush1.msra.mxu0 0.0
  %2311 = vmatprep.subr.mxu0 0.0
  %2312 = vmatpush1.msra.mxu0 0.0
  %2313 = vmatprep.subr.mxu0 0.0
  %2314 = vmatpush1.msra.mxu0 0.0
  %2315 = vmatprep.subr.mxu0 0.0
  %2316 = vmatpush1.msra.mxu0 0.0
  %2317 = vmatprep.subr.mxu0 0.0
  %2318 = vmatpush1.msra.mxu0 0.0
  %2319 = vmatprep.subr.mxu0 0.0
  %2320 = vmatpush1.msra.mxu0 0.0
  %2321 = vmatprep.subr.mxu0 0.0
  %2322 = vmatpush1.msra.mxu0 0.0
  %2323 = vmatprep.subr.mxu0 0.0
  %2324 = vmatpush1.msra.mxu0 0.0
  %2325 = vmatprep.mubr.f32.mxu0 0.0
  %2326 = vmatmul.mubr.f32.gmra.mrb[0].mxu0 %v2259
  %v2327 = vpop.f32.mrb[0].mxu0
  %v2328 = vadd.f32 %v2243, %v2327
  %v2329 = vpop.f32.mrb[0].mxu0
  %2330 = vdwg.mxu0
  %v2331 = vadd.f32 %v1559, %v2328
  %v2332 = vld [vmem:[%s1 + $0x1b6] sm:$0x1]
  %v2333 = vld [vmem:[%s1 + $0x1b7] sm:$0x1]
  %v2334 = vsel %vm224, %v2331, 0.0
  %2335 = vadd.xlane.f32.xlu0 %v2334
  %v2336 = vpop.xlane.xlu0 %2335
  %v2337 = vmul.f32 %v2336, %v447
  %v2338 = vmul.f32 %v2331, %v2331
  %v2339 = vsel %vm224, %v2338, 0.0
  %2340 = vadd.xlane.f32.xlu0 %v2339
  %v2341 = vpop.xlane.xlu0 %2340
  %v2342 = vmul.f32 %v2341, %v447
  %v2343 = vmul.f32 %v2337, %v2337
  %v2344 = vsub.f32 %v2342, %v2343
  %v2345 = vsub.f32 %v2331, %v2337
  %v2346 = vadd.f32 %v2344, 1e-05
  %v2347 = vrsqrt.pop %v2346
  %v2348 = vmul.f32 %v2345, %v2347
  %v2349 = vlaneseq
  %v2350 = vshrl.u32 %v2349, 7
  %v2351 = vsub.s32 0, %v2350
  %v2352 = vrot.slane %v2332, %v2351
  %v2353 = vmul.f32 %v2348, %v2352
  %v2354 = vlaneseq
  %v2355 = vshrl.u32 %v2354, 7
  %v2356 = vsub.s32 0, %v2355
  %v2357 = vrot.slane %v2333, %v2356
  %v2358 = vadd.f32 %v2353, %v2357
  %2363 = vrot.lane.b32.xlu0 %v354, 64
  %v2364 = vpop.permute.xlu0 %2363
  %2365 = vrot.lane.b32.xlu0 %v355, 64
  %v2366 = vpop.permute.xlu0 %2365
  %2367 = vrot.lane.b32.xlu0 %v356, 64
  %v2368 = vpop.permute.xlu0 %2367
  %2369 = vrot.lane.b32.xlu0 %v357, 64
  %v2370 = vpop.permute.xlu0 %2369
  %2376 = vrot.lane.b32.xlu0 %v1260, 64
  %v2377 = vpop.permute.xlu0 %2376
  %v2380 = vsel %vm224, %v2358, 0
  %2382 = vmatprep.subr.mxu0 0.0
  %2383 = vmatpush1.msra.mxu0 %v2364
  %2384 = vmatprep.subr.mxu0 0.0
  %2385 = vmatpush1.msra.mxu0 %v2366
  %2386 = vmatprep.subr.mxu0 0.0
  %2387 = vmatpush1.msra.mxu0 %v2368
  %2388 = vmatprep.subr.mxu0 0.0
  %2389 = vmatpush1.msra.mxu0 %v2370
  %2390 = vmatprep.subr.mxu0 0.0
  %2391 = vmatpush1.msra.mxu0 0.0
  %2392 = vmatprep.subr.mxu0 0.0
  %2393 = vmatpush1.msra.mxu0 0.0
  %2394 = vmatprep.subr.mxu0 0.0
  %2395 = vmatpush1.msra.mxu0 0.0
  %2396 = vmatprep.subr.mxu0 0.0
  %2397 = vmatpush1.msra.mxu0 0.0
  %2398 = vmatprep.subr.mxu0 0.0
  %2399 = vmatpush1.msra.mxu0 0.0
  %2400 = vmatprep.subr.mxu0 0.0
  %2401 = vmatpush1.msra.mxu0 0.0
  %2402 = vmatprep.subr.mxu0 0.0
  %2403 = vmatpush1.msra.mxu0 0.0
  %2404 = vmatprep.subr.mxu0 0.0
  %2405 = vmatpush1.msra.mxu0 0.0
  %2406 = vmatprep.subr.mxu0 0.0
  %2407 = vmatpush1.msra.mxu0 0.0
  %2408 = vmatprep.subr.mxu0 0.0
  %2409 = vmatpush1.msra.mxu0 0.0
  %2410 = vmatprep.subr.mxu0 0.0
  %2411 = vmatpush1.msra.mxu0 0.0
  %2412 = vmatprep.subr.mxu0 0.0
  %2413 = vmatpush1.msra.mxu0 0.0
  %2414 = vmatprep.subr.mxu0 0.0
  %2415 = vmatpush1.msra.mxu0 0.0
  %2416 = vmatprep.subr.mxu0 0.0
  %2417 = vmatpush1.msra.mxu0 0.0
  %2418 = vmatprep.subr.mxu0 0.0
  %2419 = vmatpush1.msra.mxu0 0.0
  %2420 = vmatprep.subr.mxu0 0.0
  %2421 = vmatpush1.msra.mxu0 0.0
  %2422 = vmatprep.subr.mxu0 0.0
  %2423 = vmatpush1.msra.mxu0 0.0
  %2424 = vmatprep.subr.mxu0 0.0
  %2425 = vmatpush1.msra.mxu0 0.0
  %2426 = vmatprep.subr.mxu0 0.0
  %2427 = vmatpush1.msra.mxu0 0.0
  %2428 = vmatprep.subr.mxu0 0.0
  %2429 = vmatpush1.msra.mxu0 0.0
  %2430 = vmatprep.subr.mxu0 0.0
  %2431 = vmatpush1.msra.mxu0 0.0
  %2432 = vmatprep.subr.mxu0 0.0
  %2433 = vmatpush1.msra.mxu0 0.0
  %2434 = vmatprep.subr.mxu0 0.0
  %2435 = vmatpush1.msra.mxu0 0.0
  %2436 = vmatprep.subr.mxu0 0.0
  %2437 = vmatpush1.msra.mxu0 0.0
  %2438 = vmatprep.subr.mxu0 0.0
  %2439 = vmatpush1.msra.mxu0 0.0
  %2440 = vmatprep.subr.mxu0 0.0
  %2441 = vmatpush1.msra.mxu0 0.0
  %2442 = vmatprep.subr.mxu0 0.0
  %2443 = vmatpush1.msra.mxu0 0.0
  %2444 = vmatprep.subr.mxu0 0.0
  %2445 = vmatpush1.msra.mxu0 0.0
  %2446 = vmatprep.mubr.f32.mxu0 0.0
  %2447 = vmatmul.mubr.f32.gmra.mrb[0].mxu0 %v2380
  %v2448 = vpop.f32.mrb[0].mxu0
  %v2449 = vadd.f32 %v2377, %v2448
  %v2450 = vpop.f32.mrb[0].mxu0
  %2451 = vdwg.mxu0
  %v2452 = vmax.f32 %v2449, 0.0
  %v2453 = vld [vmem:[%s1 + $0x170] sm:$0xff]
  %v2454 = vld [vmem:[%s1 + $0x178] sm:$0xff]
  %v2455 = vld [vmem:[%s1 + $0x180] sm:$0xff]
  %v2456 = vld [vmem:[%s1 + $0x188] sm:$0xff]
  %v2457 = vld [vmem:[%s1 + $0x190] sm:$0xff]
  %v2458 = vld [vmem:[%s1 + $0x198] sm:$0xff]
  %v2459 = vld [vmem:[%s1 + $0x1a0] sm:$0xff]
  %v2460 = vld [vmem:[%s1 + $0x1a8] sm:$0xff]
  %v2461 = vld [vmem:[%s1 + $0x1b3] sm:$0x1]
  %v2462 = vlaneseq
  %v2463 = vshrl.u32 %v2462, 7
  %v2464 = vsub.s32 0, %v2463
  %v2465 = vrot.slane %v2461, %v2464
  %v2467 = vsel %vm1348, %v2452, 0
  %2469 = vmatprep.subr.mxu0 0.0
  %2470 = vmatpush1.msra.mxu0 %v2453
  %2471 = vmatprep.subr.mxu0 0.0
  %2472 = vmatpush1.msra.mxu0 %v2454
  %2473 = vmatprep.subr.mxu0 0.0
  %2474 = vmatpush1.msra.mxu0 %v2455
  %2475 = vmatprep.subr.mxu0 0.0
  %2476 = vmatpush1.msra.mxu0 %v2456
  %2477 = vmatprep.subr.mxu0 0.0
  %2478 = vmatpush1.msra.mxu0 %v2457
  %2479 = vmatprep.subr.mxu0 0.0
  %2480 = vmatpush1.msra.mxu0 %v2458
  %2481 = vmatprep.subr.mxu0 0.0
  %2482 = vmatpush1.msra.mxu0 %v2459
  %2483 = vmatprep.subr.mxu0 0.0
  %2484 = vmatpush1.msra.mxu0 %v2460
  %2485 = vmatprep.subr.mxu0 0.0
  %2486 = vmatpush1.msra.mxu0 0.0
  %2487 = vmatprep.subr.mxu0 0.0
  %2488 = vmatpush1.msra.mxu0 0.0
  %2489 = vmatprep.subr.mxu0 0.0
  %2490 = vmatpush1.msra.mxu0 0.0
  %2491 = vmatprep.subr.mxu0 0.0
  %2492 = vmatpush1.msra.mxu0 0.0
  %2493 = vmatprep.subr.mxu0 0.0
  %2494 = vmatpush1.msra.mxu0 0.0
  %2495 = vmatprep.subr.mxu0 0.0
  %2496 = vmatpush1.msra.mxu0 0.0
  %2497 = vmatprep.subr.mxu0 0.0
  %2498 = vmatpush1.msra.mxu0 0.0
  %2499 = vmatprep.subr.mxu0 0.0
  %2500 = vmatpush1.msra.mxu0 0.0
  %2501 = vmatprep.subr.mxu0 0.0
  %2502 = vmatpush1.msra.mxu0 0.0
  %2503 = vmatprep.subr.mxu0 0.0
  %2504 = vmatpush1.msra.mxu0 0.0
  %2505 = vmatprep.subr.mxu0 0.0
  %2506 = vmatpush1.msra.mxu0 0.0
  %2507 = vmatprep.subr.mxu0 0.0
  %2508 = vmatpush1.msra.mxu0 0.0
  %2509 = vmatprep.subr.mxu0 0.0
  %2510 = vmatpush1.msra.mxu0 0.0
  %2511 = vmatprep.subr.mxu0 0.0
  %2512 = vmatpush1.msra.mxu0 0.0
  %2513 = vmatprep.subr.mxu0 0.0
  %2514 = vmatpush1.msra.mxu0 0.0
  %2515 = vmatprep.subr.mxu0 0.0
  %2516 = vmatpush1.msra.mxu0 0.0
  %2517 = vmatprep.subr.mxu0 0.0
  %2518 = vmatpush1.msra.mxu0 0.0
  %2519 = vmatprep.subr.mxu0 0.0
  %2520 = vmatpush1.msra.mxu0 0.0
  %2521 = vmatprep.subr.mxu0 0.0
  %2522 = vmatpush1.msra.mxu0 0.0
  %2523 = vmatprep.subr.mxu0 0.0
  %2524 = vmatpush1.msra.mxu0 0.0
  %2525 = vmatprep.subr.mxu0 0.0
  %2526 = vmatpush1.msra.mxu0 0.0
  %2527 = vmatprep.subr.mxu0 0.0
  %2528 = vmatpush1.msra.mxu0 0.0
  %2529 = vmatprep.subr.mxu0 0.0
  %2530 = vmatpush1.msra.mxu0 0.0
  %2531 = vmatprep.subr.mxu0 0.0
  %2532 = vmatpush1.msra.mxu0 0.0
  %2533 = vmatprep.mubr.f32.mxu0 0.0
  %2534 = vmatmul.mubr.f32.gmra.mrb[0].mxu0 %v2467
  %v2535 = vpop.f32.mrb[0].mxu0
  %v2536 = vadd.f32 %v2465, %v2535
  %v2537 = vpop.f32.mrb[0].mxu0
  %2538 = vdwg.mxu0
  %v2539 = vadd.f32 %v2358, %v2536
  %v2540 = vld [vmem:[%s1 + $0x1b8] sm:$0x1]
  %v2541 = vld [vmem:[%s1 + $0x1b9] sm:$0x1]
  %v2542 = vsel %vm224, %v2539, 0.0
  %2543 = vadd.xlane.f32.xlu0 %v2542
  %v2544 = vpop.xlane.xlu0 %2543
  %v2545 = vmul.f32 %v2544, %v447
  %v2546 = vmul.f32 %v2539, %v2539
  %v2547 = vsel %vm224, %v2546, 0.0
  %2548 = vadd.xlane.f32.xlu0 %v2547
  %v2549 = vpop.xlane.xlu0 %2548
  %v2550 = vmul.f32 %v2549, %v447
  %v2551 = vmul.f32 %v2545, %v2545
  %v2552 = vsub.f32 %v2550, %v2551
  %v2553 = vsub.f32 %v2539, %v2545
  %v2554 = vadd.f32 %v2552, 1e-05
  %v2555 = vrsqrt.pop %v2554
  %v2556 = vmul.f32 %v2553, %v2555
  %v2557 = vlaneseq
  %v2558 = vshrl.u32 %v2557, 7
  %v2559 = vsub.s32 0, %v2558
  %v2560 = vrot.slane %v2540, %v2559
  %v2561 = vmul.f32 %v2556, %v2560
  %v2562 = vlaneseq
  %v2563 = vshrl.u32 %v2562, 7
  %v2564 = vsub.s32 0, %v2563
  %v2565 = vrot.slane %v2541, %v2564
  %v2566 = vadd.f32 %v2561, %v2565
  %2568 = vrot.lane.b32.xlu0 %v207, 32
  %v2569 = vpop.permute.xlu0 %2568
  %v2571 = vsel %vm224, %v2566, %v2569
  %v2572 = vld [vmem:[%s1 + $0x1c0] sm:$0xff]
  %v2573 = vld [vmem:[%s1 + $0x1c8] sm:$0xff]
  %v2574 = vld [vmem:[%s1 + $0x1d0] sm:$0xff]
  %v2575 = vld [vmem:[%s1 + $0x1d8] sm:$0xff]
  %v2576 = vld [vmem:[%s1 + $0x1e0] sm:$0xff]
  %v2577 = vld [vmem:[%s1 + $0x1e8] sm:$0xff]
  %v2578 = vld [vmem:[%s1 + $0x1f0] sm:$0xff]
  %v2579 = vld [vmem:[%s1 + $0x1f8] sm:$0xff]
  %v2580 = vld [vmem:[%s1 + $0x59] sm:$0x1]
  %v2581 = vlaneseq
  %v2582 = vshrl.u32 %v2581, 7
  %v2583 = vsub.s32 0, %v2582
  %v2584 = vrot.slane %v2580, %v2583
  %v2586 = vsel %vm1348, %v2571, 0
  %2588 = vmatprep.subr.mxu0 0.0
  %2589 = vmatpush1.msra.mxu0 %v2572
  %2590 = vmatprep.subr.mxu0 0.0
  %2591 = vmatpush1.msra.mxu0 %v2573
  %2592 = vmatprep.subr.mxu0 0.0
  %2593 = vmatpush1.msra.mxu0 %v2574
  %2594 = vmatprep.subr.mxu0 0.0
  %2595 = vmatpush1.msra.mxu0 %v2575
  %2596 = vmatprep.subr.mxu0 0.0
  %2597 = vmatpush1.msra.mxu0 %v2576
  %2598 = vmatprep.subr.mxu0 0.0
  %2599 = vmatpush1.msra.mxu0 %v2577
  %2600 = vmatprep.subr.mxu0 0.0
  %2601 = vmatpush1.msra.mxu0 %v2578
  %2602 = vmatprep.subr.mxu0 0.0
  %2603 = vmatpush1.msra.mxu0 %v2579
  %2604 = vmatprep.subr.mxu0 0.0
  %2605 = vmatpush1.msra.mxu0 0.0
  %2606 = vmatprep.subr.mxu0 0.0
  %2607 = vmatpush1.msra.mxu0 0.0
  %2608 = vmatprep.subr.mxu0 0.0
  %2609 = vmatpush1.msra.mxu0 0.0
  %2610 = vmatprep.subr.mxu0 0.0
  %2611 = vmatpush1.msra.mxu0 0.0
  %2612 = vmatprep.subr.mxu0 0.0
  %2613 = vmatpush1.msra.mxu0 0.0
  %2614 = vmatprep.subr.mxu0 0.0
  %2615 = vmatpush1.msra.mxu0 0.0
  %2616 = vmatprep.subr.mxu0 0.0
  %2617 = vmatpush1.msra.mxu0 0.0
  %2618 = vmatprep.subr.mxu0 0.0
  %2619 = vmatpush1.msra.mxu0 0.0
  %2620 = vmatprep.subr.mxu0 0.0
  %2621 = vmatpush1.msra.mxu0 0.0
  %2622 = vmatprep.subr.mxu0 0.0
  %2623 = vmatpush1.msra.mxu0 0.0
  %2624 = vmatprep.subr.mxu0 0.0
  %2625 = vmatpush1.msra.mxu0 0.0
  %2626 = vmatprep.subr.mxu0 0.0
  %2627 = vmatpush1.msra.mxu0 0.0
  %2628 = vmatprep.subr.mxu0 0.0
  %2629 = vmatpush1.msra.mxu0 0.0
  %2630 = vmatprep.subr.mxu0 0.0
  %2631 = vmatpush1.msra.mxu0 0.0
  %2632 = vmatprep.subr.mxu0 0.0
  %2633 = vmatpush1.msra.mxu0 0.0
  %2634 = vmatprep.subr.mxu0 0.0
  %2635 = vmatpush1.msra.mxu0 0.0
  %2636 = vmatprep.subr.mxu0 0.0
  %2637 = vmatpush1.msra.mxu0 0.0
  %2638 = vmatprep.subr.mxu0 0.0
  %2639 = vmatpush1.msra.mxu0 0.0
  %2640 = vmatprep.subr.mxu0 0.0
  %2641 = vmatpush1.msra.mxu0 0.0
  %2642 = vmatprep.subr.mxu0 0.0
  %2643 = vmatpush1.msra.mxu0 0.0
  %2644 = vmatprep.subr.mxu0 0.0
  %2645 = vmatpush1.msra.mxu0 0.0
  %2646 = vmatprep.subr.mxu0 0.0
  %2647 = vmatpush1.msra.mxu0 0.0
  %2648 = vmatprep.subr.mxu0 0.0
  %2649 = vmatpush1.msra.mxu0 0.0
  %2650 = vmatprep.subr.mxu0 0.0
  %2651 = vmatpush1.msra.mxu0 0.0
  %2652 = vmatprep.mubr.f32.mxu0 0.0
  %2653 = vmatmul.mubr.f32.gmra.mrb[0].mxu0 %v2586
  %v2654 = vpop.f32.mrb[0].mxu0
  %v2655 = vadd.f32 %v2584, %v2654
  %v2656 = vpop.f32.mrb[0].mxu0
  %2657 = vdwg.mxu0
  %v2658 = vmax.f32 %v2655, 0.0
  %v2659 = vld [vmem:[%s2 + $0x40] sm:$0xff]
  %v2660 = vld [vmem:[%s2 + $0x48] sm:$0xff]
  %v2661 = vld [vmem:[%s2 + $0x50] sm:$0xff]
  %v2662 = vld [vmem:[%s2 + $0x58] sm:$0xff]
  %v2663 = vld [vmem:[%s2 + $0x62] sm:$0x1]
  %v2664 = vlaneseq
  %v2665 = vshrl.u32 %v2664, 7
  %v2666 = vsub.s32 0, %v2665
  %v2667 = vrot.slane %v2663, %v2666
  %v2669 = vsel %vm224, %v2658, 0
  %2671 = vmatprep.subr.mxu0 0.0
  %2672 = vmatpush1.msra.mxu0 %v2659
  %2673 = vmatprep.subr.mxu0 0.0
  %2674 = vmatpush1.msra.mxu0 %v2660
  %2675 = vmatprep.subr.mxu0 0.0
  %2676 = vmatpush1.msra.mxu0 %v2661
  %2677 = vmatprep.subr.mxu0 0.0
  %2678 = vmatpush1.msra.mxu0 %v2662
  %2679 = vmatprep.subr.mxu0 0.0
  %2680 = vmatpush1.msra.mxu0 0.0
  %2681 = vmatprep.subr.mxu0 0.0
  %2682 = vmatpush1.msra.mxu0 0.0
  %2683 = vmatprep.subr.mxu0 0.0
  %2684 = vmatpush1.msra.mxu0 0.0
  %2685 = vmatprep.subr.mxu0 0.0
  %2686 = vmatpush1.msra.mxu0 0.0
  %2687 = vmatprep.subr.mxu0 0.0
  %2688 = vmatpush1.msra.mxu0 0.0
  %2689 = vmatprep.subr.mxu0 0.0
  %2690 = vmatpush1.msra.mxu0 0.0
  %2691 = vmatprep.subr.mxu0 0.0
  %2692 = vmatpush1.msra.mxu0 0.0
  %2693 = vmatprep.subr.mxu0 0.0
  %2694 = vmatpush1.msra.mxu0 0.0
  %2695 = vmatprep.subr.mxu0 0.0
  %2696 = vmatpush1.msra.mxu0 0.0
  %2697 = vmatprep.subr.mxu0 0.0
  %2698 = vmatpush1.msra.mxu0 0.0
  %2699 = vmatprep.subr.mxu0 0.0
  %2700 = vmatpush1.msra.mxu0 0.0
  %2701 = vmatprep.subr.mxu0 0.0
  %2702 = vmatpush1.msra.mxu0 0.0
  %2703 = vmatprep.subr.mxu0 0.0
  %2704 = vmatpush1.msra.mxu0 0.0
  %2705 = vmatprep.subr.mxu0 0.0
  %2706 = vmatpush1.msra.mxu0 0.0
  %2707 = vmatprep.subr.mxu0 0.0
  %2708 = vmatpush1.msra.mxu0 0.0
  %2709 = vmatprep.subr.mxu0 0.0
  %2710 = vmatpush1.msra.mxu0 0.0
  %2711 = vmatprep.subr.mxu0 0.0
  %2712 = vmatpush1.msra.mxu0 0.0
  %2713 = vmatprep.subr.mxu0 0.0
  %2714 = vmatpush1.msra.mxu0 0.0
  %2715 = vmatprep.subr.mxu0 0.0
  %2716 = vmatpush1.msra.mxu0 0.0
  %2717 = vmatprep.subr.mxu0 0.0
  %2718 = vmatpush1.msra.mxu0 0.0
  %2719 = vmatprep.subr.mxu0 0.0
  %2720 = vmatpush1.msra.mxu0 0.0
  %2721 = vmatprep.subr.mxu0 0.0
  %2722 = vmatpush1.msra.mxu0 0.0
  %2723 = vmatprep.subr.mxu0 0.0
  %2724 = vmatpush1.msra.mxu0 0.0
  %2725 = vmatprep.subr.mxu0 0.0
  %2726 = vmatpush1.msra.mxu0 0.0
  %2727 = vmatprep.subr.mxu0 0.0
  %2728 = vmatpush1.msra.mxu0 0.0
  %2729 = vmatprep.subr.mxu0 0.0
  %2730 = vmatpush1.msra.mxu0 0.0
  %2731 = vmatprep.subr.mxu0 0.0
  %2732 = vmatpush1.msra.mxu0 0.0
  %2733 = vmatprep.subr.mxu0 0.0
  %2734 = vmatpush1.msra.mxu0 0.0
  %2735 = vmatprep.mubr.f32.mxu0 0.0
  %2736 = vmatmul.mubr.f32.gmra.mrb[0].mxu0 %v2669
  %v2737 = vpop.f32.mrb[0].mxu0
  %v2738 = vadd.f32 %v2667, %v2737
  %v2739 = vpop.f32.mrb[0].mxu0
  %2740 = vdwg.mxu0
  %2741 = vst [vmem:[%s3] sm:$0xff] %v2738
  // Predicated region
  $region14: #{daqn_forward.1} parent=0 // pred_check
    _
  $region15: #{daqn_forward.1} parent=0 // pred_check_branch
    %2743 = sbr.rel (0) target = $region17
  $region16: #{daqn_forward.1} parent=0 // pred_region
    _
  $region17: #{daqn_forward.1} parent=0 // pred_fallthru
    _
  // Predicated region
  $region18: #{daqn_forward.1} parent=0 // pred_check
    _
  $region19: #{daqn_forward.1} parent=0 // pred_check_branch
    %2745 = sbr.rel (0) target = $region21
  $region20: #{daqn_forward.1} parent=0 // pred_region
    _
  $region21: #{daqn_forward.1} parent=0 // pred_fallthru
    _

</llo_original>
